<compile_context>
chip_gen: v5e
topology: v5e:2x2
jax: 0.10.0
libtpu: 0.0.40
codegen_flags: <defaults>
</compile_context>

<pallas_src>
import functools
import math

import jax
import jax.numpy as jnp
from jax import lax
from jax.experimental import pallas as pl
from jax.experimental.pallas import tpu as pltpu

# ----------------------- small, deterministic config -----------------------
B = 2                 # batch
S = 64                # sequence length
D = 64                # hidden_size
H = 2                 # num_attn_heads
HD = D // H           # attention head dim (32)
NH = 1                # num_lact_heads
FD = D // NH          # fast-weight head dim (64)
INTER_MULTI = 1.0     # inter_multi
DH = int(FD * INTER_MULTI)   # fast-weight hidden dim (64)
WINDOW = 32           # window_size
CHUNK = 16            # lact_chunk_size
MLP_INTER = 128       # TransformerMLP intermediate_size
EPS = 1e-6            # norm_eps
ROPE_THETA = 10000.0
LR_SCALE = 1e-2       # base fast-weight learning-rate scale


# ------------------------------ dot helpers (bf16 in, f32 accum) ------------
def _dot(a, b):                       # a @ b
    return jnp.dot(a, b, preferred_element_type=jnp.float32)


def _dot_nt(a, b):                    # a @ b.T   (no transpose materialized)
    return lax.dot_general(a, b, (((1,), (1,)), ((), ())),
                           preferred_element_type=jnp.float32)


def _dot_tn(a, b):                    # a.T @ b   (no transpose materialized)
    return lax.dot_general(a, b, (((0,), (0,)), ((), ())),
                           preferred_element_type=jnp.float32)


def _softplus(x):
    # overflow-safe softplus using only ops that lower cleanly in Mosaic
    return jnp.maximum(x, 0.0) + jnp.log(1.0 + jnp.exp(-jnp.abs(x)))


# ------------------------------ fused kernel --------------------------------
def _lact_block_kernel(x_ref, attn_nw_ref, w_qkvlr_ref, b_lr_ref,
                       cos_ref, sin_ref, w02_ref, w1_ref,
                       ttt_nw_ref, ttt_scale_ref, w_o_ref, mlp_nw_ref,
                       w_gu_ref, w_down_ref, out_ref, ttt_buf,
                       *, window, chunk, eps, lr_scale):
    bpg, seq, d = x_ref.shape             # batches-per-grid-step, seq, hidden
    hd = cos_ref.shape[1]                 # attention head dim
    half = hd // 2
    n_heads = d // hd
    n_lact = w02_ref.shape[0]
    fd = w02_ref.shape[1]
    dh = w02_ref.shape[2] // 2
    n_chunks = seq // chunk
    m = bpg * seq                         # dense-matmul M dimension

    x = x_ref[...].reshape(m, d)
    xf = x.astype(jnp.float32)                       # residual (f32)

    # ---- attn_norm (RMSNorm) ----
    ms = jnp.mean(xf * xf, axis=-1, keepdims=True)
    xnb = (xf * lax.rsqrt(ms + eps)
           * attn_nw_ref[...].astype(jnp.float32)).astype(jnp.bfloat16)

    # ---- fused QKV + lr projection (one dot), softplus in-kernel ----
    qkvlr = _dot(xnb, w_qkvlr_ref[...])                               # [M, 3D+3NH] f32
    q_all = qkvlr[:, 0:d]
    k_all = qkvlr[:, d:2 * d]
    v_all = qkvlr[:, 2 * d:3 * d]
    lr = _softplus(qkvlr[:, 3 * d:] + b_lr_ref[...].astype(jnp.float32)) * lr_scale
    vb_all = v_all.astype(jnp.bfloat16)

    # ---- attention prep (tables carry sqrt(attn_scale); sin is signed) ----
    cos = cos_ref[...]
    sin = sin_ref[...]
    qi = lax.broadcasted_iota(jnp.int32, (seq, seq), 0)
    kj = lax.broadcasted_iota(jnp.int32, (seq, seq), 1)
    mask = (kj <= qi) & (kj > qi - window)

    def _rope(xh):  # rotate-half (NeoX / concatenated-halves); sign folded in sin
        rot = jnp.concatenate([xh[:, half:], xh[:, :half]], axis=-1)
        return xh * cos + rot * sin

    # initial (slow-weight) fast weights, cast once
    w02_0 = w02_ref[...].astype(jnp.float32)           # [NH, FD, 2DH]
    w1_0 = w1_ref[...].astype(jnp.float32)              # [NH, DH, FD]
    ttt_nw = ttt_nw_ref[...].astype(jnp.float32)        # [1, FD]
    scale_h = [ttt_nw * ttt_scale_ref[lh:lh + 1, :].astype(jnp.float32)
               for lh in range(n_lact)]

    mixes = []
    for bi in range(bpg):                                # static per-batch loop
        r0 = bi * seq
        qb = q_all[r0:r0 + seq, :]
        kb = k_all[r0:r0 + seq, :]
        vbf = v_all[r0:r0 + seq, :]
        vbb = vb_all[r0:r0 + seq, :]
        lrb = lr[r0:r0 + seq, :]

        # ---- sliding-window attention with in-kernel RoPE ----
        attn_heads = []
        for h in range(n_heads):
            c0 = h * hd
            qh = _rope(qb[:, c0:c0 + hd]).astype(jnp.bfloat16)
            kh = _rope(kb[:, c0:c0 + hd]).astype(jnp.bfloat16)
            vh = vbb[:, c0:c0 + hd]
            s = _dot_nt(qh, kh)                                      # scale pre-folded
            s = jnp.where(mask, s, -1e30)
            mmax = jnp.max(s, axis=-1, keepdims=True)
            p = jnp.exp(s - mmax)
            denom = jnp.sum(p, axis=-1, keepdims=True)
            p = p * pl.reciprocal(denom, approx=True)                # EUP, not VPU
            attn_heads.append(_dot(p.astype(jnp.bfloat16), vh))      # [S, HD] f32
        attn_o = (jnp.concatenate(attn_heads, axis=-1)
                  if n_heads > 1 else attn_heads[0])                 # [S, D] f32

        # ---- TTT (large-chunk test-time training, SwiGLU fast weights) ----
        # fast fn: f(x) = (silu(x @ W0) * (x @ W2)) @ W1 with W02 = [W0 | W2]
        # per chunk: per-token-lr SGD step on L = -sum(f(k) . v), then apply the
        # updated weights to the chunk's queries (update-then-apply).
        # TODO(synk): use_muon (Newton-Schulz) and use_momentum not implemented.
        for lh in range(n_lact):
            c0 = lh * fd
            qf = qb[:, c0:c0 + fd]
            kf = kb[:, c0:c0 + fd]
            vf = vbf[:, c0:c0 + fd]
            w02 = w02_0[lh]                              # [FD, 2DH] f32
            w1 = w1_0[lh]                                # [DH, FD]  f32
            w02b = w02.astype(jnp.bfloat16)
            w1b = w1.astype(jnp.bfloat16)

            for ci in range(n_chunks):                   # fully unrolled (static)
                sl = slice(ci * chunk, (ci + 1) * chunk)
                qc = qf[sl, :]
                kc = kf[sl, :]
                vc = vf[sl, :]
                # ttt qk l2-norm (f32), bf16 operands for the MXU
                qc = qc * lax.rsqrt(jnp.sum(qc * qc, -1, keepdims=True) + 1e-6)
                kc = kc * lax.rsqrt(jnp.sum(kc * kc, -1, keepdims=True) + 1e-6)
                qcb = qc.astype(jnp.bfloat16)
                kcb = kc.astype(jnp.bfloat16)
                vcb = vc.astype(jnp.bfloat16)
                lr0 = lrb[sl, 3 * lh + 0:3 * lh + 1]
                lr1 = lrb[sl, 3 * lh + 1:3 * lh + 2]
                lr2 = lrb[sl, 3 * lh + 2:3 * lh + 3]

                # forward on keys (old weights) — one fused 128-wide dot
                gu = _dot(kcb, w02b)                     # [C, 2DH]
                g = gu[:, :dh]
                u = gu[:, dh:]
                sg = jax.nn.sigmoid(g)
                silu_g = g * sg
                hmid = silu_g * u

                # gradients of L = -sum((hmid @ W1) * v)
                dhid = -_dot_nt(vcb, w1b)                # [C, DH]
                dsilu = sg * (1.0 + g * (1.0 - sg))
                dg = dhid * u * dsilu
                du = dhid * silu_g
                dgu = jnp.concatenate([dg * lr0, du * lr2],
                                      axis=-1).astype(jnp.bfloat16)  # [C, 2DH]
                dw02 = _dot_tn(kcb, dgu)                 # [FD, 2DH]
                dw1 = _dot_tn(hmid.astype(jnp.bfloat16),
                              (-vc * lr1).astype(jnp.bfloat16))      # [DH, FD]

                w02 = w02 - dw02
                w1 = w1 - dw1
                w02b = w02.astype(jnp.bfloat16)          # only re-cast after update
                w1b = w1.astype(jnp.bfloat16)

                # apply updated fast weights to this chunk's queries
                guq = _dot(qcb, w02b)                    # [C, 2DH]
                gq = guq[:, :dh]
                uq = guq[:, dh:]
                hq = (gq * jax.nn.sigmoid(gq) * uq).astype(jnp.bfloat16)
                oc = _dot(hq, w1b)                       # [C, FD] f32

                # ttt output RMSNorm + learnable scale, retired per-chunk
                tm = jnp.mean(oc * oc, axis=-1, keepdims=True)
                tn = oc * lax.rsqrt(tm + eps) * scale_h[lh]
                ttt_buf[ci * chunk:(ci + 1) * chunk, c0:c0 + fd] = tn

        mixes.append(attn_o + ttt_buf[...])              # [S, D] f32
    mix_all = jnp.concatenate(mixes, axis=0) if bpg > 1 else mixes[0]  # [M, D]

    # ---- output projection + fused residual-add + mlp_norm ----
    attn_out = _dot(mix_all.astype(jnp.bfloat16), w_o_ref[...]).astype(jnp.bfloat16)
    s_res = attn_out.astype(jnp.float32) + xf                          # new residual
    ms2 = jnp.mean(s_res * s_res, axis=-1, keepdims=True)
    hmlp = (s_res * lax.rsqrt(ms2 + eps)
            * mlp_nw_ref[...].astype(jnp.float32)).astype(jnp.bfloat16)

    # ---- TransformerMLP (SwiGLU) with fused gate|up, + residual ----
    inter = w_gu_ref.shape[1] // 2
    gu_mlp = _dot(hmlp, w_gu_ref[...])                                 # [M, 2*INTER]
    gmlp = gu_mlp[:, :inter]
    umlp = gu_mlp[:, inter:]
    hmid2 = (gmlp * jax.nn.sigmoid(gmlp) * umlp).astype(jnp.bfloat16)
    dmlp = _dot(hmid2, w_down_ref[...])                                # [M, D]
    out = (dmlp + s_res).astype(out_ref.dtype)
    out_ref[...] = out.reshape(bpg, seq, d)


# ------------------------------- wrapper -------------------------------------
def _single_tensorcore_chip():
    # v5e / v6e ("lite") chips have one TensorCore per chip -> fold batch into M.
    # v7x (2 TCs) and unknown chips keep grid=(B,) with "parallel" semantics.
    try:
        kind = jax.devices()[0].device_kind.lower()
    except Exception:
        return False
    return ("lite" in kind) or ("v5e" in kind) or ("v6e" in kind)


def lact_block_forward(p, x):
    # mirrors LaCTBlock.forward (attention_mask=None, use_cache=False,
    # output_attentions=False).
    # TODO(synk): past_key_values / KV-cache plumbing is not implemented.
    x = x.astype(jnp.bfloat16)
    b, seq, d = x.shape

    # generation-aware batch handling
    bpg = b if _single_tensorcore_chip() else 1          # batches per grid step
    if b % bpg != 0:
        bpg = 1
    grid_b = b // bpg

    # RoPE tables: rotate-half convention, sign folded into sin, sqrt(attn_scale)
    # folded into both q- and k-side tables (so q.k gets the full 1/sqrt(hd)).
    half = HD // 2
    inv_freq = 1.0 / (ROPE_THETA ** (jnp.arange(half, dtype=jnp.float32) / half))
    ang = jnp.arange(seq, dtype=jnp.float32)[:, None] * inv_freq[None, :]
    sqrt_scale = (1.0 / math.sqrt(HD)) ** 0.5
    cos = jnp.concatenate([jnp.cos(ang), jnp.cos(ang)], axis=-1) * sqrt_scale
    sin = jnp.concatenate([-jnp.sin(ang), jnp.sin(ang)], axis=-1) * sqrt_scale

    # one-time pre-transpose of fast weights + W0|W2 fusion
    w0t = jnp.swapaxes(p["fw_w0"], 1, 2)                 # [NH, FD, DH]
    w2t = jnp.swapaxes(p["fw_w2"], 1, 2)                 # [NH, FD, DH]
    w02t = jnp.concatenate([w0t, w2t], axis=-1)          # [NH, FD, 2*DH]
    w1t = jnp.swapaxes(p["fw_w1"], 1, 2)                 # [NH, DH, FD]

    # fused projection weights
    w_qkvlr = jnp.concatenate([p["w_qkv"], p["w_lr"]], axis=1)   # [D, 3D+3NH]
    w_gu = jnp.concatenate([p["w_gate"], p["w_up"]], axis=1)     # [D, 2*INTER]

    def rep2(shape):
        return pl.BlockSpec(shape, lambda i: (0, 0))

    def rep3(shape):
        return pl.BlockSpec(shape, lambda i: (0, 0, 0))

    kern = functools.partial(
        _lact_block_kernel, window=WINDOW, chunk=CHUNK, eps=EPS, lr_scale=LR_SCALE)

    out = pl.pallas_call(
        kern,
        out_shape=jax.ShapeDtypeStruct((b, seq, d), jnp.bfloat16),
        grid=(grid_b,),
        in_specs=[
            pl.BlockSpec((bpg, seq, d), lambda i: (i, 0, 0)),          # x
            rep2((1, d)),                                              # attn_norm_w
            rep2((d, 3 * d + 3 * NH)),                                 # w_qkv|w_lr
            rep2((1, 3 * NH)),                                         # b_lr
            rep2((seq, HD)),                                           # cos (scaled)
            rep2((seq, HD)),                                           # sin (signed+scaled)
            rep3((NH, FD, 2 * DH)),                                    # W0|W2 (pre-T)
            rep3((NH, DH, FD)),                                        # W1 (pre-T)
            rep2((1, FD)),                                             # ttt_norm_w
            rep2((NH, FD)),                                            # ttt_scale
            rep2((d, d)),                                              # w_o
            rep2((1, d)),                                              # mlp_norm_w
            rep2((d, 2 * MLP_INTER)),                                  # w_gate|w_up
            rep2((MLP_INTER, d)),                                      # w_down
        ],
        out_specs=pl.BlockSpec((bpg, seq, d), lambda i: (i, 0, 0)),
        scratch_shapes=[pltpu.VMEM((seq, d), jnp.float32)],            # ttt buffer
        compiler_params=pltpu.CompilerParams(
            dimension_semantics=("parallel",)),                        # 2 TCs on v7x
    )(x,
      p["attn_norm_w"].reshape(1, d),
      w_qkvlr, p["b_lr"].reshape(1, 3 * NH),
      cos, sin, w02t, w1t,
      p["ttt_norm_w"].reshape(1, FD),
      p["ttt_scale"].reshape(NH, FD),
      p["w_o"], p["mlp_norm_w"].reshape(1, d),
      w_gu, p["w_down"])
    return out


# ------------------------------- params --------------------------------------
def init_params(key):
    ks = jax.random.split(key, 10)

    def nrm(k, shape, scale):
        return (jax.random.normal(k, shape, jnp.float32) * scale).astype(jnp.bfloat16)

    p = {}
    p["attn_norm_w"] = jnp.ones((D,), jnp.bfloat16)
    p["mlp_norm_w"] = jnp.ones((D,), jnp.bfloat16)
    # LaCTSWIGLULayer parameters (qkv_bias=False, w0_w2_low_rank=0)
    p["w_qkv"] = nrm(ks[0], (D, 3 * D), 1.0 / math.sqrt(D))
    p["w_o"] = nrm(ks[1], (D, D), 1.0 / math.sqrt(D))
    p["w_lr"] = nrm(ks[2], (D, 3 * NH), 1.0 / math.sqrt(D))
    p["b_lr"] = jnp.full((3 * NH,), -2.0, jnp.float32)
    p["fw_w0"] = nrm(ks[3], (NH, DH, FD), 1.0 / math.sqrt(FD))
    p["fw_w1"] = nrm(ks[4], (NH, FD, DH), 1.0 / math.sqrt(DH))
    p["fw_w2"] = nrm(ks[5], (NH, DH, FD), 1.0 / math.sqrt(FD))
    p["ttt_norm_w"] = jnp.ones((FD,), jnp.bfloat16)
    p["ttt_scale"] = jnp.ones((NH, 1, FD), jnp.bfloat16)
    # TransformerMLP (SwiGLU)
    p["w_gate"] = nrm(ks[6], (D, MLP_INTER), 1.0 / math.sqrt(D))
    p["w_up"] = nrm(ks[7], (D, MLP_INTER), 1.0 / math.sqrt(D))
    p["w_down"] = nrm(ks[8], (MLP_INTER, D), 1.0 / math.sqrt(MLP_INTER))
    return p


if __name__ == "__main__":
    key = jax.random.PRNGKey(0)
    kx, kp = jax.random.split(key)
    x = jax.random.normal(kx, (B, S, D), jnp.float32).astype(jnp.bfloat16)
    params = init_params(kp)

    fwd = jax.jit(lact_block_forward)
    out = fwd(params, x)
    jax.block_until_ready(out)
    assert out.shape == (B, S, D), out.shape
    assert out.dtype == jnp.bfloat16, out.dtype
    assert bool(jnp.all(jnp.isfinite(out.astype(jnp.float32))))
    print("KERNEL_OK")
</pallas_src>

<mosaic_0001>
module attributes {stable_mosaic.version = 11 : i64} {
  func.func @_lact_block_kernel(%arg0: i32, %arg1: memref<1x64x64xbf16, #tpu.memory_space<vmem>>, %arg2: memref<1x64xbf16, #tpu.memory_space<vmem>>, %arg3: memref<64x195xbf16, #tpu.memory_space<vmem>>, %arg4: memref<1x3xf32, #tpu.memory_space<vmem>>, %arg5: memref<64x32xf32, #tpu.memory_space<vmem>>, %arg6: memref<64x32xf32, #tpu.memory_space<vmem>>, %arg7: memref<1x64x128xbf16, #tpu.memory_space<vmem>>, %arg8: memref<1x64x64xbf16, #tpu.memory_space<vmem>>, %arg9: memref<1x64xbf16, #tpu.memory_space<vmem>>, %arg10: memref<1x64xbf16, #tpu.memory_space<vmem>>, %arg11: memref<64x64xbf16, #tpu.memory_space<vmem>>, %arg12: memref<1x64xbf16, #tpu.memory_space<vmem>>, %arg13: memref<64x256xbf16, #tpu.memory_space<vmem>>, %arg14: memref<128x64xbf16, #tpu.memory_space<vmem>>, %arg15: memref<1x64x64xbf16, #tpu.memory_space<vmem>>, %arg16: memref<64x64xf32, #tpu.memory_space<vmem>>) attributes {dimension_semantics = [#tpu.dimension_semantics<parallel>], iteration_bounds = array<i64: 2>, scalar_prefetch = 0 : i64, scratch_operands = 1 : i64, tpu.core_type = #tpu.core_type<tc>, window_params = [{transform_indices = @transform_0, window_bounds = array<i64: 1, 64, 64>}, {pipeline_mode = #tpu.pipeline_mode<synchronous>, transform_indices = @transform_1, window_bounds = array<i64: 1, 64>}, {pipeline_mode = #tpu.pipeline_mode<synchronous>, transform_indices = @transform_2, window_bounds = array<i64: 64, 195>}, {pipeline_mode = #tpu.pipeline_mode<synchronous>, transform_indices = @transform_3, window_bounds = array<i64: 1, 3>}, {pipeline_mode = #tpu.pipeline_mode<synchronous>, transform_indices = @transform_4, window_bounds = array<i64: 64, 32>}, {pipeline_mode = #tpu.pipeline_mode<synchronous>, transform_indices = @transform_5, window_bounds = array<i64: 64, 32>}, {pipeline_mode = #tpu.pipeline_mode<synchronous>, transform_indices = @transform_6, window_bounds = array<i64: 1, 64, 128>}, {pipeline_mode = #tpu.pipeline_mode<synchronous>, transform_indices = @transform_7, window_bounds = array<i64: 1, 64, 64>}, {pipeline_mode = #tpu.pipeline_mode<synchronous>, transform_indices = @transform_8, window_bounds = array<i64: 1, 64>}, {pipeline_mode = #tpu.pipeline_mode<synchronous>, transform_indices = @transform_9, window_bounds = array<i64: 1, 64>}, {pipeline_mode = #tpu.pipeline_mode<synchronous>, transform_indices = @transform_10, window_bounds = array<i64: 64, 64>}, {pipeline_mode = #tpu.pipeline_mode<synchronous>, transform_indices = @transform_11, window_bounds = array<i64: 1, 64>}, {pipeline_mode = #tpu.pipeline_mode<synchronous>, transform_indices = @transform_12, window_bounds = array<i64: 64, 256>}, {pipeline_mode = #tpu.pipeline_mode<synchronous>, transform_indices = @transform_13, window_bounds = array<i64: 128, 64>}, {transform_indices = @transform_14, window_bounds = array<i64: 1, 64, 64>}]} {
    %c0 = arith.constant 0 : index
    %c0_0 = arith.constant 0 : index
    %c0_1 = arith.constant 0 : index
    %0 = vector.load %arg1[%c0, %c0_0, %c0_1] : memref<1x64x64xbf16, #tpu.memory_space<vmem>>, vector<1x64x64xbf16>
    %1 = vector.shape_cast %0 : vector<1x64x64xbf16> to vector<64x64xbf16>
    %2 = arith.extf %1 : vector<64x64xbf16> to vector<64x64xf32>
    %3 = arith.mulf %2, %2 : vector<64x64xf32>
    %cst = arith.constant dense<0.000000e+00> : vector<64xf32>
    %4 = vector.multi_reduction <add>, %3, %cst [1] : vector<64x64xf32> to vector<64xf32>
    %5 = vector.shape_cast %4 : vector<64xf32> to vector<64x1xf32>
    %cst_2 = arith.constant 6.400000e+01 : f32
    %6 = vector.broadcast %cst_2 : f32 to vector<64x1xf32>
    %7 = arith.divf %5, %6 : vector<64x1xf32>
    %cst_3 = arith.constant 9.99999997E-7 : f32
    %8 = vector.broadcast %cst_3 : f32 to vector<64x1xf32>
    %9 = arith.addf %7, %8 : vector<64x1xf32>
    %10 = math.rsqrt %9 : vector<64x1xf32>
    %11 = vector.broadcast %10 : vector<64x1xf32> to vector<64x64xf32>
    %12 = arith.mulf %2, %11 : vector<64x64xf32>
    %c0_4 = arith.constant 0 : index
    %c0_5 = arith.constant 0 : index
    %13 = vector.load %arg2[%c0_4, %c0_5] : memref<1x64xbf16, #tpu.memory_space<vmem>>, vector<1x64xbf16>
    %14 = arith.extf %13 : vector<1x64xbf16> to vector<1x64xf32>
    %15 = vector.broadcast %14 : vector<1x64xf32> to vector<64x64xf32>
    %16 = arith.mulf %12, %15 : vector<64x64xf32>
    %17 = arith.truncf %16 : vector<64x64xf32> to vector<64x64xbf16>
    %c0_6 = arith.constant 0 : index
    %c0_7 = arith.constant 0 : index
    %18 = vector.load %arg3[%c0_6, %c0_7] : memref<64x195xbf16, #tpu.memory_space<vmem>>, vector<64x195xbf16>
    %cst_8 = arith.constant dense<0.000000e+00> : vector<64x195xf32>
    %19 = tpu.matmul %17, %18, %cst_8 {dimension_numbers = #tpu.dot_dimension_numbers<[1], [0], [0], [1], [0, 0, 1, 1], [], []>} : vector<64x64xbf16>, vector<64x195xbf16>, vector<64x195xf32> -> vector<64x195xf32>
    %20 = vector.extract_strided_slice %19 {offsets = [0, 0], sizes = [64, 64], strides = [1, 1]} : vector<64x195xf32> to vector<64x64xf32>
    %21 = vector.extract_strided_slice %19 {offsets = [0, 64], sizes = [64, 64], strides = [1, 1]} : vector<64x195xf32> to vector<64x64xf32>
    %22 = vector.extract_strided_slice %19 {offsets = [0, 128], sizes = [64, 64], strides = [1, 1]} : vector<64x195xf32> to vector<64x64xf32>
    %23 = vector.extract_strided_slice %19 {offsets = [0, 192], sizes = [64, 3], strides = [1, 1]} : vector<64x195xf32> to vector<64x3xf32>
    %c0_9 = arith.constant 0 : index
    %c0_10 = arith.constant 0 : index
    %24 = vector.load %arg4[%c0_9, %c0_10] : memref<1x3xf32, #tpu.memory_space<vmem>>, vector<1x3xf32>
    %25 = vector.broadcast %24 : vector<1x3xf32> to vector<64x3xf32>
    %26 = arith.addf %23, %25 : vector<64x3xf32>
    %cst_11 = arith.constant 0.000000e+00 : f32
    %27 = vector.broadcast %cst_11 : f32 to vector<64x3xf32>
    %28 = arith.maximumf %26, %27 : vector<64x3xf32>
    %29 = math.absf %26 : vector<64x3xf32>
    %cst_12 = arith.constant 0.000000e+00 : f32
    %30 = vector.broadcast %cst_12 : f32 to vector<64x3xf32>
    %31 = arith.subf %30, %29 : vector<64x3xf32>
    %32 = math.exp %31 : vector<64x3xf32>
    %cst_13 = arith.constant 1.000000e+00 : f32
    %33 = vector.broadcast %cst_13 : f32 to vector<64x3xf32>
    %34 = arith.addf %33, %32 : vector<64x3xf32>
    %35 = math.log %34 : vector<64x3xf32>
    %36 = arith.addf %28, %35 : vector<64x3xf32>
    %cst_14 = arith.constant 0.00999999977 : f32
    %37 = vector.broadcast %cst_14 : f32 to vector<64x3xf32>
    %38 = arith.mulf %36, %37 : vector<64x3xf32>
    %39 = arith.truncf %22 : vector<64x64xf32> to vector<64x64xbf16>
    %c0_15 = arith.constant 0 : index
    %c0_16 = arith.constant 0 : index
    %40 = vector.load %arg5[%c0_15, %c0_16] : memref<64x32xf32, #tpu.memory_space<vmem>>, vector<64x32xf32>
    %c0_17 = arith.constant 0 : index
    %c0_18 = arith.constant 0 : index
    %41 = vector.load %arg6[%c0_17, %c0_18] : memref<64x32xf32, #tpu.memory_space<vmem>>, vector<64x32xf32>
    %42 = tpu.iota {dimensions = array<i32: 0>} : vector<64x64xi32>
    %43 = tpu.iota {dimensions = array<i32: 1>} : vector<64x64xi32>
    %44 = arith.cmpi sle, %43, %42 : vector<64x64xi32>
    %c32_i32 = arith.constant 32 : i32
    %45 = vector.broadcast %c32_i32 : i32 to vector<64x64xi32>
    %46 = arith.subi %42, %45 : vector<64x64xi32>
    %47 = arith.cmpi sgt, %43, %46 : vector<64x64xi32>
    %48 = arith.andi %44, %47 : vector<64x64xi1>
    %c0_19 = arith.constant 0 : index
    %c0_20 = arith.constant 0 : index
    %c0_21 = arith.constant 0 : index
    %49 = vector.load %arg7[%c0_19, %c0_20, %c0_21] : memref<1x64x128xbf16, #tpu.memory_space<vmem>>, vector<1x64x128xbf16>
    %50 = arith.extf %49 : vector<1x64x128xbf16> to vector<1x64x128xf32>
    %c0_22 = arith.constant 0 : index
    %c0_23 = arith.constant 0 : index
    %c0_24 = arith.constant 0 : index
    %51 = vector.load %arg8[%c0_22, %c0_23, %c0_24] : memref<1x64x64xbf16, #tpu.memory_space<vmem>>, vector<1x64x64xbf16>
    %52 = arith.extf %51 : vector<1x64x64xbf16> to vector<1x64x64xf32>
    %c0_25 = arith.constant 0 : index
    %c0_26 = arith.constant 0 : index
    %53 = vector.load %arg9[%c0_25, %c0_26] : memref<1x64xbf16, #tpu.memory_space<vmem>>, vector<1x64xbf16>
    %54 = arith.extf %53 : vector<1x64xbf16> to vector<1x64xf32>
    %c0_27 = arith.constant 0 : index
    %c0_28 = arith.constant 0 : index
    %55 = vector.load %arg10[%c0_27, %c0_28] : memref<1x64xbf16, #tpu.memory_space<vmem>>, vector<1x64xbf16>
    %56 = arith.extf %55 : vector<1x64xbf16> to vector<1x64xf32>
    %57 = arith.mulf %54, %56 : vector<1x64xf32>
    %58 = vector.extract_strided_slice %20 {offsets = [0, 0], sizes = [64, 32], strides = [1, 1]} : vector<64x64xf32> to vector<64x32xf32>
    %59 = vector.extract_strided_slice %58 {offsets = [0, 16], sizes = [64, 16], strides = [1, 1]} : vector<64x32xf32> to vector<64x16xf32>
    %60 = vector.extract_strided_slice %58 {offsets = [0, 0], sizes = [64, 16], strides = [1, 1]} : vector<64x32xf32> to vector<64x16xf32>
    %61 = tpu.concatenate %59, %60 in 1 : vector<64x16xf32>, vector<64x16xf32> -> vector<64x32xf32>
    %62 = arith.mulf %58, %40 : vector<64x32xf32>
    %63 = arith.mulf %61, %41 : vector<64x32xf32>
    %64 = arith.addf %62, %63 : vector<64x32xf32>
    %65 = arith.truncf %64 : vector<64x32xf32> to vector<64x32xbf16>
    %66 = vector.extract_strided_slice %21 {offsets = [0, 0], sizes = [64, 32], strides = [1, 1]} : vector<64x64xf32> to vector<64x32xf32>
    %67 = vector.extract_strided_slice %66 {offsets = [0, 16], sizes = [64, 16], strides = [1, 1]} : vector<64x32xf32> to vector<64x16xf32>
    %68 = vector.extract_strided_slice %66 {offsets = [0, 0], sizes = [64, 16], strides = [1, 1]} : vector<64x32xf32> to vector<64x16xf32>
    %69 = tpu.concatenate %67, %68 in 1 : vector<64x16xf32>, vector<64x16xf32> -> vector<64x32xf32>
    %70 = arith.mulf %66, %40 : vector<64x32xf32>
    %71 = arith.mulf %69, %41 : vector<64x32xf32>
    %72 = arith.addf %70, %71 : vector<64x32xf32>
    %73 = arith.truncf %72 : vector<64x32xf32> to vector<64x32xbf16>
    %74 = vector.extract_strided_slice %39 {offsets = [0, 0], sizes = [64, 32], strides = [1, 1]} : vector<64x64xbf16> to vector<64x32xbf16>
    %cst_29 = arith.constant dense<0.000000e+00> : vector<64x64xf32>
    %75 = tpu.matmul %65, %73, %cst_29 {dimension_numbers = #tpu.dot_dimension_numbers<[1], [1], [0], [0], [0, 0, 1, 0], [], []>} : vector<64x32xbf16>, vector<64x32xbf16>, vector<64x64xf32> -> vector<64x64xf32>
    %cst_30 = arith.constant -1.000000e+30 : f32
    %76 = vector.broadcast %cst_30 : f32 to vector<64x64xf32>
    %77 = arith.select %48, %75, %76 : vector<64x64xi1>, vector<64x64xf32>
    %cst_31 = arith.constant dense<0xFF800000> : vector<64xf32>
    %78 = vector.multi_reduction <maximumf>, %77, %cst_31 [1] : vector<64x64xf32> to vector<64xf32>
    %79 = vector.shape_cast %78 : vector<64xf32> to vector<64x1xf32>
    %80 = vector.broadcast %79 : vector<64x1xf32> to vector<64x64xf32>
    %81 = arith.subf %77, %80 : vector<64x64xf32>
    %82 = math.exp %81 : vector<64x64xf32>
    %cst_32 = arith.constant dense<0.000000e+00> : vector<64xf32>
    %83 = vector.multi_reduction <add>, %82, %cst_32 [1] : vector<64x64xf32> to vector<64xf32>
    %84 = vector.shape_cast %83 : vector<64xf32> to vector<64x1xf32>
    %85 = tpu.reciprocal %84 {approx = true} : vector<64x1xf32> -> vector<64x1xf32>
    %86 = vector.broadcast %85 : vector<64x1xf32> to vector<64x64xf32>
    %87 = arith.mulf %82, %86 : vector<64x64xf32>
    %88 = arith.truncf %87 : vector<64x64xf32> to vector<64x64xbf16>
    %cst_33 = arith.constant dense<0.000000e+00> : vector<64x32xf32>
    %89 = tpu.matmul %88, %74, %cst_33 {dimension_numbers = #tpu.dot_dimension_numbers<[1], [0], [0], [1], [0, 0, 1, 1], [], []>} : vector<64x64xbf16>, vector<64x32xbf16>, vector<64x32xf32> -> vector<64x32xf32>
    %90 = vector.extract_strided_slice %20 {offsets = [0, 32], sizes = [64, 32], strides = [1, 1]} : vector<64x64xf32> to vector<64x32xf32>
    %91 = vector.extract_strided_slice %90 {offsets = [0, 16], sizes = [64, 16], strides = [1, 1]} : vector<64x32xf32> to vector<64x16xf32>
    %92 = vector.extract_strided_slice %90 {offsets = [0, 0], sizes = [64, 16], strides = [1, 1]} : vector<64x32xf32> to vector<64x16xf32>
    %93 = tpu.concatenate %91, %92 in 1 : vector<64x16xf32>, vector<64x16xf32> -> vector<64x32xf32>
    %94 = arith.mulf %90, %40 : vector<64x32xf32>
    %95 = arith.mulf %93, %41 : vector<64x32xf32>
    %96 = arith.addf %94, %95 : vector<64x32xf32>
    %97 = arith.truncf %96 : vector<64x32xf32> to vector<64x32xbf16>
    %98 = vector.extract_strided_slice %21 {offsets = [0, 32], sizes = [64, 32], strides = [1, 1]} : vector<64x64xf32> to vector<64x32xf32>
    %99 = vector.extract_strided_slice %98 {offsets = [0, 16], sizes = [64, 16], strides = [1, 1]} : vector<64x32xf32> to vector<64x16xf32>
    %100 = vector.extract_strided_slice %98 {offsets = [0, 0], sizes = [64, 16], strides = [1, 1]} : vector<64x32xf32> to vector<64x16xf32>
    %101 = tpu.concatenate %99, %100 in 1 : vector<64x16xf32>, vector<64x16xf32> -> vector<64x32xf32>
    %102 = arith.mulf %98, %40 : vector<64x32xf32>
    %103 = arith.mulf %101, %41 : vector<64x32xf32>
    %104 = arith.addf %102, %103 : vector<64x32xf32>
    %105 = arith.truncf %104 : vector<64x32xf32> to vector<64x32xbf16>
    %106 = vector.extract_strided_slice %39 {offsets = [0, 32], sizes = [64, 32], strides = [1, 1]} : vector<64x64xbf16> to vector<64x32xbf16>
    %cst_34 = arith.constant dense<0.000000e+00> : vector<64x64xf32>
    %107 = tpu.matmul %97, %105, %cst_34 {dimension_numbers = #tpu.dot_dimension_numbers<[1], [1], [0], [0], [0, 0, 1, 0], [], []>} : vector<64x32xbf16>, vector<64x32xbf16>, vector<64x64xf32> -> vector<64x64xf32>
    %cst_35 = arith.constant -1.000000e+30 : f32
    %108 = vector.broadcast %cst_35 : f32 to vector<64x64xf32>
    %109 = arith.select %48, %107, %108 : vector<64x64xi1>, vector<64x64xf32>
    %cst_36 = arith.constant dense<0xFF800000> : vector<64xf32>
    %110 = vector.multi_reduction <maximumf>, %109, %cst_36 [1] : vector<64x64xf32> to vector<64xf32>
    %111 = vector.shape_cast %110 : vector<64xf32> to vector<64x1xf32>
    %112 = vector.broadcast %111 : vector<64x1xf32> to vector<64x64xf32>
    %113 = arith.subf %109, %112 : vector<64x64xf32>
    %114 = math.exp %113 : vector<64x64xf32>
    %cst_37 = arith.constant dense<0.000000e+00> : vector<64xf32>
    %115 = vector.multi_reduction <add>, %114, %cst_37 [1] : vector<64x64xf32> to vector<64xf32>
    %116 = vector.shape_cast %115 : vector<64xf32> to vector<64x1xf32>
    %117 = tpu.reciprocal %116 {approx = true} : vector<64x1xf32> -> vector<64x1xf32>
    %118 = vector.broadcast %117 : vector<64x1xf32> to vector<64x64xf32>
    %119 = arith.mulf %114, %118 : vector<64x64xf32>
    %120 = arith.truncf %119 : vector<64x64xf32> to vector<64x64xbf16>
    %cst_38 = arith.constant dense<0.000000e+00> : vector<64x32xf32>
    %121 = tpu.matmul %120, %106, %cst_38 {dimension_numbers = #tpu.dot_dimension_numbers<[1], [0], [0], [1], [0, 0, 1, 1], [], []>} : vector<64x64xbf16>, vector<64x32xbf16>, vector<64x32xf32> -> vector<64x32xf32>
    %122 = tpu.concatenate %89, %121 in 1 : vector<64x32xf32>, vector<64x32xf32> -> vector<64x64xf32>
    %123 = vector.shape_cast %50 : vector<1x64x128xf32> to vector<64x128xf32>
    %124 = vector.shape_cast %52 : vector<1x64x64xf32> to vector<64x64xf32>
    %125 = arith.truncf %123 : vector<64x128xf32> to vector<64x128xbf16>
    %126 = arith.truncf %124 : vector<64x64xf32> to vector<64x64xbf16>
    %127 = vector.extract_strided_slice %20 {offsets = [0, 0], sizes = [16, 64], strides = [1, 1]} : vector<64x64xf32> to vector<16x64xf32>
    %128 = vector.extract_strided_slice %21 {offsets = [0, 0], sizes = [16, 64], strides = [1, 1]} : vector<64x64xf32> to vector<16x64xf32>
    %129 = vector.extract_strided_slice %22 {offsets = [0, 0], sizes = [16, 64], strides = [1, 1]} : vector<64x64xf32> to vector<16x64xf32>
    %130 = arith.mulf %127, %127 : vector<16x64xf32>
    %cst_39 = arith.constant dense<0.000000e+00> : vector<16xf32>
    %131 = vector.multi_reduction <add>, %130, %cst_39 [1] : vector<16x64xf32> to vector<16xf32>
    %132 = vector.shape_cast %131 : vector<16xf32> to vector<16x1xf32>
    %cst_40 = arith.constant 9.99999997E-7 : f32
    %133 = vector.broadcast %cst_40 : f32 to vector<16x1xf32>
    %134 = arith.addf %132, %133 : vector<16x1xf32>
    %135 = math.rsqrt %134 : vector<16x1xf32>
    %136 = vector.broadcast %135 : vector<16x1xf32> to vector<16x64xf32>
    %137 = arith.mulf %127, %136 : vector<16x64xf32>
    %138 = arith.mulf %128, %128 : vector<16x64xf32>
    %cst_41 = arith.constant dense<0.000000e+00> : vector<16xf32>
    %139 = vector.multi_reduction <add>, %138, %cst_41 [1] : vector<16x64xf32> to vector<16xf32>
    %140 = vector.shape_cast %139 : vector<16xf32> to vector<16x1xf32>
    %cst_42 = arith.constant 9.99999997E-7 : f32
    %141 = vector.broadcast %cst_42 : f32 to vector<16x1xf32>
    %142 = arith.addf %140, %141 : vector<16x1xf32>
    %143 = math.rsqrt %142 : vector<16x1xf32>
    %144 = vector.broadcast %143 : vector<16x1xf32> to vector<16x64xf32>
    %145 = arith.mulf %128, %144 : vector<16x64xf32>
    %146 = arith.truncf %137 : vector<16x64xf32> to vector<16x64xbf16>
    %147 = arith.truncf %145 : vector<16x64xf32> to vector<16x64xbf16>
    %148 = arith.truncf %129 : vector<16x64xf32> to vector<16x64xbf16>
    %149 = vector.extract_strided_slice %38 {offsets = [0, 0], sizes = [16, 1], strides = [1, 1]} : vector<64x3xf32> to vector<16x1xf32>
    %150 = vector.extract_strided_slice %38 {offsets = [0, 1], sizes = [16, 1], strides = [1, 1]} : vector<64x3xf32> to vector<16x1xf32>
    %151 = vector.extract_strided_slice %38 {offsets = [0, 2], sizes = [16, 1], strides = [1, 1]} : vector<64x3xf32> to vector<16x1xf32>
    %cst_43 = arith.constant dense<0.000000e+00> : vector<16x128xf32>
    %152 = tpu.matmul %147, %125, %cst_43 {dimension_numbers = #tpu.dot_dimension_numbers<[1], [0], [0], [1], [0, 0, 1, 1], [], []>} : vector<16x64xbf16>, vector<64x128xbf16>, vector<16x128xf32> -> vector<16x128xf32>
    %153 = vector.extract_strided_slice %152 {offsets = [0, 0], sizes = [16, 64], strides = [1, 1]} : vector<16x128xf32> to vector<16x64xf32>
    %154 = vector.extract_strided_slice %152 {offsets = [0, 64], sizes = [16, 64], strides = [1, 1]} : vector<16x128xf32> to vector<16x64xf32>
    %155 = arith.negf %153 : vector<16x64xf32>
    %156 = math.exp %155 : vector<16x64xf32>
    %cst_44 = arith.constant 1.000000e+00 : f32
    %157 = vector.broadcast %cst_44 : f32 to vector<16x64xf32>
    %158 = arith.addf %157, %156 : vector<16x64xf32>
    %159 = arith.divf %157, %158 : vector<16x64xf32>
    %160 = arith.mulf %153, %159 : vector<16x64xf32>
    %161 = arith.mulf %160, %154 : vector<16x64xf32>
    %cst_45 = arith.constant dense<0.000000e+00> : vector<16x64xf32>
    %162 = tpu.matmul %148, %126, %cst_45 {dimension_numbers = #tpu.dot_dimension_numbers<[1], [1], [0], [0], [0, 0, 1, 0], [], []>} : vector<16x64xbf16>, vector<64x64xbf16>, vector<16x64xf32> -> vector<16x64xf32>
    %cst_46 = arith.constant 0.000000e+00 : f32
    %163 = vector.broadcast %cst_46 : f32 to vector<16x64xf32>
    %164 = arith.subf %163, %162 : vector<16x64xf32>
    %cst_47 = arith.constant 1.000000e+00 : f32
    %165 = vector.broadcast %cst_47 : f32 to vector<16x64xf32>
    %166 = arith.subf %165, %159 : vector<16x64xf32>
    %167 = arith.mulf %153, %166 : vector<16x64xf32>
    %cst_48 = arith.constant 1.000000e+00 : f32
    %168 = vector.broadcast %cst_48 : f32 to vector<16x64xf32>
    %169 = arith.addf %168, %167 : vector<16x64xf32>
    %170 = arith.mulf %159, %169 : vector<16x64xf32>
    %171 = arith.mulf %164, %154 : vector<16x64xf32>
    %172 = arith.mulf %171, %170 : vector<16x64xf32>
    %173 = arith.mulf %164, %160 : vector<16x64xf32>
    %174 = vector.broadcast %149 : vector<16x1xf32> to vector<16x64xf32>
    %175 = arith.mulf %172, %174 : vector<16x64xf32>
    %176 = vector.broadcast %151 : vector<16x1xf32> to vector<16x64xf32>
    %177 = arith.mulf %173, %176 : vector<16x64xf32>
    %178 = tpu.concatenate %175, %177 in 1 : vector<16x64xf32>, vector<16x64xf32> -> vector<16x128xf32>
    %179 = arith.truncf %178 : vector<16x128xf32> to vector<16x128xbf16>
    %cst_49 = arith.constant dense<0.000000e+00> : vector<64x128xf32>
    %180 = tpu.matmul %147, %179, %cst_49 {dimension_numbers = #tpu.dot_dimension_numbers<[0], [0], [1], [1], [0, 1, 1, 1], [], []>} : vector<16x64xbf16>, vector<16x128xbf16>, vector<64x128xf32> -> vector<64x128xf32>
    %181 = arith.truncf %161 : vector<16x64xf32> to vector<16x64xbf16>
    %cst_50 = arith.constant 0.000000e+00 : f32
    %182 = vector.broadcast %cst_50 : f32 to vector<16x64xf32>
    %183 = arith.subf %182, %129 : vector<16x64xf32>
    %184 = vector.broadcast %150 : vector<16x1xf32> to vector<16x64xf32>
    %185 = arith.mulf %183, %184 : vector<16x64xf32>
    %186 = arith.truncf %185 : vector<16x64xf32> to vector<16x64xbf16>
    %cst_51 = arith.constant dense<0.000000e+00> : vector<64x64xf32>
    %187 = tpu.matmul %181, %186, %cst_51 {dimension_numbers = #tpu.dot_dimension_numbers<[0], [0], [1], [1], [0, 1, 1, 1], [], []>} : vector<16x64xbf16>, vector<16x64xbf16>, vector<64x64xf32> -> vector<64x64xf32>
    %188 = arith.subf %123, %180 : vector<64x128xf32>
    %189 = arith.subf %124, %187 : vector<64x64xf32>
    %190 = arith.truncf %188 : vector<64x128xf32> to vector<64x128xbf16>
    %191 = arith.truncf %189 : vector<64x64xf32> to vector<64x64xbf16>
    %cst_52 = arith.constant dense<0.000000e+00> : vector<16x128xf32>
    %192 = tpu.matmul %146, %190, %cst_52 {dimension_numbers = #tpu.dot_dimension_numbers<[1], [0], [0], [1], [0, 0, 1, 1], [], []>} : vector<16x64xbf16>, vector<64x128xbf16>, vector<16x128xf32> -> vector<16x128xf32>
    %193 = vector.extract_strided_slice %192 {offsets = [0, 0], sizes = [16, 64], strides = [1, 1]} : vector<16x128xf32> to vector<16x64xf32>
    %194 = vector.extract_strided_slice %192 {offsets = [0, 64], sizes = [16, 64], strides = [1, 1]} : vector<16x128xf32> to vector<16x64xf32>
    %195 = arith.negf %193 : vector<16x64xf32>
    %196 = math.exp %195 : vector<16x64xf32>
    %cst_53 = arith.constant 1.000000e+00 : f32
    %197 = vector.broadcast %cst_53 : f32 to vector<16x64xf32>
    %198 = arith.addf %197, %196 : vector<16x64xf32>
    %199 = arith.divf %197, %198 : vector<16x64xf32>
    %200 = arith.mulf %193, %199 : vector<16x64xf32>
    %201 = arith.mulf %200, %194 : vector<16x64xf32>
    %202 = arith.truncf %201 : vector<16x64xf32> to vector<16x64xbf16>
    %cst_54 = arith.constant dense<0.000000e+00> : vector<16x64xf32>
    %203 = tpu.matmul %202, %191, %cst_54 {dimension_numbers = #tpu.dot_dimension_numbers<[1], [0], [0], [1], [0, 0, 1, 1], [], []>} : vector<16x64xbf16>, vector<64x64xbf16>, vector<16x64xf32> -> vector<16x64xf32>
    %204 = arith.mulf %203, %203 : vector<16x64xf32>
    %cst_55 = arith.constant dense<0.000000e+00> : vector<16xf32>
    %205 = vector.multi_reduction <add>, %204, %cst_55 [1] : vector<16x64xf32> to vector<16xf32>
    %206 = vector.shape_cast %205 : vector<16xf32> to vector<16x1xf32>
    %cst_56 = arith.constant 6.400000e+01 : f32
    %207 = vector.broadcast %cst_56 : f32 to vector<16x1xf32>
    %208 = arith.divf %206, %207 : vector<16x1xf32>
    %cst_57 = arith.constant 9.99999997E-7 : f32
    %209 = vector.broadcast %cst_57 : f32 to vector<16x1xf32>
    %210 = arith.addf %208, %209 : vector<16x1xf32>
    %211 = math.rsqrt %210 : vector<16x1xf32>
    %212 = vector.broadcast %211 : vector<16x1xf32> to vector<16x64xf32>
    %213 = arith.mulf %203, %212 : vector<16x64xf32>
    %214 = vector.broadcast %57 : vector<1x64xf32> to vector<16x64xf32>
    %215 = arith.mulf %213, %214 : vector<16x64xf32>
    %c0_58 = arith.constant 0 : index
    %c0_59 = arith.constant 0 : index
    %216 = vector.load %arg16[%c0_58, %c0_59] : memref<64x64xf32, #tpu.memory_space<vmem>>, vector<16x64xf32>
    tpu.vector_store %arg16[%c0_58, %c0_59], %215 {strides = array<i32>} : memref<64x64xf32, #tpu.memory_space<vmem>>, vector<16x64xf32>,
    %217 = vector.extract_strided_slice %20 {offsets = [16, 0], sizes = [16, 64], strides = [1, 1]} : vector<64x64xf32> to vector<16x64xf32>
    %218 = vector.extract_strided_slice %21 {offsets = [16, 0], sizes = [16, 64], strides = [1, 1]} : vector<64x64xf32> to vector<16x64xf32>
    %219 = vector.extract_strided_slice %22 {offsets = [16, 0], sizes = [16, 64], strides = [1, 1]} : vector<64x64xf32> to vector<16x64xf32>
    %220 = arith.mulf %217, %217 : vector<16x64xf32>
    %cst_60 = arith.constant dense<0.000000e+00> : vector<16xf32>
    %221 = vector.multi_reduction <add>, %220, %cst_60 [1] : vector<16x64xf32> to vector<16xf32>
    %222 = vector.shape_cast %221 : vector<16xf32> to vector<16x1xf32>
    %cst_61 = arith.constant 9.99999997E-7 : f32
    %223 = vector.broadcast %cst_61 : f32 to vector<16x1xf32>
    %224 = arith.addf %222, %223 : vector<16x1xf32>
    %225 = math.rsqrt %224 : vector<16x1xf32>
    %226 = vector.broadcast %225 : vector<16x1xf32> to vector<16x64xf32>
    %227 = arith.mulf %217, %226 : vector<16x64xf32>
    %228 = arith.mulf %218, %218 : vector<16x64xf32>
    %cst_62 = arith.constant dense<0.000000e+00> : vector<16xf32>
    %229 = vector.multi_reduction <add>, %228, %cst_62 [1] : vector<16x64xf32> to vector<16xf32>
    %230 = vector.shape_cast %229 : vector<16xf32> to vector<16x1xf32>
    %cst_63 = arith.constant 9.99999997E-7 : f32
    %231 = vector.broadcast %cst_63 : f32 to vector<16x1xf32>
    %232 = arith.addf %230, %231 : vector<16x1xf32>
    %233 = math.rsqrt %232 : vector<16x1xf32>
    %234 = vector.broadcast %233 : vector<16x1xf32> to vector<16x64xf32>
    %235 = arith.mulf %218, %234 : vector<16x64xf32>
    %236 = arith.truncf %227 : vector<16x64xf32> to vector<16x64xbf16>
    %237 = arith.truncf %235 : vector<16x64xf32> to vector<16x64xbf16>
    %238 = arith.truncf %219 : vector<16x64xf32> to vector<16x64xbf16>
    %239 = vector.extract_strided_slice %38 {offsets = [16, 0], sizes = [16, 1], strides = [1, 1]} : vector<64x3xf32> to vector<16x1xf32>
    %240 = vector.extract_strided_slice %38 {offsets = [16, 1], sizes = [16, 1], strides = [1, 1]} : vector<64x3xf32> to vector<16x1xf32>
    %241 = vector.extract_strided_slice %38 {offsets = [16, 2], sizes = [16, 1], strides = [1, 1]} : vector<64x3xf32> to vector<16x1xf32>
    %cst_64 = arith.constant dense<0.000000e+00> : vector<16x128xf32>
    %242 = tpu.matmul %237, %190, %cst_64 {dimension_numbers = #tpu.dot_dimension_numbers<[1], [0], [0], [1], [0, 0, 1, 1], [], []>} : vector<16x64xbf16>, vector<64x128xbf16>, vector<16x128xf32> -> vector<16x128xf32>
    %243 = vector.extract_strided_slice %242 {offsets = [0, 0], sizes = [16, 64], strides = [1, 1]} : vector<16x128xf32> to vector<16x64xf32>
    %244 = vector.extract_strided_slice %242 {offsets = [0, 64], sizes = [16, 64], strides = [1, 1]} : vector<16x128xf32> to vector<16x64xf32>
    %245 = arith.negf %243 : vector<16x64xf32>
    %246 = math.exp %245 : vector<16x64xf32>
    %cst_65 = arith.constant 1.000000e+00 : f32
    %247 = vector.broadcast %cst_65 : f32 to vector<16x64xf32>
    %248 = arith.addf %247, %246 : vector<16x64xf32>
    %249 = arith.divf %247, %248 : vector<16x64xf32>
    %250 = arith.mulf %243, %249 : vector<16x64xf32>
    %251 = arith.mulf %250, %244 : vector<16x64xf32>
    %cst_66 = arith.constant dense<0.000000e+00> : vector<16x64xf32>
    %252 = tpu.matmul %238, %191, %cst_66 {dimension_numbers = #tpu.dot_dimension_numbers<[1], [1], [0], [0], [0, 0, 1, 0], [], []>} : vector<16x64xbf16>, vector<64x64xbf16>, vector<16x64xf32> -> vector<16x64xf32>
    %cst_67 = arith.constant 0.000000e+00 : f32
    %253 = vector.broadcast %cst_67 : f32 to vector<16x64xf32>
    %254 = arith.subf %253, %252 : vector<16x64xf32>
    %cst_68 = arith.constant 1.000000e+00 : f32
    %255 = vector.broadcast %cst_68 : f32 to vector<16x64xf32>
    %256 = arith.subf %255, %249 : vector<16x64xf32>
    %257 = arith.mulf %243, %256 : vector<16x64xf32>
    %cst_69 = arith.constant 1.000000e+00 : f32
    %258 = vector.broadcast %cst_69 : f32 to vector<16x64xf32>
    %259 = arith.addf %258, %257 : vector<16x64xf32>
    %260 = arith.mulf %249, %259 : vector<16x64xf32>
    %261 = arith.mulf %254, %244 : vector<16x64xf32>
    %262 = arith.mulf %261, %260 : vector<16x64xf32>
    %263 = arith.mulf %254, %250 : vector<16x64xf32>
    %264 = vector.broadcast %239 : vector<16x1xf32> to vector<16x64xf32>
    %265 = arith.mulf %262, %264 : vector<16x64xf32>
    %266 = vector.broadcast %241 : vector<16x1xf32> to vector<16x64xf32>
    %267 = arith.mulf %263, %266 : vector<16x64xf32>
    %268 = tpu.concatenate %265, %267 in 1 : vector<16x64xf32>, vector<16x64xf32> -> vector<16x128xf32>
    %269 = arith.truncf %268 : vector<16x128xf32> to vector<16x128xbf16>
    %cst_70 = arith.constant dense<0.000000e+00> : vector<64x128xf32>
    %270 = tpu.matmul %237, %269, %cst_70 {dimension_numbers = #tpu.dot_dimension_numbers<[0], [0], [1], [1], [0, 1, 1, 1], [], []>} : vector<16x64xbf16>, vector<16x128xbf16>, vector<64x128xf32> -> vector<64x128xf32>
    %271 = arith.truncf %251 : vector<16x64xf32> to vector<16x64xbf16>
    %cst_71 = arith.constant 0.000000e+00 : f32
    %272 = vector.broadcast %cst_71 : f32 to vector<16x64xf32>
    %273 = arith.subf %272, %219 : vector<16x64xf32>
    %274 = vector.broadcast %240 : vector<16x1xf32> to vector<16x64xf32>
    %275 = arith.mulf %273, %274 : vector<16x64xf32>
    %276 = arith.truncf %275 : vector<16x64xf32> to vector<16x64xbf16>
    %cst_72 = arith.constant dense<0.000000e+00> : vector<64x64xf32>
    %277 = tpu.matmul %271, %276, %cst_72 {dimension_numbers = #tpu.dot_dimension_numbers<[0], [0], [1], [1], [0, 1, 1, 1], [], []>} : vector<16x64xbf16>, vector<16x64xbf16>, vector<64x64xf32> -> vector<64x64xf32>
    %278 = arith.subf %188, %270 : vector<64x128xf32>
    %279 = arith.subf %189, %277 : vector<64x64xf32>
    %280 = arith.truncf %278 : vector<64x128xf32> to vector<64x128xbf16>
    %281 = arith.truncf %279 : vector<64x64xf32> to vector<64x64xbf16>
    %cst_73 = arith.constant dense<0.000000e+00> : vector<16x128xf32>
    %282 = tpu.matmul %236, %280, %cst_73 {dimension_numbers = #tpu.dot_dimension_numbers<[1], [0], [0], [1], [0, 0, 1, 1], [], []>} : vector<16x64xbf16>, vector<64x128xbf16>, vector<16x128xf32> -> vector<16x128xf32>
    %283 = vector.extract_strided_slice %282 {offsets = [0, 0], sizes = [16, 64], strides = [1, 1]} : vector<16x128xf32> to vector<16x64xf32>
    %284 = vector.extract_strided_slice %282 {offsets = [0, 64], sizes = [16, 64], strides = [1, 1]} : vector<16x128xf32> to vector<16x64xf32>
    %285 = arith.negf %283 : vector<16x64xf32>
    %286 = math.exp %285 : vector<16x64xf32>
    %cst_74 = arith.constant 1.000000e+00 : f32
    %287 = vector.broadcast %cst_74 : f32 to vector<16x64xf32>
    %288 = arith.addf %287, %286 : vector<16x64xf32>
    %289 = arith.divf %287, %288 : vector<16x64xf32>
    %290 = arith.mulf %283, %289 : vector<16x64xf32>
    %291 = arith.mulf %290, %284 : vector<16x64xf32>
    %292 = arith.truncf %291 : vector<16x64xf32> to vector<16x64xbf16>
    %cst_75 = arith.constant dense<0.000000e+00> : vector<16x64xf32>
    %293 = tpu.matmul %292, %281, %cst_75 {dimension_numbers = #tpu.dot_dimension_numbers<[1], [0], [0], [1], [0, 0, 1, 1], [], []>} : vector<16x64xbf16>, vector<64x64xbf16>, vector<16x64xf32> -> vector<16x64xf32>
    %294 = arith.mulf %293, %293 : vector<16x64xf32>
    %cst_76 = arith.constant dense<0.000000e+00> : vector<16xf32>
    %295 = vector.multi_reduction <add>, %294, %cst_76 [1] : vector<16x64xf32> to vector<16xf32>
    %296 = vector.shape_cast %295 : vector<16xf32> to vector<16x1xf32>
    %cst_77 = arith.constant 6.400000e+01 : f32
    %297 = vector.broadcast %cst_77 : f32 to vector<16x1xf32>
    %298 = arith.divf %296, %297 : vector<16x1xf32>
    %cst_78 = arith.constant 9.99999997E-7 : f32
    %299 = vector.broadcast %cst_78 : f32 to vector<16x1xf32>
    %300 = arith.addf %298, %299 : vector<16x1xf32>
    %301 = math.rsqrt %300 : vector<16x1xf32>
    %302 = vector.broadcast %301 : vector<16x1xf32> to vector<16x64xf32>
    %303 = arith.mulf %293, %302 : vector<16x64xf32>
    %304 = vector.broadcast %57 : vector<1x64xf32> to vector<16x64xf32>
    %305 = arith.mulf %303, %304 : vector<16x64xf32>
    %c16 = arith.constant 16 : index
    %c0_79 = arith.constant 0 : index
    %306 = vector.load %arg16[%c16, %c0_79] : memref<64x64xf32, #tpu.memory_space<vmem>>, vector<16x64xf32>
    tpu.vector_store %arg16[%c16, %c0_79], %305 {strides = array<i32>} : memref<64x64xf32, #tpu.memory_space<vmem>>, vector<16x64xf32>,
    %307 = vector.extract_strided_slice %20 {offsets = [32, 0], sizes = [16, 64], strides = [1, 1]} : vector<64x64xf32> to vector<16x64xf32>
    %308 = vector.extract_strided_slice %21 {offsets = [32, 0], sizes = [16, 64], strides = [1, 1]} : vector<64x64xf32> to vector<16x64xf32>
    %309 = vector.extract_strided_slice %22 {offsets = [32, 0], sizes = [16, 64], strides = [1, 1]} : vector<64x64xf32> to vector<16x64xf32>
    %310 = arith.mulf %307, %307 : vector<16x64xf32>
    %cst_80 = arith.constant dense<0.000000e+00> : vector<16xf32>
    %311 = vector.multi_reduction <add>, %310, %cst_80 [1] : vector<16x64xf32> to vector<16xf32>
    %312 = vector.shape_cast %311 : vector<16xf32> to vector<16x1xf32>
    %cst_81 = arith.constant 9.99999997E-7 : f32
    %313 = vector.broadcast %cst_81 : f32 to vector<16x1xf32>
    %314 = arith.addf %312, %313 : vector<16x1xf32>
    %315 = math.rsqrt %314 : vector<16x1xf32>
    %316 = vector.broadcast %315 : vector<16x1xf32> to vector<16x64xf32>
    %317 = arith.mulf %307, %316 : vector<16x64xf32>
    %318 = arith.mulf %308, %308 : vector<16x64xf32>
    %cst_82 = arith.constant dense<0.000000e+00> : vector<16xf32>
    %319 = vector.multi_reduction <add>, %318, %cst_82 [1] : vector<16x64xf32> to vector<16xf32>
    %320 = vector.shape_cast %319 : vector<16xf32> to vector<16x1xf32>
    %cst_83 = arith.constant 9.99999997E-7 : f32
    %321 = vector.broadcast %cst_83 : f32 to vector<16x1xf32>
    %322 = arith.addf %320, %321 : vector<16x1xf32>
    %323 = math.rsqrt %322 : vector<16x1xf32>
    %324 = vector.broadcast %323 : vector<16x1xf32> to vector<16x64xf32>
    %325 = arith.mulf %308, %324 : vector<16x64xf32>
    %326 = arith.truncf %317 : vector<16x64xf32> to vector<16x64xbf16>
    %327 = arith.truncf %325 : vector<16x64xf32> to vector<16x64xbf16>
    %328 = arith.truncf %309 : vector<16x64xf32> to vector<16x64xbf16>
    %329 = vector.extract_strided_slice %38 {offsets = [32, 0], sizes = [16, 1], strides = [1, 1]} : vector<64x3xf32> to vector<16x1xf32>
    %330 = vector.extract_strided_slice %38 {offsets = [32, 1], sizes = [16, 1], strides = [1, 1]} : vector<64x3xf32> to vector<16x1xf32>
    %331 = vector.extract_strided_slice %38 {offsets = [32, 2], sizes = [16, 1], strides = [1, 1]} : vector<64x3xf32> to vector<16x1xf32>
    %cst_84 = arith.constant dense<0.000000e+00> : vector<16x128xf32>
    %332 = tpu.matmul %327, %280, %cst_84 {dimension_numbers = #tpu.dot_dimension_numbers<[1], [0], [0], [1], [0, 0, 1, 1], [], []>} : vector<16x64xbf16>, vector<64x128xbf16>, vector<16x128xf32> -> vector<16x128xf32>
    %333 = vector.extract_strided_slice %332 {offsets = [0, 0], sizes = [16, 64], strides = [1, 1]} : vector<16x128xf32> to vector<16x64xf32>
    %334 = vector.extract_strided_slice %332 {offsets = [0, 64], sizes = [16, 64], strides = [1, 1]} : vector<16x128xf32> to vector<16x64xf32>
    %335 = arith.negf %333 : vector<16x64xf32>
    %336 = math.exp %335 : vector<16x64xf32>
    %cst_85 = arith.constant 1.000000e+00 : f32
    %337 = vector.broadcast %cst_85 : f32 to vector<16x64xf32>
    %338 = arith.addf %337, %336 : vector<16x64xf32>
    %339 = arith.divf %337, %338 : vector<16x64xf32>
    %340 = arith.mulf %333, %339 : vector<16x64xf32>
    %341 = arith.mulf %340, %334 : vector<16x64xf32>
    %cst_86 = arith.constant dense<0.000000e+00> : vector<16x64xf32>
    %342 = tpu.matmul %328, %281, %cst_86 {dimension_numbers = #tpu.dot_dimension_numbers<[1], [1], [0], [0], [0, 0, 1, 0], [], []>} : vector<16x64xbf16>, vector<64x64xbf16>, vector<16x64xf32> -> vector<16x64xf32>
    %cst_87 = arith.constant 0.000000e+00 : f32
    %343 = vector.broadcast %cst_87 : f32 to vector<16x64xf32>
    %344 = arith.subf %343, %342 : vector<16x64xf32>
    %cst_88 = arith.constant 1.000000e+00 : f32
    %345 = vector.broadcast %cst_88 : f32 to vector<16x64xf32>
    %346 = arith.subf %345, %339 : vector<16x64xf32>
    %347 = arith.mulf %333, %346 : vector<16x64xf32>
    %cst_89 = arith.constant 1.000000e+00 : f32
    %348 = vector.broadcast %cst_89 : f32 to vector<16x64xf32>
    %349 = arith.addf %348, %347 : vector<16x64xf32>
    %350 = arith.mulf %339, %349 : vector<16x64xf32>
    %351 = arith.mulf %344, %334 : vector<16x64xf32>
    %352 = arith.mulf %351, %350 : vector<16x64xf32>
    %353 = arith.mulf %344, %340 : vector<16x64xf32>
    %354 = vector.broadcast %329 : vector<16x1xf32> to vector<16x64xf32>
    %355 = arith.mulf %352, %354 : vector<16x64xf32>
    %356 = vector.broadcast %331 : vector<16x1xf32> to vector<16x64xf32>
    %357 = arith.mulf %353, %356 : vector<16x64xf32>
    %358 = tpu.concatenate %355, %357 in 1 : vector<16x64xf32>, vector<16x64xf32> -> vector<16x128xf32>
    %359 = arith.truncf %358 : vector<16x128xf32> to vector<16x128xbf16>
    %cst_90 = arith.constant dense<0.000000e+00> : vector<64x128xf32>
    %360 = tpu.matmul %327, %359, %cst_90 {dimension_numbers = #tpu.dot_dimension_numbers<[0], [0], [1], [1], [0, 1, 1, 1], [], []>} : vector<16x64xbf16>, vector<16x128xbf16>, vector<64x128xf32> -> vector<64x128xf32>
    %361 = arith.truncf %341 : vector<16x64xf32> to vector<16x64xbf16>
    %cst_91 = arith.constant 0.000000e+00 : f32
    %362 = vector.broadcast %cst_91 : f32 to vector<16x64xf32>
    %363 = arith.subf %362, %309 : vector<16x64xf32>
    %364 = vector.broadcast %330 : vector<16x1xf32> to vector<16x64xf32>
    %365 = arith.mulf %363, %364 : vector<16x64xf32>
    %366 = arith.truncf %365 : vector<16x64xf32> to vector<16x64xbf16>
    %cst_92 = arith.constant dense<0.000000e+00> : vector<64x64xf32>
    %367 = tpu.matmul %361, %366, %cst_92 {dimension_numbers = #tpu.dot_dimension_numbers<[0], [0], [1], [1], [0, 1, 1, 1], [], []>} : vector<16x64xbf16>, vector<16x64xbf16>, vector<64x64xf32> -> vector<64x64xf32>
    %368 = arith.subf %278, %360 : vector<64x128xf32>
    %369 = arith.subf %279, %367 : vector<64x64xf32>
    %370 = arith.truncf %368 : vector<64x128xf32> to vector<64x128xbf16>
    %371 = arith.truncf %369 : vector<64x64xf32> to vector<64x64xbf16>
    %cst_93 = arith.constant dense<0.000000e+00> : vector<16x128xf32>
    %372 = tpu.matmul %326, %370, %cst_93 {dimension_numbers = #tpu.dot_dimension_numbers<[1], [0], [0], [1], [0, 0, 1, 1], [], []>} : vector<16x64xbf16>, vector<64x128xbf16>, vector<16x128xf32> -> vector<16x128xf32>
    %373 = vector.extract_strided_slice %372 {offsets = [0, 0], sizes = [16, 64], strides = [1, 1]} : vector<16x128xf32> to vector<16x64xf32>
    %374 = vector.extract_strided_slice %372 {offsets = [0, 64], sizes = [16, 64], strides = [1, 1]} : vector<16x128xf32> to vector<16x64xf32>
    %375 = arith.negf %373 : vector<16x64xf32>
    %376 = math.exp %375 : vector<16x64xf32>
    %cst_94 = arith.constant 1.000000e+00 : f32
    %377 = vector.broadcast %cst_94 : f32 to vector<16x64xf32>
    %378 = arith.addf %377, %376 : vector<16x64xf32>
    %379 = arith.divf %377, %378 : vector<16x64xf32>
    %380 = arith.mulf %373, %379 : vector<16x64xf32>
    %381 = arith.mulf %380, %374 : vector<16x64xf32>
    %382 = arith.truncf %381 : vector<16x64xf32> to vector<16x64xbf16>
    %cst_95 = arith.constant dense<0.000000e+00> : vector<16x64xf32>
    %383 = tpu.matmul %382, %371, %cst_95 {dimension_numbers = #tpu.dot_dimension_numbers<[1], [0], [0], [1], [0, 0, 1, 1], [], []>} : vector<16x64xbf16>, vector<64x64xbf16>, vector<16x64xf32> -> vector<16x64xf32>
    %384 = arith.mulf %383, %383 : vector<16x64xf32>
    %cst_96 = arith.constant dense<0.000000e+00> : vector<16xf32>
    %385 = vector.multi_reduction <add>, %384, %cst_96 [1] : vector<16x64xf32> to vector<16xf32>
    %386 = vector.shape_cast %385 : vector<16xf32> to vector<16x1xf32>
    %cst_97 = arith.constant 6.400000e+01 : f32
    %387 = vector.broadcast %cst_97 : f32 to vector<16x1xf32>
    %388 = arith.divf %386, %387 : vector<16x1xf32>
    %cst_98 = arith.constant 9.99999997E-7 : f32
    %389 = vector.broadcast %cst_98 : f32 to vector<16x1xf32>
    %390 = arith.addf %388, %389 : vector<16x1xf32>
    %391 = math.rsqrt %390 : vector<16x1xf32>
    %392 = vector.broadcast %391 : vector<16x1xf32> to vector<16x64xf32>
    %393 = arith.mulf %383, %392 : vector<16x64xf32>
    %394 = vector.broadcast %57 : vector<1x64xf32> to vector<16x64xf32>
    %395 = arith.mulf %393, %394 : vector<16x64xf32>
    %c32 = arith.constant 32 : index
    %c0_99 = arith.constant 0 : index
    %396 = vector.load %arg16[%c32, %c0_99] : memref<64x64xf32, #tpu.memory_space<vmem>>, vector<16x64xf32>
    tpu.vector_store %arg16[%c32, %c0_99], %395 {strides = array<i32>} : memref<64x64xf32, #tpu.memory_space<vmem>>, vector<16x64xf32>,
    %397 = vector.extract_strided_slice %20 {offsets = [48, 0], sizes = [16, 64], strides = [1, 1]} : vector<64x64xf32> to vector<16x64xf32>
    %398 = vector.extract_strided_slice %21 {offsets = [48, 0], sizes = [16, 64], strides = [1, 1]} : vector<64x64xf32> to vector<16x64xf32>
    %399 = vector.extract_strided_slice %22 {offsets = [48, 0], sizes = [16, 64], strides = [1, 1]} : vector<64x64xf32> to vector<16x64xf32>
    %400 = arith.mulf %397, %397 : vector<16x64xf32>
    %cst_100 = arith.constant dense<0.000000e+00> : vector<16xf32>
    %401 = vector.multi_reduction <add>, %400, %cst_100 [1] : vector<16x64xf32> to vector<16xf32>
    %402 = vector.shape_cast %401 : vector<16xf32> to vector<16x1xf32>
    %cst_101 = arith.constant 9.99999997E-7 : f32
    %403 = vector.broadcast %cst_101 : f32 to vector<16x1xf32>
    %404 = arith.addf %402, %403 : vector<16x1xf32>
    %405 = math.rsqrt %404 : vector<16x1xf32>
    %406 = vector.broadcast %405 : vector<16x1xf32> to vector<16x64xf32>
    %407 = arith.mulf %397, %406 : vector<16x64xf32>
    %408 = arith.mulf %398, %398 : vector<16x64xf32>
    %cst_102 = arith.constant dense<0.000000e+00> : vector<16xf32>
    %409 = vector.multi_reduction <add>, %408, %cst_102 [1] : vector<16x64xf32> to vector<16xf32>
    %410 = vector.shape_cast %409 : vector<16xf32> to vector<16x1xf32>
    %cst_103 = arith.constant 9.99999997E-7 : f32
    %411 = vector.broadcast %cst_103 : f32 to vector<16x1xf32>
    %412 = arith.addf %410, %411 : vector<16x1xf32>
    %413 = math.rsqrt %412 : vector<16x1xf32>
    %414 = vector.broadcast %413 : vector<16x1xf32> to vector<16x64xf32>
    %415 = arith.mulf %398, %414 : vector<16x64xf32>
    %416 = arith.truncf %407 : vector<16x64xf32> to vector<16x64xbf16>
    %417 = arith.truncf %415 : vector<16x64xf32> to vector<16x64xbf16>
    %418 = arith.truncf %399 : vector<16x64xf32> to vector<16x64xbf16>
    %419 = vector.extract_strided_slice %38 {offsets = [48, 0], sizes = [16, 1], strides = [1, 1]} : vector<64x3xf32> to vector<16x1xf32>
    %420 = vector.extract_strided_slice %38 {offsets = [48, 1], sizes = [16, 1], strides = [1, 1]} : vector<64x3xf32> to vector<16x1xf32>
    %421 = vector.extract_strided_slice %38 {offsets = [48, 2], sizes = [16, 1], strides = [1, 1]} : vector<64x3xf32> to vector<16x1xf32>
    %cst_104 = arith.constant dense<0.000000e+00> : vector<16x128xf32>
    %422 = tpu.matmul %417, %370, %cst_104 {dimension_numbers = #tpu.dot_dimension_numbers<[1], [0], [0], [1], [0, 0, 1, 1], [], []>} : vector<16x64xbf16>, vector<64x128xbf16>, vector<16x128xf32> -> vector<16x128xf32>
    %423 = vector.extract_strided_slice %422 {offsets = [0, 0], sizes = [16, 64], strides = [1, 1]} : vector<16x128xf32> to vector<16x64xf32>
    %424 = vector.extract_strided_slice %422 {offsets = [0, 64], sizes = [16, 64], strides = [1, 1]} : vector<16x128xf32> to vector<16x64xf32>
    %425 = arith.negf %423 : vector<16x64xf32>
    %426 = math.exp %425 : vector<16x64xf32>
    %cst_105 = arith.constant 1.000000e+00 : f32
    %427 = vector.broadcast %cst_105 : f32 to vector<16x64xf32>
    %428 = arith.addf %427, %426 : vector<16x64xf32>
    %429 = arith.divf %427, %428 : vector<16x64xf32>
    %430 = arith.mulf %423, %429 : vector<16x64xf32>
    %431 = arith.mulf %430, %424 : vector<16x64xf32>
    %cst_106 = arith.constant dense<0.000000e+00> : vector<16x64xf32>
    %432 = tpu.matmul %418, %371, %cst_106 {dimension_numbers = #tpu.dot_dimension_numbers<[1], [1], [0], [0], [0, 0, 1, 0], [], []>} : vector<16x64xbf16>, vector<64x64xbf16>, vector<16x64xf32> -> vector<16x64xf32>
    %cst_107 = arith.constant 0.000000e+00 : f32
    %433 = vector.broadcast %cst_107 : f32 to vector<16x64xf32>
    %434 = arith.subf %433, %432 : vector<16x64xf32>
    %cst_108 = arith.constant 1.000000e+00 : f32
    %435 = vector.broadcast %cst_108 : f32 to vector<16x64xf32>
    %436 = arith.subf %435, %429 : vector<16x64xf32>
    %437 = arith.mulf %423, %436 : vector<16x64xf32>
    %cst_109 = arith.constant 1.000000e+00 : f32
    %438 = vector.broadcast %cst_109 : f32 to vector<16x64xf32>
    %439 = arith.addf %438, %437 : vector<16x64xf32>
    %440 = arith.mulf %429, %439 : vector<16x64xf32>
    %441 = arith.mulf %434, %424 : vector<16x64xf32>
    %442 = arith.mulf %441, %440 : vector<16x64xf32>
    %443 = arith.mulf %434, %430 : vector<16x64xf32>
    %444 = vector.broadcast %419 : vector<16x1xf32> to vector<16x64xf32>
    %445 = arith.mulf %442, %444 : vector<16x64xf32>
    %446 = vector.broadcast %421 : vector<16x1xf32> to vector<16x64xf32>
    %447 = arith.mulf %443, %446 : vector<16x64xf32>
    %448 = tpu.concatenate %445, %447 in 1 : vector<16x64xf32>, vector<16x64xf32> -> vector<16x128xf32>
    %449 = arith.truncf %448 : vector<16x128xf32> to vector<16x128xbf16>
    %cst_110 = arith.constant dense<0.000000e+00> : vector<64x128xf32>
    %450 = tpu.matmul %417, %449, %cst_110 {dimension_numbers = #tpu.dot_dimension_numbers<[0], [0], [1], [1], [0, 1, 1, 1], [], []>} : vector<16x64xbf16>, vector<16x128xbf16>, vector<64x128xf32> -> vector<64x128xf32>
    %451 = arith.truncf %431 : vector<16x64xf32> to vector<16x64xbf16>
    %cst_111 = arith.constant 0.000000e+00 : f32
    %452 = vector.broadcast %cst_111 : f32 to vector<16x64xf32>
    %453 = arith.subf %452, %399 : vector<16x64xf32>
    %454 = vector.broadcast %420 : vector<16x1xf32> to vector<16x64xf32>
    %455 = arith.mulf %453, %454 : vector<16x64xf32>
    %456 = arith.truncf %455 : vector<16x64xf32> to vector<16x64xbf16>
    %cst_112 = arith.constant dense<0.000000e+00> : vector<64x64xf32>
    %457 = tpu.matmul %451, %456, %cst_112 {dimension_numbers = #tpu.dot_dimension_numbers<[0], [0], [1], [1], [0, 1, 1, 1], [], []>} : vector<16x64xbf16>, vector<16x64xbf16>, vector<64x64xf32> -> vector<64x64xf32>
    %458 = arith.subf %368, %450 : vector<64x128xf32>
    %459 = arith.subf %369, %457 : vector<64x64xf32>
    %460 = arith.truncf %458 : vector<64x128xf32> to vector<64x128xbf16>
    %461 = arith.truncf %459 : vector<64x64xf32> to vector<64x64xbf16>
    %cst_113 = arith.constant dense<0.000000e+00> : vector<16x128xf32>
    %462 = tpu.matmul %416, %460, %cst_113 {dimension_numbers = #tpu.dot_dimension_numbers<[1], [0], [0], [1], [0, 0, 1, 1], [], []>} : vector<16x64xbf16>, vector<64x128xbf16>, vector<16x128xf32> -> vector<16x128xf32>
    %463 = vector.extract_strided_slice %462 {offsets = [0, 0], sizes = [16, 64], strides = [1, 1]} : vector<16x128xf32> to vector<16x64xf32>
    %464 = vector.extract_strided_slice %462 {offsets = [0, 64], sizes = [16, 64], strides = [1, 1]} : vector<16x128xf32> to vector<16x64xf32>
    %465 = arith.negf %463 : vector<16x64xf32>
    %466 = math.exp %465 : vector<16x64xf32>
    %cst_114 = arith.constant 1.000000e+00 : f32
    %467 = vector.broadcast %cst_114 : f32 to vector<16x64xf32>
    %468 = arith.addf %467, %466 : vector<16x64xf32>
    %469 = arith.divf %467, %468 : vector<16x64xf32>
    %470 = arith.mulf %463, %469 : vector<16x64xf32>
    %471 = arith.mulf %470, %464 : vector<16x64xf32>
    %472 = arith.truncf %471 : vector<16x64xf32> to vector<16x64xbf16>
    %cst_115 = arith.constant dense<0.000000e+00> : vector<16x64xf32>
    %473 = tpu.matmul %472, %461, %cst_115 {dimension_numbers = #tpu.dot_dimension_numbers<[1], [0], [0], [1], [0, 0, 1, 1], [], []>} : vector<16x64xbf16>, vector<64x64xbf16>, vector<16x64xf32> -> vector<16x64xf32>
    %474 = arith.mulf %473, %473 : vector<16x64xf32>
    %cst_116 = arith.constant dense<0.000000e+00> : vector<16xf32>
    %475 = vector.multi_reduction <add>, %474, %cst_116 [1] : vector<16x64xf32> to vector<16xf32>
    %476 = vector.shape_cast %475 : vector<16xf32> to vector<16x1xf32>
    %cst_117 = arith.constant 6.400000e+01 : f32
    %477 = vector.broadcast %cst_117 : f32 to vector<16x1xf32>
    %478 = arith.divf %476, %477 : vector<16x1xf32>
    %cst_118 = arith.constant 9.99999997E-7 : f32
    %479 = vector.broadcast %cst_118 : f32 to vector<16x1xf32>
    %480 = arith.addf %478, %479 : vector<16x1xf32>
    %481 = math.rsqrt %480 : vector<16x1xf32>
    %482 = vector.broadcast %481 : vector<16x1xf32> to vector<16x64xf32>
    %483 = arith.mulf %473, %482 : vector<16x64xf32>
    %484 = vector.broadcast %57 : vector<1x64xf32> to vector<16x64xf32>
    %485 = arith.mulf %483, %484 : vector<16x64xf32>
    %c48 = arith.constant 48 : index
    %c0_119 = arith.constant 0 : index
    %486 = vector.load %arg16[%c48, %c0_119] : memref<64x64xf32, #tpu.memory_space<vmem>>, vector<16x64xf32>
    tpu.vector_store %arg16[%c48, %c0_119], %485 {strides = array<i32>} : memref<64x64xf32, #tpu.memory_space<vmem>>, vector<16x64xf32>,
    %c0_120 = arith.constant 0 : index
    %c0_121 = arith.constant 0 : index
    %487 = vector.load %arg16[%c0_120, %c0_121] : memref<64x64xf32, #tpu.memory_space<vmem>>, vector<64x64xf32>
    %488 = arith.addf %122, %487 : vector<64x64xf32>
    %489 = arith.truncf %488 : vector<64x64xf32> to vector<64x64xbf16>
    %c0_122 = arith.constant 0 : index
    %c0_123 = arith.constant 0 : index
    %490 = vector.load %arg11[%c0_122, %c0_123] : memref<64x64xbf16, #tpu.memory_space<vmem>>, vector<64x64xbf16>
    %cst_124 = arith.constant dense<0.000000e+00> : vector<64x64xf32>
    %491 = tpu.matmul %489, %490, %cst_124 {dimension_numbers = #tpu.dot_dimension_numbers<[1], [0], [0], [1], [0, 0, 1, 1], [], []>} : vector<64x64xbf16>, vector<64x64xbf16>, vector<64x64xf32> -> vector<64x64xf32>
    %492 = arith.truncf %491 : vector<64x64xf32> to vector<64x64xbf16>
    %493 = arith.extf %492 : vector<64x64xbf16> to vector<64x64xf32>
    %494 = arith.addf %493, %2 : vector<64x64xf32>
    %495 = arith.mulf %494, %494 : vector<64x64xf32>
    %cst_125 = arith.constant dense<0.000000e+00> : vector<64xf32>
    %496 = vector.multi_reduction <add>, %495, %cst_125 [1] : vector<64x64xf32> to vector<64xf32>
    %497 = vector.shape_cast %496 : vector<64xf32> to vector<64x1xf32>
    %cst_126 = arith.constant 6.400000e+01 : f32
    %498 = vector.broadcast %cst_126 : f32 to vector<64x1xf32>
    %499 = arith.divf %497, %498 : vector<64x1xf32>
    %cst_127 = arith.constant 9.99999997E-7 : f32
    %500 = vector.broadcast %cst_127 : f32 to vector<64x1xf32>
    %501 = arith.addf %499, %500 : vector<64x1xf32>
    %502 = math.rsqrt %501 : vector<64x1xf32>
    %503 = vector.broadcast %502 : vector<64x1xf32> to vector<64x64xf32>
    %504 = arith.mulf %494, %503 : vector<64x64xf32>
    %c0_128 = arith.constant 0 : index
    %c0_129 = arith.constant 0 : index
    %505 = vector.load %arg12[%c0_128, %c0_129] : memref<1x64xbf16, #tpu.memory_space<vmem>>, vector<1x64xbf16>
    %506 = arith.extf %505 : vector<1x64xbf16> to vector<1x64xf32>
    %507 = vector.broadcast %506 : vector<1x64xf32> to vector<64x64xf32>
    %508 = arith.mulf %504, %507 : vector<64x64xf32>
    %509 = arith.truncf %508 : vector<64x64xf32> to vector<64x64xbf16>
    %c0_130 = arith.constant 0 : index
    %c0_131 = arith.constant 0 : index
    %510 = vector.load %arg13[%c0_130, %c0_131] : memref<64x256xbf16, #tpu.memory_space<vmem>>, vector<64x256xbf16>
    %cst_132 = arith.constant dense<0.000000e+00> : vector<64x256xf32>
    %511 = tpu.matmul %509, %510, %cst_132 {dimension_numbers = #tpu.dot_dimension_numbers<[1], [0], [0], [1], [0, 0, 1, 1], [], []>} : vector<64x64xbf16>, vector<64x256xbf16>, vector<64x256xf32> -> vector<64x256xf32>
    %512 = vector.extract_strided_slice %511 {offsets = [0, 0], sizes = [64, 128], strides = [1, 1]} : vector<64x256xf32> to vector<64x128xf32>
    %513 = vector.extract_strided_slice %511 {offsets = [0, 128], sizes = [64, 128], strides = [1, 1]} : vector<64x256xf32> to vector<64x128xf32>
    %514 = arith.negf %512 : vector<64x128xf32>
    %515 = math.exp %514 : vector<64x128xf32>
    %cst_133 = arith.constant 1.000000e+00 : f32
    %516 = vector.broadcast %cst_133 : f32 to vector<64x128xf32>
    %517 = arith.addf %516, %515 : vector<64x128xf32>
    %518 = arith.divf %516, %517 : vector<64x128xf32>
    %519 = arith.mulf %512, %518 : vector<64x128xf32>
    %520 = arith.mulf %519, %513 : vector<64x128xf32>
    %521 = arith.truncf %520 : vector<64x128xf32> to vector<64x128xbf16>
    %c0_134 = arith.constant 0 : index
    %c0_135 = arith.constant 0 : index
    %522 = vector.load %arg14[%c0_134, %c0_135] : memref<128x64xbf16, #tpu.memory_space<vmem>>, vector<128x64xbf16>
    %cst_136 = arith.constant dense<0.000000e+00> : vector<64x64xf32>
    %523 = tpu.matmul %521, %522, %cst_136 {dimension_numbers = #tpu.dot_dimension_numbers<[1], [0], [0], [1], [0, 0, 1, 1], [], []>} : vector<64x128xbf16>, vector<128x64xbf16>, vector<64x64xf32> -> vector<64x64xf32>
    %524 = arith.addf %523, %494 : vector<64x64xf32>
    %525 = arith.truncf %524 : vector<64x64xf32> to vector<64x64xbf16>
    %526 = vector.shape_cast %525 : vector<64x64xbf16> to vector<1x64x64xbf16>
    %c0_137 = arith.constant 0 : index
    %c0_138 = arith.constant 0 : index
    %c0_139 = arith.constant 0 : index
    %527 = vector.load %arg15[%c0_137, %c0_138, %c0_139] : memref<1x64x64xbf16, #tpu.memory_space<vmem>>, vector<1x64x64xbf16>
    tpu.vector_store %arg15[%c0_137, %c0_138, %c0_139], %526 {strides = array<i32>} : memref<1x64x64xbf16, #tpu.memory_space<vmem>>, vector<1x64x64xbf16>,
    return
  }
  func.func @transform_0(%arg0: i32) -> (i32, i32, i32) {
    %c0_i32 = arith.constant 0 : i32
    %c0_i32_0 = arith.constant 0 : i32
    %c0_i32_1 = arith.constant 0 : i32
    return %arg0, %c0_i32, %c0_i32_0 : i32, i32, i32
  }
  func.func @transform_1(%arg0: i32) -> (i32, i32) {
    %c0_i32 = arith.constant 0 : i32
    %c0_i32_0 = arith.constant 0 : i32
    %c0_i32_1 = arith.constant 0 : i32
    return %c0_i32, %c0_i32_0 : i32, i32
  }
  func.func @transform_2(%arg0: i32) -> (i32, i32) {
    %c0_i32 = arith.constant 0 : i32
    %c0_i32_0 = arith.constant 0 : i32
    %c0_i32_1 = arith.constant 0 : i32
    return %c0_i32, %c0_i32_0 : i32, i32
  }
  func.func @transform_3(%arg0: i32) -> (i32, i32) {
    %c0_i32 = arith.constant 0 : i32
    %c0_i32_0 = arith.constant 0 : i32
    %c0_i32_1 = arith.constant 0 : i32
    return %c0_i32, %c0_i32_0 : i32, i32
  }
  func.func @transform_4(%arg0: i32) -> (i32, i32) {
    %c0_i32 = arith.constant 0 : i32
    %c0_i32_0 = arith.constant 0 : i32
    %c0_i32_1 = arith.constant 0 : i32
    return %c0_i32, %c0_i32_0 : i32, i32
  }
  func.func @transform_5(%arg0: i32) -> (i32, i32) {
    %c0_i32 = arith.constant 0 : i32
    %c0_i32_0 = arith.constant 0 : i32
    %c0_i32_1 = arith.constant 0 : i32
    return %c0_i32, %c0_i32_0 : i32, i32
  }
  func.func @transform_6(%arg0: i32) -> (i32, i32, i32) {
    %c0_i32 = arith.constant 0 : i32
    %c0_i32_0 = arith.constant 0 : i32
    %c0_i32_1 = arith.constant 0 : i32
    %c0_i32_2 = arith.constant 0 : i32
    return %c0_i32, %c0_i32_0, %c0_i32_1 : i32, i32, i32
  }
  func.func @transform_7(%arg0: i32) -> (i32, i32, i32) {
    %c0_i32 = arith.constant 0 : i32
    %c0_i32_0 = arith.constant 0 : i32
    %c0_i32_1 = arith.constant 0 : i32
    %c0_i32_2 = arith.constant 0 : i32
    return %c0_i32, %c0_i32_0, %c0_i32_1 : i32, i32, i32
  }
  func.func @transform_8(%arg0: i32) -> (i32, i32) {
    %c0_i32 = arith.constant 0 : i32
    %c0_i32_0 = arith.constant 0 : i32
    %c0_i32_1 = arith.constant 0 : i32
    return %c0_i32, %c0_i32_0 : i32, i32
  }
  func.func @transform_9(%arg0: i32) -> (i32, i32) {
    %c0_i32 = arith.constant 0 : i32
    %c0_i32_0 = arith.constant 0 : i32
    %c0_i32_1 = arith.constant 0 : i32
    return %c0_i32, %c0_i32_0 : i32, i32
  }
  func.func @transform_10(%arg0: i32) -> (i32, i32) {
    %c0_i32 = arith.constant 0 : i32
    %c0_i32_0 = arith.constant 0 : i32
    %c0_i32_1 = arith.constant 0 : i32
    return %c0_i32, %c0_i32_0 : i32, i32
  }
  func.func @transform_11(%arg0: i32) -> (i32, i32) {
    %c0_i32 = arith.constant 0 : i32
    %c0_i32_0 = arith.constant 0 : i32
    %c0_i32_1 = arith.constant 0 : i32
    return %c0_i32, %c0_i32_0 : i32, i32
  }
  func.func @transform_12(%arg0: i32) -> (i32, i32) {
    %c0_i32 = arith.constant 0 : i32
    %c0_i32_0 = arith.constant 0 : i32
    %c0_i32_1 = arith.constant 0 : i32
    return %c0_i32, %c0_i32_0 : i32, i32
  }
  func.func @transform_13(%arg0: i32) -> (i32, i32) {
    %c0_i32 = arith.constant 0 : i32
    %c0_i32_0 = arith.constant 0 : i32
    %c0_i32_1 = arith.constant 0 : i32
    return %c0_i32, %c0_i32_0 : i32, i32
  }
  func.func @transform_14(%arg0: i32) -> (i32, i32, i32) {
    %c0_i32 = arith.constant 0 : i32
    %c0_i32_0 = arith.constant 0 : i32
    %c0_i32_1 = arith.constant 0 : i32
    return %arg0, %c0_i32, %c0_i32_0 : i32, i32, i32
  }
}

</mosaic_0001>

<llo_original>
// kernel: lact_block_forward.1
$region0: #{lact_block_forward.1}
  #allocation0 [shape = 'u32[]', space=smem, size = 0x4, offset = 0x4, fixed_abs, tag = 'smem constant byte address 0x4 - core index']
  #allocation1 [shape = 'u32[72,128]{1,0:T(1,128)}', space=vmem, size = 0x9000, scoped, tag = 'internal scratch']
  #allocation2 [shape = 'f32[64,64]{1,0:T(8,128)}', space=vmem, size = 0x8000, scoped, tag = 'scratch operand']
  %s0 = inlined_call_operand.vmem [shape: bf16[2,64,64], index: 0, kind: input, shape index: {}]
  %s1 = inlined_call_operand.vmem [shape: bf16[1,64], index: 1, kind: input, shape index: {}]
  %s2 = inlined_call_operand.vmem [shape: bf16[64,195], index: 2, kind: input, shape index: {}]
  %s3 = inlined_call_operand.vmem [shape: f32[1,3], index: 3, kind: input, shape index: {}]
  %s4 = inlined_call_operand.vmem [shape: f32[64,32], index: 4, kind: input, shape index: {}]
  %s5 = inlined_call_operand.vmem [shape: f32[64,32], index: 5, kind: input, shape index: {}]
  %s6 = inlined_call_operand.vmem [shape: bf16[1,64,128], index: 6, kind: input, shape index: {}]
  %s7 = inlined_call_operand.vmem [shape: bf16[1,64,64], index: 7, kind: input, shape index: {}]
  %s8 = inlined_call_operand.vmem [shape: bf16[1,64], index: 8, kind: input, shape index: {}]
  %s9 = inlined_call_operand.vmem [shape: bf16[1,64], index: 9, kind: input, shape index: {}]
  %s10 = inlined_call_operand.vmem [shape: bf16[64,64], index: 10, kind: input, shape index: {}]
  %s11 = inlined_call_operand.vmem [shape: bf16[1,64], index: 11, kind: input, shape index: {}]
  %s12 = inlined_call_operand.vmem [shape: bf16[64,256], index: 12, kind: input, shape index: {}]
  %s13 = inlined_call_operand.vmem [shape: bf16[128,64], index: 13, kind: input, shape index: {}]
  %s14 = inlined_call_operand.hbm [shape: bf16[2,64,64], index: 14, kind: output, shape index: {}]
  %s15 = sld [smem:[#allocation0]]
  $region89: #{lact_block_forward.1} parent=0
    _
  %s17 = ssub.s32 1, %s15
  %s18 = scalar_select 0, %s17, %s15
  $region1: #{lact_block_forward.1} parent=0
    #allocation3 [shape = 'u8[32768]{0}', space=vmem, size = 0x8000, scoped, tag = 'output window, operand 0']
    #allocation4 [shape = 's32[2]{0}', space=sflag, size = 0x8, scoped, tag = 'scoped memory for lact_block_forward.1']
    %19 = vsyncpa [#allocation4], 0
    %s20 = scalar_lea.sflag [#allocation4], 1
    %21 = vsyncpa %s20, 0
    loop: start=0, step=1, limit=4
    $region2: #{lact_block_forward.1} parent=1 // loop_pre_header
      _
    $region3: #{lact_block_forward.1} parent=1 // loop_header
      %s23 = sphi 0, %s27
      %p24 = scmp.ge.s32.totalorder %s23, 4
      %s33 = sphi 0, %s35
      %s36 = sphi 0, %s33
      %s37 = sphi 0, %s36
      %s53 = sphi 0, %s37
      %s57 = sphi 0, %s57
      %s59 = sphi 0, %s57
      %s60 = sphi 0, %s59
      %s74 = sphi 0, %s60
      %s78 = sphi 0, %s78
      %s80 = sphi 0, %s78
      %s81 = sphi 0, %s80
      %s95 = sphi 0, %s81
      %s99 = sphi 0, %s99
      %s101 = sphi 0, %s99
      %s102 = sphi 0, %s101
      %s116 = sphi 0, %s102
      %s120 = sphi 0, %s120
      %s122 = sphi 0, %s120
      %s123 = sphi 0, %s122
      %s137 = sphi 0, %s123
      %s141 = sphi 0, %s141
      %s143 = sphi 0, %s141
      %s144 = sphi 0, %s143
      %s158 = sphi 0, %s144
      %s162 = sphi 0, %s162
      %s164 = sphi 0, %s162
      %s165 = sphi 0, %s164
      %s179 = sphi 0, %s165
      %s183 = sphi 0, %s183
      %s185 = sphi 0, %s183
      %s186 = sphi 0, %s185
      %s200 = sphi 0, %s186
      %s204 = sphi 0, %s204
      %s206 = sphi 0, %s204
      %s207 = sphi 0, %s206
      %s221 = sphi 0, %s207
      %s225 = sphi 0, %s225
      %s227 = sphi 0, %s225
      %s228 = sphi 0, %s227
      %s242 = sphi 0, %s228
      %s246 = sphi 0, %s246
      %s248 = sphi 0, %s246
      %s249 = sphi 0, %s248
      %s263 = sphi 0, %s249
      %s267 = sphi 0, %s267
      %s269 = sphi 0, %s267
      %s270 = sphi 0, %s269
      %s284 = sphi 0, %s270
      %s288 = sphi 0, %s288
      %s290 = sphi 0, %s288
      %s291 = sphi 0, %s290
      %s305 = sphi 0, %s291
      %s309 = sphi 0, %s309
      %s311 = sphi 0, %s309
      %s312 = sphi 0, %s311
      %s326 = sphi 0, %s312
      %s332 = sphi 0, %s334
      %s335 = sphi 0, %s332
      %s336 = sphi 0, %s335
      %s352 = sphi 0, %s336
    $region4: #{lact_block_forward.1} parent=1 // loop_header_branch
      %26 = sbr.rel (%p24) target = $region8
    $region5: #{lact_block_forward.1} parent=1 // loop_body
      %s28 = ssub.s32 %s23, 1
      %s29 = ssub.s32 %s23, 2
      %s30 = sadd.s32 %s23, 1
      %s31 = ssub.s32 %s23, %s30
      %p32 = scmp.eq.s32.totalorder %s31, 0
      %s34 = sadd.s32 %s33, 1
      %s35 = scalar_select %p32, %s33, %s34
      %p38 = pneg %p32
      %p39 = scmp.eq.s32.totalorder %s23, 1
      %p40 = por %p38, %p39
      %p41 = scmp.ne.s32.totalorder %s33, %s36
      %p42 = scmp.eq.s32.totalorder %s23, 0
      %p43 = por %p41, %p42
      %p44 = scmp.ne.s32.totalorder %s33, %s36
      %p45 = scmp.eq.s32.totalorder %s28, 1
      %p46 = por %p44, %p45
      %p47 = scmp.ne.s32.totalorder %s36, %s37
      %p48 = scmp.eq.s32.totalorder %s28, 0
      %p49 = por %p47, %p48
      %p50 = scmp.ne.s32.totalorder %s36, %s37
      %p51 = scmp.eq.s32.totalorder %s29, 1
      %p52 = por %p50, %p51
      %p54 = scmp.ne.s32.totalorder %s37, %s53
      %p55 = scmp.eq.s32.totalorder %s29, 0
      %p56 = por %p54, %p55
      %s58 = sadd.s32 %s57, 1
      %p61 = scmp.eq.s32.totalorder %s23, 1
      %p62 = scmp.ne.s32.totalorder %s57, %s59
      %p63 = scmp.eq.s32.totalorder %s23, 0
      %p64 = por %p62, %p63
      %p65 = scmp.ne.s32.totalorder %s57, %s59
      %p66 = scmp.eq.s32.totalorder %s28, 1
      %p67 = por %p65, %p66
      %p68 = scmp.ne.s32.totalorder %s59, %s60
      %p69 = scmp.eq.s32.totalorder %s28, 0
      %p70 = por %p68, %p69
      %p71 = scmp.ne.s32.totalorder %s59, %s60
      %p72 = scmp.eq.s32.totalorder %s29, 1
      %p73 = por %p71, %p72
      %p75 = scmp.ne.s32.totalorder %s60, %s74
      %p76 = scmp.eq.s32.totalorder %s29, 0
      %p77 = por %p75, %p76
      %s79 = sadd.s32 %s78, 1
      %p82 = scmp.eq.s32.totalorder %s23, 1
      %p83 = scmp.ne.s32.totalorder %s78, %s80
      %p84 = scmp.eq.s32.totalorder %s23, 0
      %p85 = por %p83, %p84
      %p86 = scmp.ne.s32.totalorder %s78, %s80
      %p87 = scmp.eq.s32.totalorder %s28, 1
      %p88 = por %p86, %p87
      %p89 = scmp.ne.s32.totalorder %s80, %s81
      %p90 = scmp.eq.s32.totalorder %s28, 0
      %p91 = por %p89, %p90
      %p92 = scmp.ne.s32.totalorder %s80, %s81
      %p93 = scmp.eq.s32.totalorder %s29, 1
      %p94 = por %p92, %p93
      %p96 = scmp.ne.s32.totalorder %s81, %s95
      %p97 = scmp.eq.s32.totalorder %s29, 0
      %p98 = por %p96, %p97
      %s100 = sadd.s32 %s99, 1
      %p103 = scmp.eq.s32.totalorder %s23, 1
      %p104 = scmp.ne.s32.totalorder %s99, %s101
      %p105 = scmp.eq.s32.totalorder %s23, 0
      %p106 = por %p104, %p105
      %p107 = scmp.ne.s32.totalorder %s99, %s101
      %p108 = scmp.eq.s32.totalorder %s28, 1
      %p109 = por %p107, %p108
      %p110 = scmp.ne.s32.totalorder %s101, %s102
      %p111 = scmp.eq.s32.totalorder %s28, 0
      %p112 = por %p110, %p111
      %p113 = scmp.ne.s32.totalorder %s101, %s102
      %p114 = scmp.eq.s32.totalorder %s29, 1
      %p115 = por %p113, %p114
      %p117 = scmp.ne.s32.totalorder %s102, %s116
      %p118 = scmp.eq.s32.totalorder %s29, 0
      %p119 = por %p117, %p118
      %s121 = sadd.s32 %s120, 1
      %p124 = scmp.eq.s32.totalorder %s23, 1
      %p125 = scmp.ne.s32.totalorder %s120, %s122
      %p126 = scmp.eq.s32.totalorder %s23, 0
      %p127 = por %p125, %p126
      %p128 = scmp.ne.s32.totalorder %s120, %s122
      %p129 = scmp.eq.s32.totalorder %s28, 1
      %p130 = por %p128, %p129
      %p131 = scmp.ne.s32.totalorder %s122, %s123
      %p132 = scmp.eq.s32.totalorder %s28, 0
      %p133 = por %p131, %p132
      %p134 = scmp.ne.s32.totalorder %s122, %s123
      %p135 = scmp.eq.s32.totalorder %s29, 1
      %p136 = por %p134, %p135
      %p138 = scmp.ne.s32.totalorder %s123, %s137
      %p139 = scmp.eq.s32.totalorder %s29, 0
      %p140 = por %p138, %p139
      %s142 = sadd.s32 %s141, 1
      %p145 = scmp.eq.s32.totalorder %s23, 1
      %p146 = scmp.ne.s32.totalorder %s141, %s143
      %p147 = scmp.eq.s32.totalorder %s23, 0
      %p148 = por %p146, %p147
      %p149 = scmp.ne.s32.totalorder %s141, %s143
      %p150 = scmp.eq.s32.totalorder %s28, 1
      %p151 = por %p149, %p150
      %p152 = scmp.ne.s32.totalorder %s143, %s144
      %p153 = scmp.eq.s32.totalorder %s28, 0
      %p154 = por %p152, %p153
      %p155 = scmp.ne.s32.totalorder %s143, %s144
      %p156 = scmp.eq.s32.totalorder %s29, 1
      %p157 = por %p155, %p156
      %p159 = scmp.ne.s32.totalorder %s144, %s158
      %p160 = scmp.eq.s32.totalorder %s29, 0
      %p161 = por %p159, %p160
      %s163 = sadd.s32 %s162, 1
      %p166 = scmp.eq.s32.totalorder %s23, 1
      %p167 = scmp.ne.s32.totalorder %s162, %s164
      %p168 = scmp.eq.s32.totalorder %s23, 0
      %p169 = por %p167, %p168
      %p170 = scmp.ne.s32.totalorder %s162, %s164
      %p171 = scmp.eq.s32.totalorder %s28, 1
      %p172 = por %p170, %p171
      %p173 = scmp.ne.s32.totalorder %s164, %s165
      %p174 = scmp.eq.s32.totalorder %s28, 0
      %p175 = por %p173, %p174
      %p176 = scmp.ne.s32.totalorder %s164, %s165
      %p177 = scmp.eq.s32.totalorder %s29, 1
      %p178 = por %p176, %p177
      %p180 = scmp.ne.s32.totalorder %s165, %s179
      %p181 = scmp.eq.s32.totalorder %s29, 0
      %p182 = por %p180, %p181
      %s184 = sadd.s32 %s183, 1
      %p187 = scmp.eq.s32.totalorder %s23, 1
      %p188 = scmp.ne.s32.totalorder %s183, %s185
      %p189 = scmp.eq.s32.totalorder %s23, 0
      %p190 = por %p188, %p189
      %p191 = scmp.ne.s32.totalorder %s183, %s185
      %p192 = scmp.eq.s32.totalorder %s28, 1
      %p193 = por %p191, %p192
      %p194 = scmp.ne.s32.totalorder %s185, %s186
      %p195 = scmp.eq.s32.totalorder %s28, 0
      %p196 = por %p194, %p195
      %p197 = scmp.ne.s32.totalorder %s185, %s186
      %p198 = scmp.eq.s32.totalorder %s29, 1
      %p199 = por %p197, %p198
      %p201 = scmp.ne.s32.totalorder %s186, %s200
      %p202 = scmp.eq.s32.totalorder %s29, 0
      %p203 = por %p201, %p202
      %s205 = sadd.s32 %s204, 1
      %p208 = scmp.eq.s32.totalorder %s23, 1
      %p209 = scmp.ne.s32.totalorder %s204, %s206
      %p210 = scmp.eq.s32.totalorder %s23, 0
      %p211 = por %p209, %p210
      %p212 = scmp.ne.s32.totalorder %s204, %s206
      %p213 = scmp.eq.s32.totalorder %s28, 1
      %p214 = por %p212, %p213
      %p215 = scmp.ne.s32.totalorder %s206, %s207
      %p216 = scmp.eq.s32.totalorder %s28, 0
      %p217 = por %p215, %p216
      %p218 = scmp.ne.s32.totalorder %s206, %s207
      %p219 = scmp.eq.s32.totalorder %s29, 1
      %p220 = por %p218, %p219
      %p222 = scmp.ne.s32.totalorder %s207, %s221
      %p223 = scmp.eq.s32.totalorder %s29, 0
      %p224 = por %p222, %p223
      %s226 = sadd.s32 %s225, 1
      %p229 = scmp.eq.s32.totalorder %s23, 1
      %p230 = scmp.ne.s32.totalorder %s225, %s227
      %p231 = scmp.eq.s32.totalorder %s23, 0
      %p232 = por %p230, %p231
      %p233 = scmp.ne.s32.totalorder %s225, %s227
      %p234 = scmp.eq.s32.totalorder %s28, 1
      %p235 = por %p233, %p234
      %p236 = scmp.ne.s32.totalorder %s227, %s228
      %p237 = scmp.eq.s32.totalorder %s28, 0
      %p238 = por %p236, %p237
      %p239 = scmp.ne.s32.totalorder %s227, %s228
      %p240 = scmp.eq.s32.totalorder %s29, 1
      %p241 = por %p239, %p240
      %p243 = scmp.ne.s32.totalorder %s228, %s242
      %p244 = scmp.eq.s32.totalorder %s29, 0
      %p245 = por %p243, %p244
      %s247 = sadd.s32 %s246, 1
      %p250 = scmp.eq.s32.totalorder %s23, 1
      %p251 = scmp.ne.s32.totalorder %s246, %s248
      %p252 = scmp.eq.s32.totalorder %s23, 0
      %p253 = por %p251, %p252
      %p254 = scmp.ne.s32.totalorder %s246, %s248
      %p255 = scmp.eq.s32.totalorder %s28, 1
      %p256 = por %p254, %p255
      %p257 = scmp.ne.s32.totalorder %s248, %s249
      %p258 = scmp.eq.s32.totalorder %s28, 0
      %p259 = por %p257, %p258
      %p260 = scmp.ne.s32.totalorder %s248, %s249
      %p261 = scmp.eq.s32.totalorder %s29, 1
      %p262 = por %p260, %p261
      %p264 = scmp.ne.s32.totalorder %s249, %s263
      %p265 = scmp.eq.s32.totalorder %s29, 0
      %p266 = por %p264, %p265
      %s268 = sadd.s32 %s267, 1
      %p271 = scmp.eq.s32.totalorder %s23, 1
      %p272 = scmp.ne.s32.totalorder %s267, %s269
      %p273 = scmp.eq.s32.totalorder %s23, 0
      %p274 = por %p272, %p273
      %p275 = scmp.ne.s32.totalorder %s267, %s269
      %p276 = scmp.eq.s32.totalorder %s28, 1
      %p277 = por %p275, %p276
      %p278 = scmp.ne.s32.totalorder %s269, %s270
      %p279 = scmp.eq.s32.totalorder %s28, 0
      %p280 = por %p278, %p279
      %p281 = scmp.ne.s32.totalorder %s269, %s270
      %p282 = scmp.eq.s32.totalorder %s29, 1
      %p283 = por %p281, %p282
      %p285 = scmp.ne.s32.totalorder %s270, %s284
      %p286 = scmp.eq.s32.totalorder %s29, 0
      %p287 = por %p285, %p286
      %s289 = sadd.s32 %s288, 1
      %p292 = scmp.eq.s32.totalorder %s23, 1
      %p293 = scmp.ne.s32.totalorder %s288, %s290
      %p294 = scmp.eq.s32.totalorder %s23, 0
      %p295 = por %p293, %p294
      %p296 = scmp.ne.s32.totalorder %s288, %s290
      %p297 = scmp.eq.s32.totalorder %s28, 1
      %p298 = por %p296, %p297
      %p299 = scmp.ne.s32.totalorder %s290, %s291
      %p300 = scmp.eq.s32.totalorder %s28, 0
      %p301 = por %p299, %p300
      %p302 = scmp.ne.s32.totalorder %s290, %s291
      %p303 = scmp.eq.s32.totalorder %s29, 1
      %p304 = por %p302, %p303
      %p306 = scmp.ne.s32.totalorder %s291, %s305
      %p307 = scmp.eq.s32.totalorder %s29, 0
      %p308 = por %p306, %p307
      %s310 = sadd.s32 %s309, 1
      %p313 = scmp.eq.s32.totalorder %s23, 1
      %p314 = scmp.ne.s32.totalorder %s309, %s311
      %p315 = scmp.eq.s32.totalorder %s23, 0
      %p316 = por %p314, %p315
      %p317 = scmp.ne.s32.totalorder %s309, %s311
      %p318 = scmp.eq.s32.totalorder %s28, 1
      %p319 = por %p317, %p318
      %p320 = scmp.ne.s32.totalorder %s311, %s312
      %p321 = scmp.eq.s32.totalorder %s28, 0
      %p322 = por %p320, %p321
      %p323 = scmp.ne.s32.totalorder %s311, %s312
      %p324 = scmp.eq.s32.totalorder %s29, 1
      %p325 = por %p323, %p324
      %p327 = scmp.ne.s32.totalorder %s312, %s326
      %p328 = scmp.eq.s32.totalorder %s29, 0
      %p329 = por %p327, %p328
      %s330 = ssub.s32 %s23, %s30
      %p331 = scmp.eq.s32.totalorder %s330, 0
      %s333 = sadd.s32 %s332, 1
      %s334 = scalar_select %p331, %s332, %s333
      %p337 = pneg %p331
      %p338 = scmp.eq.s32.totalorder %s23, 1
      %p339 = por %p337, %p338
      %p340 = scmp.ne.s32.totalorder %s332, %s335
      %p341 = scmp.eq.s32.totalorder %s23, 0
      %p342 = por %p340, %p341
      %p343 = scmp.ne.s32.totalorder %s332, %s335
      %p344 = scmp.eq.s32.totalorder %s28, 1
      %p345 = por %p343, %p344
      %p346 = scmp.ne.s32.totalorder %s335, %s336
      %p347 = scmp.eq.s32.totalorder %s28, 0
      %p348 = por %p346, %p347
      %p349 = scmp.ne.s32.totalorder %s335, %s336
      %p350 = scmp.eq.s32.totalorder %s29, 1
      %p351 = por %p349, %p350
      %p353 = scmp.ne.s32.totalorder %s336, %s352
      %p354 = scmp.eq.s32.totalorder %s29, 0
      %p355 = por %p353, %p354
      %p356 = scmp.le.s32.totalorder 1, %s23
      %p357 = scmp.lt.s32.totalorder %s23, 3
      %p358 = pnand %p356, %p357
      %p359 = pneg %p358
      // Predicated region
      $region9: #{lact_block_forward.1} parent=5 // pred_check
        _
      $region10: #{lact_block_forward.1} parent=5 // pred_check_branch
        %361 = sbr.rel (%p358) target = $region12
      $region11: #{lact_block_forward.1} parent=5 // pred_region
        %s362 = ssub.s32 %s23, 1
        // Predicated region
        $region13: #{lact_block_forward.1} parent=11 // pred_check
          %p363 = pneg %p70
        $region14: #{lact_block_forward.1} parent=11 // pred_check_branch
          %365 = sbr.rel (%p363) target = $region16
        $region15: #{lact_block_forward.1} parent=11 // pred_region
          _
        $region16: #{lact_block_forward.1} parent=11 // pred_fallthru
          _
        // Predicated region
        $region17: #{lact_block_forward.1} parent=11 // pred_check
          %p366 = pneg %p91
        $region18: #{lact_block_forward.1} parent=11 // pred_check_branch
          %368 = sbr.rel (%p366) target = $region20
        $region19: #{lact_block_forward.1} parent=11 // pred_region
          _
        $region20: #{lact_block_forward.1} parent=11 // pred_fallthru
          _
        // Predicated region
        $region21: #{lact_block_forward.1} parent=11 // pred_check
          %p369 = pneg %p112
        $region22: #{lact_block_forward.1} parent=11 // pred_check_branch
          %371 = sbr.rel (%p369) target = $region24
        $region23: #{lact_block_forward.1} parent=11 // pred_region
          _
        $region24: #{lact_block_forward.1} parent=11 // pred_fallthru
          _
        // Predicated region
        $region25: #{lact_block_forward.1} parent=11 // pred_check
          %p372 = pneg %p133
        $region26: #{lact_block_forward.1} parent=11 // pred_check_branch
          %374 = sbr.rel (%p372) target = $region28
        $region27: #{lact_block_forward.1} parent=11 // pred_region
          _
        $region28: #{lact_block_forward.1} parent=11 // pred_fallthru
          _
        // Predicated region
        $region29: #{lact_block_forward.1} parent=11 // pred_check
          %p375 = pneg %p154
        $region30: #{lact_block_forward.1} parent=11 // pred_check_branch
          %377 = sbr.rel (%p375) target = $region32
        $region31: #{lact_block_forward.1} parent=11 // pred_region
          _
        $region32: #{lact_block_forward.1} parent=11 // pred_fallthru
          _
        // Predicated region
        $region33: #{lact_block_forward.1} parent=11 // pred_check
          %p378 = pneg %p175
        $region34: #{lact_block_forward.1} parent=11 // pred_check_branch
          %380 = sbr.rel (%p378) target = $region36
        $region35: #{lact_block_forward.1} parent=11 // pred_region
          _
        $region36: #{lact_block_forward.1} parent=11 // pred_fallthru
          _
        // Predicated region
        $region37: #{lact_block_forward.1} parent=11 // pred_check
          %p381 = pneg %p196
        $region38: #{lact_block_forward.1} parent=11 // pred_check_branch
          %383 = sbr.rel (%p381) target = $region40
        $region39: #{lact_block_forward.1} parent=11 // pred_region
          _
        $region40: #{lact_block_forward.1} parent=11 // pred_fallthru
          _
        // Predicated region
        $region41: #{lact_block_forward.1} parent=11 // pred_check
          %p384 = pneg %p217
        $region42: #{lact_block_forward.1} parent=11 // pred_check_branch
          %386 = sbr.rel (%p384) target = $region44
        $region43: #{lact_block_forward.1} parent=11 // pred_region
          _
        $region44: #{lact_block_forward.1} parent=11 // pred_fallthru
          _
        // Predicated region
        $region45: #{lact_block_forward.1} parent=11 // pred_check
          %p387 = pneg %p238
        $region46: #{lact_block_forward.1} parent=11 // pred_check_branch
          %389 = sbr.rel (%p387) target = $region48
        $region47: #{lact_block_forward.1} parent=11 // pred_region
          _
        $region48: #{lact_block_forward.1} parent=11 // pred_fallthru
          _
        // Predicated region
        $region49: #{lact_block_forward.1} parent=11 // pred_check
          %p390 = pneg %p259
        $region50: #{lact_block_forward.1} parent=11 // pred_check_branch
          %392 = sbr.rel (%p390) target = $region52
        $region51: #{lact_block_forward.1} parent=11 // pred_region
          _
        $region52: #{lact_block_forward.1} parent=11 // pred_fallthru
          _
        // Predicated region
        $region53: #{lact_block_forward.1} parent=11 // pred_check
          %p393 = pneg %p280
        $region54: #{lact_block_forward.1} parent=11 // pred_check_branch
          %395 = sbr.rel (%p393) target = $region56
        $region55: #{lact_block_forward.1} parent=11 // pred_region
          _
        $region56: #{lact_block_forward.1} parent=11 // pred_fallthru
          _
        // Predicated region
        $region57: #{lact_block_forward.1} parent=11 // pred_check
          %p396 = pneg %p301
        $region58: #{lact_block_forward.1} parent=11 // pred_check_branch
          %398 = sbr.rel (%p396) target = $region60
        $region59: #{lact_block_forward.1} parent=11 // pred_region
          _
        $region60: #{lact_block_forward.1} parent=11 // pred_fallthru
          _
        // Predicated region
        $region61: #{lact_block_forward.1} parent=11 // pred_check
          %p399 = pneg %p322
        $region62: #{lact_block_forward.1} parent=11 // pred_check_branch
          %401 = sbr.rel (%p399) target = $region64
        $region63: #{lact_block_forward.1} parent=11 // pred_region
          _
        $region64: #{lact_block_forward.1} parent=11 // pred_fallthru
          _
      $region12: #{lact_block_forward.1} parent=5 // pred_fallthru
        _
      %p402 = scmp.lt.s32.totalorder %s23, 2
      // Predicated region
      $region65: #{lact_block_forward.1} parent=5 // pred_check
        %p403 = pneg %p402
      $region66: #{lact_block_forward.1} parent=5 // pred_check_branch
        %405 = sbr.rel (%p403) target = $region68
      $region67: #{lact_block_forward.1} parent=5 // pred_region
        // Predicated region
        $region69: #{lact_block_forward.1} parent=67 // pred_check
          %p406 = pneg %p43
        $region70: #{lact_block_forward.1} parent=67 // pred_check_branch
          %408 = sbr.rel (%p406) target = $region72
        $region71: #{lact_block_forward.1} parent=67 // pred_region
          %p409 = scmp.lt.s32.totalorder %s23, 1
          %s410 = scalar_select %p409, %s23, 1
          %s411 = smul.addr %s410, 8
          %s412 = smul.addr %s411, 4
          %s413 = scalar_lea.vmem %s0, %s412
        $region72: #{lact_block_forward.1} parent=67 // pred_fallthru
          _
      $region68: #{lact_block_forward.1} parent=5 // pred_fallthru
        _
      %p414 = scmp.le.s32.totalorder 1, %s23
      %p415 = scmp.lt.s32.totalorder %s23, 3
      %p416 = pnand %p414, %p415
      %p417 = pneg %p416
      // Predicated region
      $region73: #{lact_block_forward.1} parent=5 // pred_check
        _
      $region74: #{lact_block_forward.1} parent=5 // pred_check_branch
        %419 = sbr.rel (%p416) target = $region76
      $region75: #{lact_block_forward.1} parent=5 // pred_region
        %s420 = ssub.s32 %s23, 1
        %p421 = scmp.lt.s32.totalorder %s28, 1
        %s422 = scalar_select %p421, %s28, 1
        %s423 = smul.addr %s422, 8
        %s424 = smul.addr %s423, 4
        %s425 = scalar_lea.vmem %s0, %s424
        %p426 = pneg %p49
        %p427 = pneg %p46
        %p428 = pneg %p70
        %p429 = pneg %p67
        %p430 = pneg %p91
        %p431 = pneg %p88
        %p432 = pneg %p112
        %p433 = pneg %p109
        %p434 = pneg %p133
        %p435 = pneg %p130
        %p436 = pneg %p154
        %p437 = pneg %p151
        %p438 = pneg %p175
        %p439 = pneg %p172
        %p440 = pneg %p196
        %p441 = pneg %p193
        %p442 = pneg %p217
        %p443 = pneg %p214
        %p444 = pneg %p238
        %p445 = pneg %p235
        %p446 = pneg %p259
        %p447 = pneg %p256
        %p448 = pneg %p280
        %p449 = pneg %p277
        %p450 = pneg %p301
        %p451 = pneg %p298
        %p452 = pneg %p322
        %p453 = pneg %p319
        %p454 = pneg %p348
        %p455 = pneg %p345
        %s456 = sand.u32 %s335, 1
        %s457 = scalar_lea.sflag [#allocation4], %s456
        %s458 = sand.u32 %s335, 1
        %s459 = smul.addr %s458, 32
        %s460 = scalar_lea.vmem [#allocation3], %s459
        %p461 = scmp.lt.s32.totalorder %s28, 1
        %s462 = scalar_select %p461, %s28, 1
        %s463 = smul.addr %s462, 8
        %s464 = smul.addr %s463, 4
        %s465 = scalar_lea.vmem %s0, %s464
        %v467 = vld [vmem:[%s465] sm:$0xf]
        %v468 = vld [vmem:[%s465 + $0x4] sm:$0xf]
        %v469 = vld [vmem:[%s465 + $0x8] sm:$0xf]
        %v470 = vld [vmem:[%s465 + $0xc] sm:$0xf]
        %v471 = vld [vmem:[%s465 + $0x10] sm:$0xf]
        %v472 = vld [vmem:[%s465 + $0x14] sm:$0xf]
        %v473 = vld [vmem:[%s465 + $0x18] sm:$0xf]
        %v474 = vld [vmem:[%s465 + $0x1c] sm:$0xf]
        %v475 = vunpack.c.l.bf16 %v467
        %v476 = vunpack.c.l.bf16 %v468
        %v477 = vunpack.c.l.bf16 %v469
        %v478 = vunpack.c.l.bf16 %v470
        %v479 = vunpack.c.l.bf16 %v471
        %v480 = vunpack.c.l.bf16 %v472
        %v481 = vunpack.c.l.bf16 %v473
        %v482 = vunpack.c.l.bf16 %v474
        %v483 = vmul.f32 %v475, %v475
        %v484 = vmul.f32 %v476, %v476
        %v485 = vmul.f32 %v477, %v477
        %v486 = vmul.f32 %v478, %v478
        %v487 = vmul.f32 %v479, %v479
        %v488 = vmul.f32 %v480, %v480
        %v489 = vmul.f32 %v481, %v481
        %v490 = vmul.f32 %v482, %v482
        %vm491 = vcmask 523264
        %v492 = vsel %vm491, %v483, 0.0
        %493 = vadd.xlane.f32.xlu0 %v492
        %v494 = vpop.xlane.xlu0 %493
        %v495 = vsel %vm491, %v484, 0.0
        %496 = vadd.xlane.f32.xlu0 %v495
        %v497 = vpop.xlane.xlu0 %496
        %v498 = vsel %vm491, %v485, 0.0
        %499 = vadd.xlane.f32.xlu0 %v498
        %v500 = vpop.xlane.xlu0 %499
        %v501 = vsel %vm491, %v486, 0.0
        %502 = vadd.xlane.f32.xlu0 %v501
        %v503 = vpop.xlane.xlu0 %502
        %v504 = vsel %vm491, %v487, 0.0
        %505 = vadd.xlane.f32.xlu0 %v504
        %v506 = vpop.xlane.xlu0 %505
        %v507 = vsel %vm491, %v488, 0.0
        %508 = vadd.xlane.f32.xlu0 %v507
        %v509 = vpop.xlane.xlu0 %508
        %v510 = vsel %vm491, %v489, 0.0
        %511 = vadd.xlane.f32.xlu0 %v510
        %v512 = vpop.xlane.xlu0 %511
        %v513 = vsel %vm491, %v490, 0.0
        %514 = vadd.xlane.f32.xlu0 %v513
        %v515 = vpop.xlane.xlu0 %514
        %v516 = vrcp.pop 64.0
        %v517 = vmul.f32 64.0, %v516
        %v518 = vsub.f32 1.0, %v517
        %v519 = vmul.f32 %v516, %v518
        %v520 = vadd.f32 %v516, %v519
        %vm521 = vweird.f32 %v516
        %v522 = vsel %vm521, %v516, %v520
        %v523 = vmul.f32 %v494, %v522
        %v524 = vmul.f32 %v497, %v522
        %v525 = vmul.f32 %v500, %v522
        %v526 = vmul.f32 %v503, %v522
        %v527 = vmul.f32 %v506, %v522
        %v528 = vmul.f32 %v509, %v522
        %v529 = vmul.f32 %v512, %v522
        %v530 = vmul.f32 %v515, %v522
        %v531 = vadd.f32 %v523, 1e-06
        %v532 = vadd.f32 %v524, 1e-06
        %v533 = vadd.f32 %v525, 1e-06
        %v534 = vadd.f32 %v526, 1e-06
        %v535 = vadd.f32 %v527, 1e-06
        %v536 = vadd.f32 %v528, 1e-06
        %v537 = vadd.f32 %v529, 1e-06
        %v538 = vadd.f32 %v530, 1e-06
        %v539 = vrsqrt.pop %v531
        %v540 = vmul.f32 %v539, %v531
        %v541 = vmul.f32 %v540, %v539
        %v542 = vmul.f32 0.5, %v541
        %v543 = vsub.f32 1.5, %v542
        %v544 = vmul.f32 %v539, %v543
        %vm545 = vweird.f32 %v531
        %vm546 = vweird.f32 %v539
        %vm547 = vmor %vm545, %vm546
        %v548 = vsel %vm547, %v539, %v544
        %v549 = vrsqrt.pop %v532
        %v550 = vmul.f32 %v549, %v532
        %v551 = vmul.f32 %v550, %v549
        %v552 = vmul.f32 0.5, %v551
        %v553 = vsub.f32 1.5, %v552
        %v554 = vmul.f32 %v549, %v553
        %vm555 = vweird.f32 %v532
        %vm556 = vweird.f32 %v549
        %vm557 = vmor %vm555, %vm556
        %v558 = vsel %vm557, %v549, %v554
        %v559 = vrsqrt.pop %v533
        %v560 = vmul.f32 %v559, %v533
        %v561 = vmul.f32 %v560, %v559
        %v562 = vmul.f32 0.5, %v561
        %v563 = vsub.f32 1.5, %v562
        %v564 = vmul.f32 %v559, %v563
        %vm565 = vweird.f32 %v533
        %vm566 = vweird.f32 %v559
        %vm567 = vmor %vm565, %vm566
        %v568 = vsel %vm567, %v559, %v564
        %v569 = vrsqrt.pop %v534
        %v570 = vmul.f32 %v569, %v534
        %v571 = vmul.f32 %v570, %v569
        %v572 = vmul.f32 0.5, %v571
        %v573 = vsub.f32 1.5, %v572
        %v574 = vmul.f32 %v569, %v573
        %vm575 = vweird.f32 %v534
        %vm576 = vweird.f32 %v569
        %vm577 = vmor %vm575, %vm576
        %v578 = vsel %vm577, %v569, %v574
        %v579 = vrsqrt.pop %v535
        %v580 = vmul.f32 %v579, %v535
        %v581 = vmul.f32 %v580, %v579
        %v582 = vmul.f32 0.5, %v581
        %v583 = vsub.f32 1.5, %v582
        %v584 = vmul.f32 %v579, %v583
        %vm585 = vweird.f32 %v535
        %vm586 = vweird.f32 %v579
        %vm587 = vmor %vm585, %vm586
        %v588 = vsel %vm587, %v579, %v584
        %v589 = vrsqrt.pop %v536
        %v590 = vmul.f32 %v589, %v536
        %v591 = vmul.f32 %v590, %v589
        %v592 = vmul.f32 0.5, %v591
        %v593 = vsub.f32 1.5, %v592
        %v594 = vmul.f32 %v589, %v593
        %vm595 = vweird.f32 %v536
        %vm596 = vweird.f32 %v589
        %vm597 = vmor %vm595, %vm596
        %v598 = vsel %vm597, %v589, %v594
        %v599 = vrsqrt.pop %v537
        %v600 = vmul.f32 %v599, %v537
        %v601 = vmul.f32 %v600, %v599
        %v602 = vmul.f32 0.5, %v601
        %v603 = vsub.f32 1.5, %v602
        %v604 = vmul.f32 %v599, %v603
        %vm605 = vweird.f32 %v537
        %vm606 = vweird.f32 %v599
        %vm607 = vmor %vm605, %vm606
        %v608 = vsel %vm607, %v599, %v604
        %v609 = vrsqrt.pop %v538
        %v610 = vmul.f32 %v609, %v538
        %v611 = vmul.f32 %v610, %v609
        %v612 = vmul.f32 0.5, %v611
        %v613 = vsub.f32 1.5, %v612
        %v614 = vmul.f32 %v609, %v613
        %vm615 = vweird.f32 %v538
        %vm616 = vweird.f32 %v609
        %vm617 = vmor %vm615, %vm616
        %v618 = vsel %vm617, %v609, %v614
        %v619 = vmul.f32 %v475, %v548
        %v620 = vmul.f32 %v476, %v558
        %v621 = vmul.f32 %v477, %v568
        %v622 = vmul.f32 %v478, %v578
        %v623 = vmul.f32 %v479, %v588
        %v624 = vmul.f32 %v480, %v598
        %v625 = vmul.f32 %v481, %v608
        %v626 = vmul.f32 %v482, %v618
        %v627 = vld [vmem:[%s1] sm:$0x1]
        %v628 = vunpack.c.l.bf16 %v627
        %v629 = vperm.slane %v628, 0
        %v630 = vmul.f32 %v619, %v629
        %v631 = vmul.f32 %v620, %v629
        %v632 = vmul.f32 %v621, %v629
        %v633 = vmul.f32 %v622, %v629
        %v634 = vmul.f32 %v623, %v629
        %v635 = vmul.f32 %v624, %v629
        %v636 = vmul.f32 %v625, %v629
        %v637 = vmul.f32 %v626, %v629
        %v638 = vpack.c.bf16 %v631, %v630
        %v639 = vpack.c.bf16 %v633, %v632
        %v640 = vpack.c.bf16 %v635, %v634
        %v641 = vpack.c.bf16 %v637, %v636
        %v642 = vld [vmem:[%s2] sm:$0xff]
        %v643 = vld [vmem:[%s2 + $0x8] sm:$0xff]
        %v644 = vld [vmem:[%s2 + $0x10] sm:$0xff]
        %v645 = vld [vmem:[%s2 + $0x18] sm:$0xff]
        %v646 = vld [vmem:[%s2 + $0x20] sm:$0xff]
        %v647 = vld [vmem:[%s2 + $0x28] sm:$0xff]
        %v648 = vld [vmem:[%s2 + $0x30] sm:$0xff]
        %v649 = vld [vmem:[%s2 + $0x38] sm:$0xff]
        %v658 = vunpack.c.l.b16 %v642
        %v659 = vunpack.c.h.b16 %v642
        %v660 = vunpack.c.l.b16 %v643
        %v661 = vunpack.c.h.b16 %v643
        %v662 = vunpack.c.l.b16 %v644
        %v663 = vunpack.c.h.b16 %v644
        %v664 = vunpack.c.l.b16 %v645
        %v665 = vunpack.c.h.b16 %v645
        %v666 = vunpack.c.l.b16 %v646
        %v667 = vunpack.c.h.b16 %v646
        %v668 = vunpack.c.l.b16 %v647
        %v669 = vunpack.c.h.b16 %v647
        %v670 = vunpack.c.l.b16 %v648
        %v671 = vunpack.c.h.b16 %v648
        %v672 = vunpack.c.l.b16 %v649
        %v673 = vunpack.c.h.b16 %v649
        %v674 = vpack.c.b16 %v660, %v658
        %v675 = vpack.c.b16 %v661, %v659
        %v676 = vpack.c.b16 %v664, %v662
        %v677 = vpack.c.b16 %v665, %v663
        %v678 = vpack.c.b16 %v668, %v666
        %v679 = vpack.c.b16 %v669, %v667
        %v680 = vpack.c.b16 %v672, %v670
        %v681 = vpack.c.b16 %v673, %v671
        %v691 = vsel %vm491, %v638, 0
        %v694 = vsel %vm491, %v639, 0
        %v697 = vsel %vm491, %v640, 0
        %v700 = vsel %vm491, %v641, 0
        %702 = vmatpush.bf16.msra.mxu0 0
        %703 = vmatpush.bf16.msra.mxu0 0
        %704 = vmatpush.bf16.msra.mxu0 0
        %705 = vmatpush.bf16.msra.mxu0 0
        %706 = vmatpush.bf16.msra.mxu0 %v680
        %707 = vmatpush.bf16.msra.mxu0 %v678
        %708 = vmatpush.bf16.msra.mxu0 %v676
        %709 = vmatpush.bf16.msra.mxu0 %v674
        %710 = vmatmul.bf16.gmra.mxu0 %v691
        %v711 = vpop.f32.mrf.mxu0
        %v712 = vadd.f32 0.0, %v711
        %v713 = vpop.f32.mrf.mxu0
        %v714 = vadd.f32 0.0, %v713
        %715 = vmatmul.bf16.gmra.mxu0 %v694
        %v716 = vpop.f32.mrf.mxu0
        %v717 = vadd.f32 0.0, %v716
        %v718 = vpop.f32.mrf.mxu0
        %v719 = vadd.f32 0.0, %v718
        %720 = vmatmul.bf16.gmra.mxu0 %v697
        %v721 = vpop.f32.mrf.mxu0
        %v722 = vadd.f32 0.0, %v721
        %v723 = vpop.f32.mrf.mxu0
        %v724 = vadd.f32 0.0, %v723
        %725 = vmatmul.bf16.gmra.mxu0 %v700
        %v726 = vpop.f32.mrf.mxu0
        %v727 = vadd.f32 0.0, %v726
        %v728 = vpop.f32.mrf.mxu0
        %v729 = vadd.f32 0.0, %v728
        %730 = vdwg.mxu0
        %731 = vmatpush.bf16.msra.mxu0 0
        %732 = vmatpush.bf16.msra.mxu0 0
        %733 = vmatpush.bf16.msra.mxu0 0
        %734 = vmatpush.bf16.msra.mxu0 0
        %735 = vmatpush.bf16.msra.mxu0 %v681
        %736 = vmatpush.bf16.msra.mxu0 %v679
        %737 = vmatpush.bf16.msra.mxu0 %v677
        %738 = vmatpush.bf16.msra.mxu0 %v675
        %739 = vmatmul.bf16.gmra.mxu0 %v691
        %v740 = vpop.f32.mrf.mxu0
        %v741 = vadd.f32 0.0, %v740
        %v742 = vpop.f32.mrf.mxu0
        %v743 = vadd.f32 0.0, %v742
        %744 = vmatmul.bf16.gmra.mxu0 %v694
        %v745 = vpop.f32.mrf.mxu0
        %v746 = vadd.f32 0.0, %v745
        %v747 = vpop.f32.mrf.mxu0
        %v748 = vadd.f32 0.0, %v747
        %749 = vmatmul.bf16.gmra.mxu0 %v697
        %v750 = vpop.f32.mrf.mxu0
        %v751 = vadd.f32 0.0, %v750
        %v752 = vpop.f32.mrf.mxu0
        %v753 = vadd.f32 0.0, %v752
        %754 = vmatmul.bf16.gmra.mxu0 %v700
        %v755 = vpop.f32.mrf.mxu0
        %v756 = vadd.f32 0.0, %v755
        %v757 = vpop.f32.mrf.mxu0
        %v758 = vadd.f32 0.0, %v757
        %759 = vdwg.mxu0
        %v760 = vld [vmem:[%s3] sm:$0x1]
        %v762 = vperm.slane %v760, 0
        %763 = vrot.lane.b32.xlu0 %v762, 64
        %v764 = vpop.permute.xlu0 %763
        %v766 = vadd.f32 %v741, %v764
        %v767 = vadd.f32 %v743, %v764
        %v768 = vadd.f32 %v746, %v764
        %v769 = vadd.f32 %v748, %v764
        %v770 = vadd.f32 %v751, %v764
        %v771 = vadd.f32 %v753, %v764
        %v772 = vadd.f32 %v756, %v764
        %v773 = vadd.f32 %v758, %v764
        %v774 = vmax.f32 %v766, 0.0
        %v775 = vmax.f32 %v767, 0.0
        %v776 = vmax.f32 %v768, 0.0
        %v777 = vmax.f32 %v769, 0.0
        %v778 = vmax.f32 %v770, 0.0
        %v779 = vmax.f32 %v771, 0.0
        %v780 = vmax.f32 %v772, 0.0
        %v781 = vmax.f32 %v773, 0.0
        %v782 = vand.u32 2147483647, %v766
        %v783 = vand.u32 2147483647, %v767
        %v784 = vand.u32 2147483647, %v768
        %v785 = vand.u32 2147483647, %v769
        %v786 = vand.u32 2147483647, %v770
        %v787 = vand.u32 2147483647, %v771
        %v788 = vand.u32 2147483647, %v772
        %v789 = vand.u32 2147483647, %v773
        %v790 = vsub.f32 0.0, %v782
        %v791 = vsub.f32 0.0, %v783
        %v792 = vsub.f32 0.0, %v784
        %v793 = vsub.f32 0.0, %v785
        %v794 = vsub.f32 0.0, %v786
        %v795 = vsub.f32 0.0, %v787
        %v796 = vsub.f32 0.0, %v788
        %v797 = vsub.f32 0.0, %v789
        %v798 = vmul.f32 %v790, 1.442695
        %v799 = vpow.pop %v798
        %v800 = vmul.f32 %v791, 1.442695
        %v801 = vpow.pop %v800
        %v802 = vmul.f32 %v792, 1.442695
        %v803 = vpow.pop %v802
        %v804 = vmul.f32 %v793, 1.442695
        %v805 = vpow.pop %v804
        %v806 = vmul.f32 %v794, 1.442695
        %v807 = vpow.pop %v806
        %v808 = vmul.f32 %v795, 1.442695
        %v809 = vpow.pop %v808
        %v810 = vmul.f32 %v796, 1.442695
        %v811 = vpow.pop %v810
        %v812 = vmul.f32 %v797, 1.442695
        %v813 = vpow.pop %v812
        %v814 = vadd.f32 %v799, 1.0
        %v815 = vadd.f32 %v801, 1.0
        %v816 = vadd.f32 %v803, 1.0
        %v817 = vadd.f32 %v805, 1.0
        %v818 = vadd.f32 %v807, 1.0
        %v819 = vadd.f32 %v809, 1.0
        %v820 = vadd.f32 %v811, 1.0
        %v821 = vadd.f32 %v813, 1.0
        %v822 = vlog2.pop %v814
        %v823 = vmul.f32 %v822, 0.6931472
        %v824 = vlog2.pop %v815
        %v825 = vmul.f32 %v824, 0.6931472
        %v826 = vlog2.pop %v816
        %v827 = vmul.f32 %v826, 0.6931472
        %v828 = vlog2.pop %v817
        %v829 = vmul.f32 %v828, 0.6931472
        %v830 = vlog2.pop %v818
        %v831 = vmul.f32 %v830, 0.6931472
        %v832 = vlog2.pop %v819
        %v833 = vmul.f32 %v832, 0.6931472
        %v834 = vlog2.pop %v820
        %v835 = vmul.f32 %v834, 0.6931472
        %v836 = vlog2.pop %v821
        %v837 = vmul.f32 %v836, 0.6931472
        %v838 = vadd.f32 %v774, %v823
        %v839 = vadd.f32 %v775, %v825
        %v840 = vadd.f32 %v776, %v827
        %v841 = vadd.f32 %v777, %v829
        %v842 = vadd.f32 %v778, %v831
        %v843 = vadd.f32 %v779, %v833
        %v844 = vadd.f32 %v780, %v835
        %v845 = vadd.f32 %v781, %v837
        %v846 = vmul.f32 %v838, 0.01
        %v847 = vmul.f32 %v839, 0.01
        %v848 = vmul.f32 %v840, 0.01
        %v849 = vmul.f32 %v841, 0.01
        %v850 = vmul.f32 %v842, 0.01
        %v851 = vmul.f32 %v843, 0.01
        %v852 = vmul.f32 %v844, 0.01
        %v853 = vmul.f32 %v845, 0.01
        %v854 = vpack.c.bf16 %v741, %v741
        %v855 = vpack.c.bf16 %v743, %v743
        %v856 = vpack.c.bf16 %v746, %v746
        %v857 = vpack.c.bf16 %v748, %v748
        %v858 = vpack.c.bf16 %v751, %v751
        %v859 = vpack.c.bf16 %v753, %v753
        %v860 = vpack.c.bf16 %v756, %v756
        %v861 = vpack.c.bf16 %v758, %v758
        %v862 = vld [vmem:[%s4] sm:$0xff]
        %v863 = vld [vmem:[%s4 + $0x8] sm:$0xff]
        %v864 = vld [vmem:[%s4 + $0x10] sm:$0xff]
        %v865 = vld [vmem:[%s4 + $0x18] sm:$0xff]
        %v866 = vld [vmem:[%s4 + $0x20] sm:$0xff]
        %v867 = vld [vmem:[%s4 + $0x28] sm:$0xff]
        %v868 = vld [vmem:[%s4 + $0x30] sm:$0xff]
        %v869 = vld [vmem:[%s4 + $0x38] sm:$0xff]
        %v870 = vld [vmem:[%s5] sm:$0xff]
        %v871 = vld [vmem:[%s5 + $0x8] sm:$0xff]
        %v872 = vld [vmem:[%s5 + $0x10] sm:$0xff]
        %v873 = vld [vmem:[%s5 + $0x18] sm:$0xff]
        %v874 = vld [vmem:[%s5 + $0x20] sm:$0xff]
        %v875 = vld [vmem:[%s5 + $0x28] sm:$0xff]
        %v876 = vld [vmem:[%s5 + $0x30] sm:$0xff]
        %v877 = vld [vmem:[%s5 + $0x38] sm:$0xff]
        %v878 = vlaneseq
        %v879 = vshrl.u32 %v878, 7
        %v880 = vadd.s32 %v879, 8
        %v881 = vadd.s32 %v879, 16
        %v882 = vadd.s32 %v879, 24
        %v883 = vadd.s32 %v879, 32
        %v884 = vadd.s32 %v879, 40
        %v885 = vadd.s32 %v879, 48
        %v886 = vadd.s32 %v879, 56
        %v887 = vlaneseq
        %v888 = vand.u32 %v887, 127
        %vm889 = vcmp.le.s32.totalorder %v888, %v879
        %vm890 = vcmp.le.s32.totalorder %v888, %v880
        %vm891 = vcmp.le.s32.totalorder %v888, %v881
        %vm892 = vcmp.le.s32.totalorder %v888, %v882
        %vm893 = vcmp.le.s32.totalorder %v888, %v883
        %vm894 = vcmp.le.s32.totalorder %v888, %v884
        %vm895 = vcmp.le.s32.totalorder %v888, %v885
        %vm896 = vcmp.le.s32.totalorder %v888, %v886
        %v897 = vsub.s32 %v879, 32
        %v898 = vsub.s32 %v880, 32
        %v899 = vsub.s32 %v881, 32
        %v900 = vsub.s32 %v882, 32
        %v901 = vsub.s32 %v884, 32
        %v902 = vsub.s32 %v885, 32
        %v903 = vsub.s32 %v886, 32
        %vm904 = vcmp.gt.s32.totalorder %v888, %v897
        %vm905 = vcmp.gt.s32.totalorder %v888, %v898
        %vm906 = vcmp.gt.s32.totalorder %v888, %v899
        %vm907 = vcmp.gt.s32.totalorder %v888, %v900
        %vm908 = vcmp.gt.s32.totalorder %v888, %v879
        %vm909 = vcmp.gt.s32.totalorder %v888, %v901
        %vm910 = vcmp.gt.s32.totalorder %v888, %v902
        %vm911 = vcmp.gt.s32.totalorder %v888, %v903
        %vm912 = vmand %vm889, %vm904
        %vm913 = vmand %vm890, %vm905
        %vm914 = vmand %vm891, %vm906
        %vm915 = vmand %vm892, %vm907
        %vm916 = vmand %vm893, %vm908
        %vm917 = vmand %vm894, %vm909
        %vm918 = vmand %vm895, %vm910
        %vm919 = vmand %vm896, %vm911
        %v920 = vld [vmem:[%s6] sm:$0xf]
        %v921 = vld [vmem:[%s6 + $0x4] sm:$0xf]
        %v922 = vld [vmem:[%s6 + $0x8] sm:$0xf]
        %v923 = vld [vmem:[%s6 + $0xc] sm:$0xf]
        %v924 = vld [vmem:[%s6 + $0x10] sm:$0xf]
        %v925 = vld [vmem:[%s6 + $0x14] sm:$0xf]
        %v926 = vld [vmem:[%s6 + $0x18] sm:$0xf]
        %v927 = vld [vmem:[%s6 + $0x1c] sm:$0xf]
        %v928 = vunpack.c.l.bf16 %v920
        %v929 = vunpack.c.l.bf16 %v921
        %v930 = vunpack.c.l.bf16 %v922
        %v931 = vunpack.c.l.bf16 %v923
        %v932 = vunpack.c.l.bf16 %v924
        %v933 = vunpack.c.l.bf16 %v925
        %v934 = vunpack.c.l.bf16 %v926
        %v935 = vunpack.c.l.bf16 %v927
        %v936 = vld [vmem:[%s7] sm:$0xf]
        %v937 = vld [vmem:[%s7 + $0x4] sm:$0xf]
        %v938 = vld [vmem:[%s7 + $0x8] sm:$0xf]
        %v939 = vld [vmem:[%s7 + $0xc] sm:$0xf]
        %v940 = vld [vmem:[%s7 + $0x10] sm:$0xf]
        %v941 = vld [vmem:[%s7 + $0x14] sm:$0xf]
        %v942 = vld [vmem:[%s7 + $0x18] sm:$0xf]
        %v943 = vld [vmem:[%s7 + $0x1c] sm:$0xf]
        %v944 = vunpack.c.l.bf16 %v936
        %v945 = vunpack.c.l.bf16 %v937
        %v946 = vunpack.c.l.bf16 %v938
        %v947 = vunpack.c.l.bf16 %v939
        %v948 = vunpack.c.l.bf16 %v940
        %v949 = vunpack.c.l.bf16 %v941
        %v950 = vunpack.c.l.bf16 %v942
        %v951 = vunpack.c.l.bf16 %v943
        %v952 = vld [vmem:[%s8] sm:$0x1]
        %v953 = vunpack.c.l.bf16 %v952
        %v954 = vld [vmem:[%s9] sm:$0x1]
        %v955 = vunpack.c.l.bf16 %v954
        %v956 = vmul.f32 %v953, %v955
        %965 = vrot.lane.b32.xlu0 %v712, 112
        %v966 = vpop.permute.xlu0 %965
        %967 = vrot.lane.b32.xlu0 %v714, 112
        %v968 = vpop.permute.xlu0 %967
        %969 = vrot.lane.b32.xlu0 %v717, 112
        %v970 = vpop.permute.xlu0 %969
        %971 = vrot.lane.b32.xlu0 %v719, 112
        %v972 = vpop.permute.xlu0 %971
        %973 = vrot.lane.b32.xlu0 %v722, 112
        %v974 = vpop.permute.xlu0 %973
        %975 = vrot.lane.b32.xlu0 %v724, 112
        %v976 = vpop.permute.xlu0 %975
        %977 = vrot.lane.b32.xlu0 %v727, 112
        %v978 = vpop.permute.xlu0 %977
        %979 = vrot.lane.b32.xlu0 %v729, 112
        %v980 = vpop.permute.xlu0 %979
        %989 = vrot.lane.b32.xlu0 %v712, 16
        %v990 = vpop.permute.xlu0 %989
        %991 = vrot.lane.b32.xlu0 %v714, 16
        %v992 = vpop.permute.xlu0 %991
        %993 = vrot.lane.b32.xlu0 %v717, 16
        %v994 = vpop.permute.xlu0 %993
        %995 = vrot.lane.b32.xlu0 %v719, 16
        %v996 = vpop.permute.xlu0 %995
        %997 = vrot.lane.b32.xlu0 %v722, 16
        %v998 = vpop.permute.xlu0 %997
        %999 = vrot.lane.b32.xlu0 %v724, 16
        %v1000 = vpop.permute.xlu0 %999
        %1001 = vrot.lane.b32.xlu0 %v727, 16
        %v1002 = vpop.permute.xlu0 %1001
        %1003 = vrot.lane.b32.xlu0 %v729, 16
        %v1004 = vpop.permute.xlu0 %1003
        %vm1013 = vcmask 130048
        %v1014 = vsel %vm1013, %v966, %v990
        %v1015 = vsel %vm1013, %v968, %v992
        %v1016 = vsel %vm1013, %v970, %v994
        %v1017 = vsel %vm1013, %v972, %v996
        %v1018 = vsel %vm1013, %v974, %v998
        %v1019 = vsel %vm1013, %v976, %v1000
        %v1020 = vsel %vm1013, %v978, %v1002
        %v1021 = vsel %vm1013, %v980, %v1004
        %v1022 = vmul.f32 %v712, %v862
        %v1023 = vmul.f32 %v714, %v863
        %v1024 = vmul.f32 %v717, %v864
        %v1025 = vmul.f32 %v719, %v865
        %v1026 = vmul.f32 %v722, %v866
        %v1027 = vmul.f32 %v724, %v867
        %v1028 = vmul.f32 %v727, %v868
        %v1029 = vmul.f32 %v729, %v869
        %v1030 = vmul.f32 %v1014, %v870
        %v1031 = vmul.f32 %v1015, %v871
        %v1032 = vmul.f32 %v1016, %v872
        %v1033 = vmul.f32 %v1017, %v873
        %v1034 = vmul.f32 %v1018, %v874
        %v1035 = vmul.f32 %v1019, %v875
        %v1036 = vmul.f32 %v1020, %v876
        %v1037 = vmul.f32 %v1021, %v877
        %v1038 = vadd.f32 %v1022, %v1030
        %v1039 = vadd.f32 %v1023, %v1031
        %v1040 = vadd.f32 %v1024, %v1032
        %v1041 = vadd.f32 %v1025, %v1033
        %v1042 = vadd.f32 %v1026, %v1034
        %v1043 = vadd.f32 %v1027, %v1035
        %v1044 = vadd.f32 %v1028, %v1036
        %v1045 = vadd.f32 %v1029, %v1037
        %v1046 = vpack.c.bf16 %v1039, %v1038
        %v1047 = vpack.c.bf16 %v1041, %v1040
        %v1048 = vpack.c.bf16 %v1043, %v1042
        %v1049 = vpack.c.bf16 %v1045, %v1044
        %1050 = vrot.lane.b32.xlu0 %v712, 48
        %v1051 = vpop.permute.xlu0 %1050
        %1052 = vrot.lane.b32.xlu0 %v714, 48
        %v1053 = vpop.permute.xlu0 %1052
        %1054 = vrot.lane.b32.xlu0 %v717, 48
        %v1055 = vpop.permute.xlu0 %1054
        %1056 = vrot.lane.b32.xlu0 %v719, 48
        %v1057 = vpop.permute.xlu0 %1056
        %1058 = vrot.lane.b32.xlu0 %v722, 48
        %v1059 = vpop.permute.xlu0 %1058
        %1060 = vrot.lane.b32.xlu0 %v724, 48
        %v1061 = vpop.permute.xlu0 %1060
        %1062 = vrot.lane.b32.xlu0 %v727, 48
        %v1063 = vpop.permute.xlu0 %1062
        %1064 = vrot.lane.b32.xlu0 %v729, 48
        %v1065 = vpop.permute.xlu0 %1064
        %1074 = vrot.lane.b32.xlu0 %v712, 80
        %v1075 = vpop.permute.xlu0 %1074
        %1076 = vrot.lane.b32.xlu0 %v714, 80
        %v1077 = vpop.permute.xlu0 %1076
        %1078 = vrot.lane.b32.xlu0 %v717, 80
        %v1079 = vpop.permute.xlu0 %1078
        %1080 = vrot.lane.b32.xlu0 %v719, 80
        %v1081 = vpop.permute.xlu0 %1080
        %1082 = vrot.lane.b32.xlu0 %v722, 80
        %v1083 = vpop.permute.xlu0 %1082
        %1084 = vrot.lane.b32.xlu0 %v724, 80
        %v1085 = vpop.permute.xlu0 %1084
        %1086 = vrot.lane.b32.xlu0 %v727, 80
        %v1087 = vpop.permute.xlu0 %1086
        %1088 = vrot.lane.b32.xlu0 %v729, 80
        %v1089 = vpop.permute.xlu0 %1088
        %v1098 = vsel %vm1013, %v1051, %v1075
        %v1099 = vsel %vm1013, %v1053, %v1077
        %v1100 = vsel %vm1013, %v1055, %v1079
        %v1101 = vsel %vm1013, %v1057, %v1081
        %v1102 = vsel %vm1013, %v1059, %v1083
        %v1103 = vsel %vm1013, %v1061, %v1085
        %v1104 = vsel %vm1013, %v1063, %v1087
        %v1105 = vsel %vm1013, %v1065, %v1089
        %1114 = vrot.lane.b32.xlu0 %v862, 64
        %v1115 = vpop.permute.xlu0 %1114
        %1116 = vrot.lane.b32.xlu0 %v863, 64
        %v1117 = vpop.permute.xlu0 %1116
        %1118 = vrot.lane.b32.xlu0 %v864, 64
        %v1119 = vpop.permute.xlu0 %1118
        %1120 = vrot.lane.b32.xlu0 %v865, 64
        %v1121 = vpop.permute.xlu0 %1120
        %1122 = vrot.lane.b32.xlu0 %v866, 64
        %v1123 = vpop.permute.xlu0 %1122
        %1124 = vrot.lane.b32.xlu0 %v867, 64
        %v1125 = vpop.permute.xlu0 %1124
        %1126 = vrot.lane.b32.xlu0 %v868, 64
        %v1127 = vpop.permute.xlu0 %1126
        %1128 = vrot.lane.b32.xlu0 %v869, 64
        %v1129 = vpop.permute.xlu0 %1128
        %v1138 = vmul.f32 %v712, %v1115
        %v1139 = vmul.f32 %v714, %v1117
        %v1140 = vmul.f32 %v717, %v1119
        %v1141 = vmul.f32 %v719, %v1121
        %v1142 = vmul.f32 %v722, %v1123
        %v1143 = vmul.f32 %v724, %v1125
        %v1144 = vmul.f32 %v727, %v1127
        %v1145 = vmul.f32 %v729, %v1129
        %v1146 = vmul.f32 %v1098, %v870
        %v1147 = vmul.f32 %v1099, %v871
        %v1148 = vmul.f32 %v1100, %v872
        %v1149 = vmul.f32 %v1101, %v873
        %v1150 = vmul.f32 %v1102, %v874
        %v1151 = vmul.f32 %v1103, %v875
        %v1152 = vmul.f32 %v1104, %v876
        %v1153 = vmul.f32 %v1105, %v877
        %1162 = vrot.lane.b32.xlu0 %v1146, 64
        %v1163 = vpop.permute.xlu0 %1162
        %1164 = vrot.lane.b32.xlu0 %v1147, 64
        %v1165 = vpop.permute.xlu0 %1164
        %1166 = vrot.lane.b32.xlu0 %v1148, 64
        %v1167 = vpop.permute.xlu0 %1166
        %1168 = vrot.lane.b32.xlu0 %v1149, 64
        %v1169 = vpop.permute.xlu0 %1168
        %1170 = vrot.lane.b32.xlu0 %v1150, 64
        %v1171 = vpop.permute.xlu0 %1170
        %1172 = vrot.lane.b32.xlu0 %v1151, 64
        %v1173 = vpop.permute.xlu0 %1172
        %1174 = vrot.lane.b32.xlu0 %v1152, 64
        %v1175 = vpop.permute.xlu0 %1174
        %1176 = vrot.lane.b32.xlu0 %v1153, 64
        %v1177 = vpop.permute.xlu0 %1176
        %v1186 = vadd.f32 %v1138, %v1163
        %v1187 = vadd.f32 %v1139, %v1165
        %v1188 = vadd.f32 %v1140, %v1167
        %v1189 = vadd.f32 %v1141, %v1169
        %v1190 = vadd.f32 %v1142, %v1171
        %v1191 = vadd.f32 %v1143, %v1173
        %v1192 = vadd.f32 %v1144, %v1175
        %v1193 = vadd.f32 %v1145, %v1177
        %v1194 = vpack.c.bf16 %v1187, %v1186
        %v1195 = vpack.c.bf16 %v1189, %v1188
        %v1196 = vpack.c.bf16 %v1191, %v1190
        %v1197 = vpack.c.bf16 %v1193, %v1192
        %1202 = vrot.lane.b32.xlu0 %v1194, 64
        %v1203 = vpop.permute.xlu0 %1202
        %1204 = vrot.lane.b32.xlu0 %v1195, 64
        %v1205 = vpop.permute.xlu0 %1204
        %1206 = vrot.lane.b32.xlu0 %v1196, 64
        %v1207 = vpop.permute.xlu0 %1206
        %1208 = vrot.lane.b32.xlu0 %v1197, 64
        %v1209 = vpop.permute.xlu0 %1208
        %vm1210 = vcmask 261120
        %v1212 = vsel %vm1210, %v1046, 0
        %v1215 = vsel %vm1210, %v1047, 0
        %v1218 = vsel %vm1210, %v1048, 0
        %v1221 = vsel %vm1210, %v1049, 0
        %v1224 = vsel %vm1210, %v1203, 0
        %v1227 = vsel %vm1210, %v1205, 0
        %v1230 = vsel %vm1210, %v1207, 0
        %v1233 = vsel %vm1210, %v1209, 0
        %1235 = vmatpush.bf16.xpose.msra.mxu0 0
        %1236 = vmatpush.bf16.xpose.msra.mxu0 0
        %1237 = vmatpush.bf16.xpose.msra.mxu0 0
        %1238 = vmatpush.bf16.xpose.msra.mxu0 0
        %1239 = vmatpush.bf16.xpose.msra.mxu0 %v1233
        %1240 = vmatpush.bf16.xpose.msra.mxu0 %v1230
        %1241 = vmatpush.bf16.xpose.msra.mxu0 %v1227
        %1242 = vmatpush.bf16.xpose.msra.mxu0 %v1224
        %1243 = vmatmul.bf16.gmra.mxu0 %v1212
        %v1244 = vpop.f32.mrf.mxu0
        %v1245 = vadd.f32 0.0, %v1244
        %v1246 = vpop.f32.mrf.mxu0
        %v1247 = vadd.f32 0.0, %v1246
        %1248 = vmatmul.bf16.gmra.mxu0 %v1215
        %v1249 = vpop.f32.mrf.mxu0
        %v1250 = vadd.f32 0.0, %v1249
        %v1251 = vpop.f32.mrf.mxu0
        %v1252 = vadd.f32 0.0, %v1251
        %1253 = vmatmul.bf16.gmra.mxu0 %v1218
        %v1254 = vpop.f32.mrf.mxu0
        %v1255 = vadd.f32 0.0, %v1254
        %v1256 = vpop.f32.mrf.mxu0
        %v1257 = vadd.f32 0.0, %v1256
        %1258 = vmatmul.bf16.gmra.mxu0 %v1221
        %v1259 = vpop.f32.mrf.mxu0
        %v1260 = vadd.f32 0.0, %v1259
        %v1261 = vpop.f32.mrf.mxu0
        %v1262 = vadd.f32 0.0, %v1261
        %1263 = vdwg.mxu0
        %v1264 = vsel %vm912, %v1245, -1e+30
        %v1265 = vsel %vm913, %v1247, -1e+30
        %v1266 = vsel %vm914, %v1250, -1e+30
        %v1267 = vsel %vm915, %v1252, -1e+30
        %v1268 = vsel %vm916, %v1255, -1e+30
        %v1269 = vsel %vm917, %v1257, -1e+30
        %v1270 = vsel %vm918, %v1260, -1e+30
        %v1271 = vsel %vm919, %v1262, -1e+30
        %v1272 = vsel %vm491, %v1264, -inf
        %1273 = vmax.xlane.f32.xlu0 %v1272
        %v1274 = vpop.xlane.xlu0 %1273
        %v1275 = vsel %vm491, %v1265, -inf
        %1276 = vmax.xlane.f32.xlu0 %v1275
        %v1277 = vpop.xlane.xlu0 %1276
        %v1278 = vsel %vm491, %v1266, -inf
        %1279 = vmax.xlane.f32.xlu0 %v1278
        %v1280 = vpop.xlane.xlu0 %1279
        %v1281 = vsel %vm491, %v1267, -inf
        %1282 = vmax.xlane.f32.xlu0 %v1281
        %v1283 = vpop.xlane.xlu0 %1282
        %v1284 = vsel %vm491, %v1268, -inf
        %1285 = vmax.xlane.f32.xlu0 %v1284
        %v1286 = vpop.xlane.xlu0 %1285
        %v1287 = vsel %vm491, %v1269, -inf
        %1288 = vmax.xlane.f32.xlu0 %v1287
        %v1289 = vpop.xlane.xlu0 %1288
        %v1290 = vsel %vm491, %v1270, -inf
        %1291 = vmax.xlane.f32.xlu0 %v1290
        %v1292 = vpop.xlane.xlu0 %1291
        %v1293 = vsel %vm491, %v1271, -inf
        %1294 = vmax.xlane.f32.xlu0 %v1293
        %v1295 = vpop.xlane.xlu0 %1294
        %v1296 = vsub.f32 %v1264, %v1274
        %v1297 = vsub.f32 %v1265, %v1277
        %v1298 = vsub.f32 %v1266, %v1280
        %v1299 = vsub.f32 %v1267, %v1283
        %v1300 = vsub.f32 %v1268, %v1286
        %v1301 = vsub.f32 %v1269, %v1289
        %v1302 = vsub.f32 %v1270, %v1292
        %v1303 = vsub.f32 %v1271, %v1295
        %v1304 = vmul.f32 %v1296, 1.442695
        %v1305 = vpow.pop %v1304
        %v1306 = vmul.f32 %v1297, 1.442695
        %v1307 = vpow.pop %v1306
        %v1308 = vmul.f32 %v1298, 1.442695
        %v1309 = vpow.pop %v1308
        %v1310 = vmul.f32 %v1299, 1.442695
        %v1311 = vpow.pop %v1310
        %v1312 = vmul.f32 %v1300, 1.442695
        %v1313 = vpow.pop %v1312
        %v1314 = vmul.f32 %v1301, 1.442695
        %v1315 = vpow.pop %v1314
        %v1316 = vmul.f32 %v1302, 1.442695
        %v1317 = vpow.pop %v1316
        %v1318 = vmul.f32 %v1303, 1.442695
        %v1319 = vpow.pop %v1318
        %v1320 = vsel %vm491, %v1305, 0.0
        %1321 = vadd.xlane.f32.xlu0 %v1320
        %v1322 = vpop.xlane.xlu0 %1321
        %v1323 = vsel %vm491, %v1307, 0.0
        %1324 = vadd.xlane.f32.xlu0 %v1323
        %v1325 = vpop.xlane.xlu0 %1324
        %v1326 = vsel %vm491, %v1309, 0.0
        %1327 = vadd.xlane.f32.xlu0 %v1326
        %v1328 = vpop.xlane.xlu0 %1327
        %v1329 = vsel %vm491, %v1311, 0.0
        %1330 = vadd.xlane.f32.xlu0 %v1329
        %v1331 = vpop.xlane.xlu0 %1330
        %v1332 = vsel %vm491, %v1313, 0.0
        %1333 = vadd.xlane.f32.xlu0 %v1332
        %v1334 = vpop.xlane.xlu0 %1333
        %v1335 = vsel %vm491, %v1315, 0.0
        %1336 = vadd.xlane.f32.xlu0 %v1335
        %v1337 = vpop.xlane.xlu0 %1336
        %v1338 = vsel %vm491, %v1317, 0.0
        %1339 = vadd.xlane.f32.xlu0 %v1338
        %v1340 = vpop.xlane.xlu0 %1339
        %v1341 = vsel %vm491, %v1319, 0.0
        %1342 = vadd.xlane.f32.xlu0 %v1341
        %v1343 = vpop.xlane.xlu0 %1342
        %v1344 = vrcp.pop %v1322
        %v1345 = vrcp.pop %v1325
        %v1346 = vrcp.pop %v1328
        %v1347 = vrcp.pop %v1331
        %v1348 = vrcp.pop %v1334
        %v1349 = vrcp.pop %v1337
        %v1350 = vrcp.pop %v1340
        %v1351 = vrcp.pop %v1343
        %v1352 = vmul.f32 %v1305, %v1344
        %v1353 = vmul.f32 %v1307, %v1345
        %v1354 = vmul.f32 %v1309, %v1346
        %v1355 = vmul.f32 %v1311, %v1347
        %v1356 = vmul.f32 %v1313, %v1348
        %v1357 = vmul.f32 %v1315, %v1349
        %v1358 = vmul.f32 %v1317, %v1350
        %v1359 = vmul.f32 %v1319, %v1351
        %v1360 = vpack.c.bf16 %v1353, %v1352
        %v1361 = vpack.c.bf16 %v1355, %v1354
        %v1362 = vpack.c.bf16 %v1357, %v1356
        %v1363 = vpack.c.bf16 %v1359, %v1358
        %v1372 = vunpack.c.l.b16 %v854
        %v1373 = vunpack.c.l.b16 %v855
        %v1374 = vunpack.c.l.b16 %v856
        %v1375 = vunpack.c.l.b16 %v857
        %v1376 = vunpack.c.l.b16 %v858
        %v1377 = vunpack.c.l.b16 %v859
        %v1378 = vunpack.c.l.b16 %v860
        %v1379 = vunpack.c.l.b16 %v861
        %v1380 = vpack.c.b16 %v1373, %v1372
        %v1381 = vpack.c.b16 %v1375, %v1374
        %v1382 = vpack.c.b16 %v1377, %v1376
        %v1383 = vpack.c.b16 %v1379, %v1378
        %v1389 = vsel %vm491, %v1360, 0
        %v1392 = vsel %vm491, %v1361, 0
        %v1395 = vsel %vm491, %v1362, 0
        %v1398 = vsel %vm491, %v1363, 0
        %1400 = vmatpush.bf16.msra.mxu0 0
        %1401 = vmatpush.bf16.msra.mxu0 0
        %1402 = vmatpush.bf16.msra.mxu0 0
        %1403 = vmatpush.bf16.msra.mxu0 0
        %1404 = vmatpush.bf16.msra.mxu0 %v1383
        %1405 = vmatpush.bf16.msra.mxu0 %v1382
        %1406 = vmatpush.bf16.msra.mxu0 %v1381
        %1407 = vmatpush.bf16.msra.mxu0 %v1380
        %1408 = vmatmul.bf16.gmra.mxu0 %v1389
        %v1409 = vpop.f32.mrf.mxu0
        %v1410 = vadd.f32 0.0, %v1409
        %v1411 = vpop.f32.mrf.mxu0
        %v1412 = vadd.f32 0.0, %v1411
        %1413 = vmatmul.bf16.gmra.mxu0 %v1392
        %v1414 = vpop.f32.mrf.mxu0
        %v1415 = vadd.f32 0.0, %v1414
        %v1416 = vpop.f32.mrf.mxu0
        %v1417 = vadd.f32 0.0, %v1416
        %1418 = vmatmul.bf16.gmra.mxu0 %v1395
        %v1419 = vpop.f32.mrf.mxu0
        %v1420 = vadd.f32 0.0, %v1419
        %v1421 = vpop.f32.mrf.mxu0
        %v1422 = vadd.f32 0.0, %v1421
        %1423 = vmatmul.bf16.gmra.mxu0 %v1398
        %v1424 = vpop.f32.mrf.mxu0
        %v1425 = vadd.f32 0.0, %v1424
        %v1426 = vpop.f32.mrf.mxu0
        %v1427 = vadd.f32 0.0, %v1426
        %1428 = vdwg.mxu0
        %v1429 = vsel %vm1013, %v1075, %v966
        %v1430 = vsel %vm1013, %v1077, %v968
        %v1431 = vsel %vm1013, %v1079, %v970
        %v1432 = vsel %vm1013, %v1081, %v972
        %v1433 = vsel %vm1013, %v1083, %v974
        %v1434 = vsel %vm1013, %v1085, %v976
        %v1435 = vsel %vm1013, %v1087, %v978
        %v1436 = vsel %vm1013, %v1089, %v980
        %1437 = vrot.lane.b32.xlu0 %v862, 32
        %v1438 = vpop.permute.xlu0 %1437
        %1439 = vrot.lane.b32.xlu0 %v863, 32
        %v1440 = vpop.permute.xlu0 %1439
        %1441 = vrot.lane.b32.xlu0 %v864, 32
        %v1442 = vpop.permute.xlu0 %1441
        %1443 = vrot.lane.b32.xlu0 %v865, 32
        %v1444 = vpop.permute.xlu0 %1443
        %1445 = vrot.lane.b32.xlu0 %v866, 32
        %v1446 = vpop.permute.xlu0 %1445
        %1447 = vrot.lane.b32.xlu0 %v867, 32
        %v1448 = vpop.permute.xlu0 %1447
        %1449 = vrot.lane.b32.xlu0 %v868, 32
        %v1450 = vpop.permute.xlu0 %1449
        %1451 = vrot.lane.b32.xlu0 %v869, 32
        %v1452 = vpop.permute.xlu0 %1451
        %v1461 = vmul.f32 %v712, %v1438
        %v1462 = vmul.f32 %v714, %v1440
        %v1463 = vmul.f32 %v717, %v1442
        %v1464 = vmul.f32 %v719, %v1444
        %v1465 = vmul.f32 %v722, %v1446
        %v1466 = vmul.f32 %v724, %v1448
        %v1467 = vmul.f32 %v727, %v1450
        %v1468 = vmul.f32 %v729, %v1452
        %v1469 = vmul.f32 %v1429, %v870
        %v1470 = vmul.f32 %v1430, %v871
        %v1471 = vmul.f32 %v1431, %v872
        %v1472 = vmul.f32 %v1432, %v873
        %v1473 = vmul.f32 %v1433, %v874
        %v1474 = vmul.f32 %v1434, %v875
        %v1475 = vmul.f32 %v1435, %v876
        %v1476 = vmul.f32 %v1436, %v877
        %1485 = vrot.lane.b32.xlu0 %v1469, 32
        %v1486 = vpop.permute.xlu0 %1485
        %1487 = vrot.lane.b32.xlu0 %v1470, 32
        %v1488 = vpop.permute.xlu0 %1487
        %1489 = vrot.lane.b32.xlu0 %v1471, 32
        %v1490 = vpop.permute.xlu0 %1489
        %1491 = vrot.lane.b32.xlu0 %v1472, 32
        %v1492 = vpop.permute.xlu0 %1491
        %1493 = vrot.lane.b32.xlu0 %v1473, 32
        %v1494 = vpop.permute.xlu0 %1493
        %1495 = vrot.lane.b32.xlu0 %v1474, 32
        %v1496 = vpop.permute.xlu0 %1495
        %1497 = vrot.lane.b32.xlu0 %v1475, 32
        %v1498 = vpop.permute.xlu0 %1497
        %1499 = vrot.lane.b32.xlu0 %v1476, 32
        %v1500 = vpop.permute.xlu0 %1499
        %v1509 = vadd.f32 %v1461, %v1486
        %v1510 = vadd.f32 %v1462, %v1488
        %v1511 = vadd.f32 %v1463, %v1490
        %v1512 = vadd.f32 %v1464, %v1492
        %v1513 = vadd.f32 %v1465, %v1494
        %v1514 = vadd.f32 %v1466, %v1496
        %v1515 = vadd.f32 %v1467, %v1498
        %v1516 = vadd.f32 %v1468, %v1500
        %v1517 = vpack.c.bf16 %v1510, %v1509
        %v1518 = vpack.c.bf16 %v1512, %v1511
        %v1519 = vpack.c.bf16 %v1514, %v1513
        %v1520 = vpack.c.bf16 %v1516, %v1515
        %v1521 = vsel %vm1013, %v990, %v1051
        %v1522 = vsel %vm1013, %v992, %v1053
        %v1523 = vsel %vm1013, %v994, %v1055
        %v1524 = vsel %vm1013, %v996, %v1057
        %v1525 = vsel %vm1013, %v998, %v1059
        %v1526 = vsel %vm1013, %v1000, %v1061
        %v1527 = vsel %vm1013, %v1002, %v1063
        %v1528 = vsel %vm1013, %v1004, %v1065
        %1529 = vrot.lane.b32.xlu0 %v862, 96
        %v1530 = vpop.permute.xlu0 %1529
        %1531 = vrot.lane.b32.xlu0 %v863, 96
        %v1532 = vpop.permute.xlu0 %1531
        %1533 = vrot.lane.b32.xlu0 %v864, 96
        %v1534 = vpop.permute.xlu0 %1533
        %1535 = vrot.lane.b32.xlu0 %v865, 96
        %v1536 = vpop.permute.xlu0 %1535
        %1537 = vrot.lane.b32.xlu0 %v866, 96
        %v1538 = vpop.permute.xlu0 %1537
        %1539 = vrot.lane.b32.xlu0 %v867, 96
        %v1540 = vpop.permute.xlu0 %1539
        %1541 = vrot.lane.b32.xlu0 %v868, 96
        %v1542 = vpop.permute.xlu0 %1541
        %1543 = vrot.lane.b32.xlu0 %v869, 96
        %v1544 = vpop.permute.xlu0 %1543
        %v1553 = vmul.f32 %v712, %v1530
        %v1554 = vmul.f32 %v714, %v1532
        %v1555 = vmul.f32 %v717, %v1534
        %v1556 = vmul.f32 %v719, %v1536
        %v1557 = vmul.f32 %v722, %v1538
        %v1558 = vmul.f32 %v724, %v1540
        %v1559 = vmul.f32 %v727, %v1542
        %v1560 = vmul.f32 %v729, %v1544
        %v1561 = vmul.f32 %v1521, %v870
        %v1562 = vmul.f32 %v1522, %v871
        %v1563 = vmul.f32 %v1523, %v872
        %v1564 = vmul.f32 %v1524, %v873
        %v1565 = vmul.f32 %v1525, %v874
        %v1566 = vmul.f32 %v1526, %v875
        %v1567 = vmul.f32 %v1527, %v876
        %v1568 = vmul.f32 %v1528, %v877
        %1577 = vrot.lane.b32.xlu0 %v1561, 96
        %v1578 = vpop.permute.xlu0 %1577
        %1579 = vrot.lane.b32.xlu0 %v1562, 96
        %v1580 = vpop.permute.xlu0 %1579
        %1581 = vrot.lane.b32.xlu0 %v1563, 96
        %v1582 = vpop.permute.xlu0 %1581
        %1583 = vrot.lane.b32.xlu0 %v1564, 96
        %v1584 = vpop.permute.xlu0 %1583
        %1585 = vrot.lane.b32.xlu0 %v1565, 96
        %v1586 = vpop.permute.xlu0 %1585
        %1587 = vrot.lane.b32.xlu0 %v1566, 96
        %v1588 = vpop.permute.xlu0 %1587
        %1589 = vrot.lane.b32.xlu0 %v1567, 96
        %v1590 = vpop.permute.xlu0 %1589
        %1591 = vrot.lane.b32.xlu0 %v1568, 96
        %v1592 = vpop.permute.xlu0 %1591
        %v1601 = vadd.f32 %v1553, %v1578
        %v1602 = vadd.f32 %v1554, %v1580
        %v1603 = vadd.f32 %v1555, %v1582
        %v1604 = vadd.f32 %v1556, %v1584
        %v1605 = vadd.f32 %v1557, %v1586
        %v1606 = vadd.f32 %v1558, %v1588
        %v1607 = vadd.f32 %v1559, %v1590
        %v1608 = vadd.f32 %v1560, %v1592
        %v1609 = vpack.c.bf16 %v1602, %v1601
        %v1610 = vpack.c.bf16 %v1604, %v1603
        %v1611 = vpack.c.bf16 %v1606, %v1605
        %v1612 = vpack.c.bf16 %v1608, %v1607
        %1617 = vrot.lane.b32.xlu0 %v1517, 96
        %v1618 = vpop.permute.xlu0 %1617
        %1619 = vrot.lane.b32.xlu0 %v1518, 96
        %v1620 = vpop.permute.xlu0 %1619
        %1621 = vrot.lane.b32.xlu0 %v1519, 96
        %v1622 = vpop.permute.xlu0 %1621
        %1623 = vrot.lane.b32.xlu0 %v1520, 96
        %v1624 = vpop.permute.xlu0 %1623
        %1629 = vrot.lane.b32.xlu0 %v1609, 32
        %v1630 = vpop.permute.xlu0 %1629
        %1631 = vrot.lane.b32.xlu0 %v1610, 32
        %v1632 = vpop.permute.xlu0 %1631
        %1633 = vrot.lane.b32.xlu0 %v1611, 32
        %v1634 = vpop.permute.xlu0 %1633
        %1635 = vrot.lane.b32.xlu0 %v1612, 32
        %v1636 = vpop.permute.xlu0 %1635
        %v1638 = vsel %vm1210, %v1618, 0
        %v1641 = vsel %vm1210, %v1620, 0
        %v1644 = vsel %vm1210, %v1622, 0
        %v1647 = vsel %vm1210, %v1624, 0
        %v1650 = vsel %vm1210, %v1630, 0
        %v1653 = vsel %vm1210, %v1632, 0
        %v1656 = vsel %vm1210, %v1634, 0
        %v1659 = vsel %vm1210, %v1636, 0
        %1661 = vmatpush.bf16.xpose.msra.mxu0 0
        %1662 = vmatpush.bf16.xpose.msra.mxu0 0
        %1663 = vmatpush.bf16.xpose.msra.mxu0 0
        %1664 = vmatpush.bf16.xpose.msra.mxu0 0
        %1665 = vmatpush.bf16.xpose.msra.mxu0 %v1659
        %1666 = vmatpush.bf16.xpose.msra.mxu0 %v1656
        %1667 = vmatpush.bf16.xpose.msra.mxu0 %v1653
        %1668 = vmatpush.bf16.xpose.msra.mxu0 %v1650
        %1669 = vmatmul.bf16.gmra.mxu0 %v1638
        %v1670 = vpop.f32.mrf.mxu0
        %v1671 = vadd.f32 0.0, %v1670
        %v1672 = vpop.f32.mrf.mxu0
        %v1673 = vadd.f32 0.0, %v1672
        %1674 = vmatmul.bf16.gmra.mxu0 %v1641
        %v1675 = vpop.f32.mrf.mxu0
        %v1676 = vadd.f32 0.0, %v1675
        %v1677 = vpop.f32.mrf.mxu0
        %v1678 = vadd.f32 0.0, %v1677
        %1679 = vmatmul.bf16.gmra.mxu0 %v1644
        %v1680 = vpop.f32.mrf.mxu0
        %v1681 = vadd.f32 0.0, %v1680
        %v1682 = vpop.f32.mrf.mxu0
        %v1683 = vadd.f32 0.0, %v1682
        %1684 = vmatmul.bf16.gmra.mxu0 %v1647
        %v1685 = vpop.f32.mrf.mxu0
        %v1686 = vadd.f32 0.0, %v1685
        %v1687 = vpop.f32.mrf.mxu0
        %v1688 = vadd.f32 0.0, %v1687
        %1689 = vdwg.mxu0
        %v1690 = vsel %vm912, %v1671, -1e+30
        %v1691 = vsel %vm913, %v1673, -1e+30
        %v1692 = vsel %vm914, %v1676, -1e+30
        %v1693 = vsel %vm915, %v1678, -1e+30
        %v1694 = vsel %vm916, %v1681, -1e+30
        %v1695 = vsel %vm917, %v1683, -1e+30
        %v1696 = vsel %vm918, %v1686, -1e+30
        %v1697 = vsel %vm919, %v1688, -1e+30
        %v1698 = vsel %vm491, %v1690, -inf
        %1699 = vmax.xlane.f32.xlu0 %v1698
        %v1700 = vpop.xlane.xlu0 %1699
        %v1701 = vsel %vm491, %v1691, -inf
        %1702 = vmax.xlane.f32.xlu0 %v1701
        %v1703 = vpop.xlane.xlu0 %1702
        %v1704 = vsel %vm491, %v1692, -inf
        %1705 = vmax.xlane.f32.xlu0 %v1704
        %v1706 = vpop.xlane.xlu0 %1705
        %v1707 = vsel %vm491, %v1693, -inf
        %1708 = vmax.xlane.f32.xlu0 %v1707
        %v1709 = vpop.xlane.xlu0 %1708
        %v1710 = vsel %vm491, %v1694, -inf
        %1711 = vmax.xlane.f32.xlu0 %v1710
        %v1712 = vpop.xlane.xlu0 %1711
        %v1713 = vsel %vm491, %v1695, -inf
        %1714 = vmax.xlane.f32.xlu0 %v1713
        %v1715 = vpop.xlane.xlu0 %1714
        %v1716 = vsel %vm491, %v1696, -inf
        %1717 = vmax.xlane.f32.xlu0 %v1716
        %v1718 = vpop.xlane.xlu0 %1717
        %v1719 = vsel %vm491, %v1697, -inf
        %1720 = vmax.xlane.f32.xlu0 %v1719
        %v1721 = vpop.xlane.xlu0 %1720
        %v1722 = vsub.f32 %v1690, %v1700
        %v1723 = vsub.f32 %v1691, %v1703
        %v1724 = vsub.f32 %v1692, %v1706
        %v1725 = vsub.f32 %v1693, %v1709
        %v1726 = vsub.f32 %v1694, %v1712
        %v1727 = vsub.f32 %v1695, %v1715
        %v1728 = vsub.f32 %v1696, %v1718
        %v1729 = vsub.f32 %v1697, %v1721
        %v1730 = vmul.f32 %v1722, 1.442695
        %v1731 = vpow.pop %v1730
        %v1732 = vmul.f32 %v1723, 1.442695
        %v1733 = vpow.pop %v1732
        %v1734 = vmul.f32 %v1724, 1.442695
        %v1735 = vpow.pop %v1734
        %v1736 = vmul.f32 %v1725, 1.442695
        %v1737 = vpow.pop %v1736
        %v1738 = vmul.f32 %v1726, 1.442695
        %v1739 = vpow.pop %v1738
        %v1740 = vmul.f32 %v1727, 1.442695
        %v1741 = vpow.pop %v1740
        %v1742 = vmul.f32 %v1728, 1.442695
        %v1743 = vpow.pop %v1742
        %v1744 = vmul.f32 %v1729, 1.442695
        %v1745 = vpow.pop %v1744
        %v1746 = vsel %vm491, %v1731, 0.0
        %1747 = vadd.xlane.f32.xlu0 %v1746
        %v1748 = vpop.xlane.xlu0 %1747
        %v1749 = vsel %vm491, %v1733, 0.0
        %1750 = vadd.xlane.f32.xlu0 %v1749
        %v1751 = vpop.xlane.xlu0 %1750
        %v1752 = vsel %vm491, %v1735, 0.0
        %1753 = vadd.xlane.f32.xlu0 %v1752
        %v1754 = vpop.xlane.xlu0 %1753
        %v1755 = vsel %vm491, %v1737, 0.0
        %1756 = vadd.xlane.f32.xlu0 %v1755
        %v1757 = vpop.xlane.xlu0 %1756
        %v1758 = vsel %vm491, %v1739, 0.0
        %1759 = vadd.xlane.f32.xlu0 %v1758
        %v1760 = vpop.xlane.xlu0 %1759
        %v1761 = vsel %vm491, %v1741, 0.0
        %1762 = vadd.xlane.f32.xlu0 %v1761
        %v1763 = vpop.xlane.xlu0 %1762
        %v1764 = vsel %vm491, %v1743, 0.0
        %1765 = vadd.xlane.f32.xlu0 %v1764
        %v1766 = vpop.xlane.xlu0 %1765
        %v1767 = vsel %vm491, %v1745, 0.0
        %1768 = vadd.xlane.f32.xlu0 %v1767
        %v1769 = vpop.xlane.xlu0 %1768
        %v1770 = vrcp.pop %v1748
        %v1771 = vrcp.pop %v1751
        %v1772 = vrcp.pop %v1754
        %v1773 = vrcp.pop %v1757
        %v1774 = vrcp.pop %v1760
        %v1775 = vrcp.pop %v1763
        %v1776 = vrcp.pop %v1766
        %v1777 = vrcp.pop %v1769
        %v1778 = vmul.f32 %v1731, %v1770
        %v1779 = vmul.f32 %v1733, %v1771
        %v1780 = vmul.f32 %v1735, %v1772
        %v1781 = vmul.f32 %v1737, %v1773
        %v1782 = vmul.f32 %v1739, %v1774
        %v1783 = vmul.f32 %v1741, %v1775
        %v1784 = vmul.f32 %v1743, %v1776
        %v1785 = vmul.f32 %v1745, %v1777
        %v1786 = vpack.c.bf16 %v1779, %v1778
        %v1787 = vpack.c.bf16 %v1781, %v1780
        %v1788 = vpack.c.bf16 %v1783, %v1782
        %v1789 = vpack.c.bf16 %v1785, %v1784
        %1790 = vrot.lane.b32.xlu0 %v1380, 96
        %v1791 = vpop.permute.xlu0 %1790
        %1792 = vrot.lane.b32.xlu0 %v1381, 96
        %v1793 = vpop.permute.xlu0 %1792
        %1794 = vrot.lane.b32.xlu0 %v1382, 96
        %v1795 = vpop.permute.xlu0 %1794
        %1796 = vrot.lane.b32.xlu0 %v1383, 96
        %v1797 = vpop.permute.xlu0 %1796
        %v1803 = vsel %vm491, %v1786, 0
        %v1806 = vsel %vm491, %v1787, 0
        %v1809 = vsel %vm491, %v1788, 0
        %v1812 = vsel %vm491, %v1789, 0
        %1814 = vmatpush.bf16.msra.mxu0 0
        %1815 = vmatpush.bf16.msra.mxu0 0
        %1816 = vmatpush.bf16.msra.mxu0 0
        %1817 = vmatpush.bf16.msra.mxu0 0
        %1818 = vmatpush.bf16.msra.mxu0 %v1797
        %1819 = vmatpush.bf16.msra.mxu0 %v1795
        %1820 = vmatpush.bf16.msra.mxu0 %v1793
        %1821 = vmatpush.bf16.msra.mxu0 %v1791
        %1822 = vmatmul.bf16.gmra.mxu0 %v1803
        %v1823 = vpop.f32.mrf.mxu0
        %v1824 = vadd.f32 0.0, %v1823
        %v1825 = vpop.f32.mrf.mxu0
        %v1826 = vadd.f32 0.0, %v1825
        %1827 = vmatmul.bf16.gmra.mxu0 %v1806
        %v1828 = vpop.f32.mrf.mxu0
        %v1829 = vadd.f32 0.0, %v1828
        %v1830 = vpop.f32.mrf.mxu0
        %v1831 = vadd.f32 0.0, %v1830
        %1832 = vmatmul.bf16.gmra.mxu0 %v1809
        %v1833 = vpop.f32.mrf.mxu0
        %v1834 = vadd.f32 0.0, %v1833
        %v1835 = vpop.f32.mrf.mxu0
        %v1836 = vadd.f32 0.0, %v1835
        %1837 = vmatmul.bf16.gmra.mxu0 %v1812
        %v1838 = vpop.f32.mrf.mxu0
        %v1839 = vadd.f32 0.0, %v1838
        %v1840 = vpop.f32.mrf.mxu0
        %v1841 = vadd.f32 0.0, %v1840
        %1842 = vdwg.mxu0
        %1851 = vrot.lane.b32.xlu0 %v1824, 32
        %v1852 = vpop.permute.xlu0 %1851
        %1853 = vrot.lane.b32.xlu0 %v1826, 32
        %v1854 = vpop.permute.xlu0 %1853
        %1855 = vrot.lane.b32.xlu0 %v1829, 32
        %v1856 = vpop.permute.xlu0 %1855
        %1857 = vrot.lane.b32.xlu0 %v1831, 32
        %v1858 = vpop.permute.xlu0 %1857
        %1859 = vrot.lane.b32.xlu0 %v1834, 32
        %v1860 = vpop.permute.xlu0 %1859
        %1861 = vrot.lane.b32.xlu0 %v1836, 32
        %v1862 = vpop.permute.xlu0 %1861
        %1863 = vrot.lane.b32.xlu0 %v1839, 32
        %v1864 = vpop.permute.xlu0 %1863
        %1865 = vrot.lane.b32.xlu0 %v1841, 32
        %v1866 = vpop.permute.xlu0 %1865
        %v1875 = vsel %vm1210, %v1410, %v1852
        %v1876 = vsel %vm1210, %v1412, %v1854
        %v1877 = vsel %vm1210, %v1415, %v1856
        %v1878 = vsel %vm1210, %v1417, %v1858
        %v1879 = vsel %vm1210, %v1420, %v1860
        %v1880 = vsel %vm1210, %v1422, %v1862
        %v1881 = vsel %vm1210, %v1425, %v1864
        %v1882 = vsel %vm1210, %v1427, %v1866
        %v1883 = vpack.c.bf16 %v929, %v928
        %v1884 = vpack.c.bf16 %v931, %v930
        %v1885 = vpack.c.bf16 %v933, %v932
        %v1886 = vpack.c.bf16 %v935, %v934
        %v1887 = vpack.c.bf16 %v945, %v944
        %v1888 = vpack.c.bf16 %v947, %v946
        %v1889 = vpack.c.bf16 %v949, %v948
        %v1890 = vpack.c.bf16 %v951, %v950
        %v1891 = vmul.f32 %v712, %v712
        %v1892 = vmul.f32 %v714, %v714
        %v1893 = vsel %vm491, %v1891, 0.0
        %1894 = vadd.xlane.f32.xlu0 %v1893
        %v1895 = vpop.xlane.xlu0 %1894
        %v1896 = vsel %vm491, %v1892, 0.0
        %1897 = vadd.xlane.f32.xlu0 %v1896
        %v1898 = vpop.xlane.xlu0 %1897
        %v1899 = vadd.f32 %v1895, 1e-06
        %v1900 = vadd.f32 %v1898, 1e-06
        %v1901 = vrsqrt.pop %v1899
        %v1902 = vmul.f32 %v1901, %v1899
        %v1903 = vmul.f32 %v1902, %v1901
        %v1904 = vmul.f32 0.5, %v1903
        %v1905 = vsub.f32 1.5, %v1904
        %v1906 = vmul.f32 %v1901, %v1905
        %vm1907 = vweird.f32 %v1899
        %vm1908 = vweird.f32 %v1901
        %vm1909 = vmor %vm1907, %vm1908
        %v1910 = vsel %vm1909, %v1901, %v1906
        %v1911 = vrsqrt.pop %v1900
        %v1912 = vmul.f32 %v1911, %v1900
        %v1913 = vmul.f32 %v1912, %v1911
        %v1914 = vmul.f32 0.5, %v1913
        %v1915 = vsub.f32 1.5, %v1914
        %v1916 = vmul.f32 %v1911, %v1915
        %vm1917 = vweird.f32 %v1900
        %vm1918 = vweird.f32 %v1911
        %vm1919 = vmor %vm1917, %vm1918
        %v1920 = vsel %vm1919, %v1911, %v1916
        %v1921 = vmul.f32 %v712, %v1910
        %v1922 = vmul.f32 %v714, %v1920
        %1925 = vrot.lane.b32.xlu0 %v1891, 64
        %v1926 = vpop.permute.xlu0 %1925
        %1927 = vrot.lane.b32.xlu0 %v1892, 64
        %v1928 = vpop.permute.xlu0 %1927
        %v1931 = vsel %vm491, %v1926, 0.0
        %1932 = vadd.xlane.f32.xlu0 %v1931
        %v1933 = vpop.xlane.xlu0 %1932
        %v1934 = vsel %vm491, %v1928, 0.0
        %1935 = vadd.xlane.f32.xlu0 %v1934
        %v1936 = vpop.xlane.xlu0 %1935
        %v1937 = vadd.f32 %v1933, 1e-06
        %v1938 = vadd.f32 %v1936, 1e-06
        %v1939 = vrsqrt.pop %v1937
        %v1940 = vmul.f32 %v1939, %v1937
        %v1941 = vmul.f32 %v1940, %v1939
        %v1942 = vmul.f32 0.5, %v1941
        %v1943 = vsub.f32 1.5, %v1942
        %v1944 = vmul.f32 %v1939, %v1943
        %vm1945 = vweird.f32 %v1937
        %vm1946 = vweird.f32 %v1939
        %vm1947 = vmor %vm1945, %vm1946
        %v1948 = vsel %vm1947, %v1939, %v1944
        %v1949 = vrsqrt.pop %v1938
        %v1950 = vmul.f32 %v1949, %v1938
        %v1951 = vmul.f32 %v1950, %v1949
        %v1952 = vmul.f32 0.5, %v1951
        %v1953 = vsub.f32 1.5, %v1952
        %v1954 = vmul.f32 %v1949, %v1953
        %vm1955 = vweird.f32 %v1938
        %vm1956 = vweird.f32 %v1949
        %vm1957 = vmor %vm1955, %vm1956
        %v1958 = vsel %vm1957, %v1949, %v1954
        %v1959 = vmul.f32 %v712, %v1948
        %v1960 = vmul.f32 %v714, %v1958
        %v1961 = vpack.c.bf16 %v1922, %v1921
        %v1962 = vpack.c.bf16 %v1960, %v1959
        %v1963 = vpack.c.bf16 %v743, %v741
        %1965 = vrot.lane.b32.xlu0 %v1962, 64
        %v1966 = vpop.permute.xlu0 %1965
        %v1968 = vsel %vm491, %v1966, 0
        %1970 = vmatpush.bf16.msra.mxu0 0
        %1971 = vmatpush.bf16.msra.mxu0 0
        %1972 = vmatpush.bf16.msra.mxu0 0
        %1973 = vmatpush.bf16.msra.mxu0 0
        %1974 = vmatpush.bf16.msra.mxu0 %v1886
        %1975 = vmatpush.bf16.msra.mxu0 %v1885
        %1976 = vmatpush.bf16.msra.mxu0 %v1884
        %1977 = vmatpush.bf16.msra.mxu0 %v1883
        %1978 = vmatmul.bf16.gmra.mxu0 %v1968
        %v1979 = vpop.f32.mrf.mxu0
        %v1980 = vadd.f32 0.0, %v1979
        %v1981 = vpop.f32.mrf.mxu0
        %v1982 = vadd.f32 0.0, %v1981
        %1983 = vdwg.mxu0
        %v1984 = vxor.u32 %v1980, 2147483648
        %v1985 = vxor.u32 %v1982, 2147483648
        %v1986 = vmul.f32 %v1984, 1.442695
        %v1987 = vpow.pop %v1986
        %v1988 = vmul.f32 %v1985, 1.442695
        %v1989 = vpow.pop %v1988
        %v1990 = vadd.f32 %v1987, 1.0
        %v1991 = vadd.f32 %v1989, 1.0
        %v1992 = vrcp.pop %v1990
        %v1993 = vmul.f32 %v1990, %v1992
        %v1994 = vsub.f32 1.0, %v1993
        %v1995 = vmul.f32 %v1992, %v1994
        %v1996 = vadd.f32 %v1992, %v1995
        %vm1997 = vweird.f32 %v1990
        %vm1998 = vweird.f32 %v1992
        %vm1999 = vmor %vm1997, %vm1998
        %v2000 = vsel %vm1999, %v1992, %v1996
        %v2001 = vand.u32 2147483647, %v1990
        %vm2002 = vcmp.eq.f32.partialorder %v2001, 8.507059e+37
        %v2003 = vand.u32 %v1990, 2147483648
        %v2004 = vor.u32 1.1754944e-38, %v2003
        %v2005 = vsel %vm2002, %v2004, %v2000
        %v2006 = vmul.f32 1.0, %v2005
        %v2007 = vrcp.pop %v1991
        %v2008 = vmul.f32 %v1991, %v2007
        %v2009 = vsub.f32 1.0, %v2008
        %v2010 = vmul.f32 %v2007, %v2009
        %v2011 = vadd.f32 %v2007, %v2010
        %vm2012 = vweird.f32 %v1991
        %vm2013 = vweird.f32 %v2007
        %vm2014 = vmor %vm2012, %vm2013
        %v2015 = vsel %vm2014, %v2007, %v2011
        %v2016 = vand.u32 2147483647, %v1991
        %vm2017 = vcmp.eq.f32.partialorder %v2016, 8.507059e+37
        %v2018 = vand.u32 %v1991, 2147483648
        %v2019 = vor.u32 1.1754944e-38, %v2018
        %v2020 = vsel %vm2017, %v2019, %v2015
        %v2021 = vmul.f32 1.0, %v2020
        %v2022 = vmul.f32 %v1980, %v2006
        %v2023 = vmul.f32 %v1982, %v2021
        %2026 = vrot.lane.b32.xlu0 %v1980, 64
        %v2027 = vpop.permute.xlu0 %2026
        %2028 = vrot.lane.b32.xlu0 %v1982, 64
        %v2029 = vpop.permute.xlu0 %2028
        %v2032 = vmul.f32 %v2022, %v2027
        %v2033 = vmul.f32 %v2023, %v2029
        %v2035 = vsel %vm491, %v1963, 0
        %v2038 = vsel %vm491, %v1887, 0
        %v2041 = vsel %vm491, %v1888, 0
        %v2044 = vsel %vm491, %v1889, 0
        %v2047 = vsel %vm491, %v1890, 0
        %2049 = vmatpush.bf16.xpose.msra.mxu0 0
        %2050 = vmatpush.bf16.xpose.msra.mxu0 0
        %2051 = vmatpush.bf16.xpose.msra.mxu0 0
        %2052 = vmatpush.bf16.xpose.msra.mxu0 0
        %2053 = vmatpush.bf16.xpose.msra.mxu0 %v2047
        %2054 = vmatpush.bf16.xpose.msra.mxu0 %v2044
        %2055 = vmatpush.bf16.xpose.msra.mxu0 %v2041
        %2056 = vmatpush.bf16.xpose.msra.mxu0 %v2038
        %2057 = vmatmul.bf16.gmra.mxu0 %v2035
        %v2058 = vpop.f32.mrf.mxu0
        %v2059 = vadd.f32 0.0, %v2058
        %v2060 = vpop.f32.mrf.mxu0
        %v2061 = vadd.f32 0.0, %v2060
        %2062 = vdwg.mxu0
        %v2063 = vsub.f32 0.0, %v2059
        %v2064 = vsub.f32 0.0, %v2061
        %v2065 = vsub.f32 1.0, %v2006
        %v2066 = vsub.f32 1.0, %v2021
        %v2067 = vmul.f32 %v1980, %v2065
        %v2068 = vmul.f32 %v1982, %v2066
        %v2069 = vadd.f32 %v2067, 1.0
        %v2070 = vadd.f32 %v2068, 1.0
        %v2071 = vmul.f32 %v2006, %v2069
        %v2072 = vmul.f32 %v2021, %v2070
        %v2073 = vmul.f32 %v2063, %v2027
        %v2074 = vmul.f32 %v2064, %v2029
        %v2075 = vmul.f32 %v2073, %v2071
        %v2076 = vmul.f32 %v2074, %v2072
        %v2077 = vmul.f32 %v2063, %v2022
        %v2078 = vmul.f32 %v2064, %v2023
        %2080 = vset.pattern.permute.xlu0 64
        %2081 = vperm.xlu0 %2080, %v846
        %v2082 = vpop.permute.xlu0 %2081
        %2085 = vset.pattern.permute.xlu0 64
        %2086 = vperm.xlu0 %2085, %v847
        %v2087 = vpop.permute.xlu0 %2086
        %v2089 = vmul.f32 %v2075, %v2082
        %v2090 = vmul.f32 %v2076, %v2087
        %2091 = vset.pattern.permute.xlu0 66
        %2092 = vperm.xlu0 %2091, %v846
        %v2093 = vpop.permute.xlu0 %2092
        %2095 = vset.pattern.permute.xlu0 66
        %2096 = vperm.xlu0 %2095, %v847
        %v2097 = vpop.permute.xlu0 %2096
        %v2099 = vmul.f32 %v2077, %v2093
        %v2100 = vmul.f32 %v2078, %v2097
        %2103 = vrot.lane.b32.xlu0 %v2099, 64
        %v2104 = vpop.permute.xlu0 %2103
        %2105 = vrot.lane.b32.xlu0 %v2100, 64
        %v2106 = vpop.permute.xlu0 %2105
        %v2109 = vsel %vm491, %v2089, %v2104
        %v2110 = vsel %vm491, %v2090, %v2106
        %v2111 = vpack.c.bf16 %v2110, %v2109
        %2113 = vxpose.xlu0.c.b16.start [1/8] %v1966, 128
        %2114 = vxpose.xlu0.c.b16.cont [2/8] 0, 128
        %2115 = vxpose.xlu0.c.b16.cont [3/8] 0, 128
        %2116 = vxpose.xlu0.c.b16.cont [4/8] 0, 128
        %2117 = vxpose.xlu0.c.b16.cont [5/8] 0, 128
        %2118 = vxpose.xlu0.c.b16.cont [6/8] 0, 128
        %2119 = vxpose.xlu0.c.b16.cont [7/8] 0, 128
        %2120 = vxpose.xlu0.c.b16.end [8/8] 0, 128
        %v2121 = vpop.trf.xlu0
        %v2122 = vpop.trf.xlu0
        %v2123 = vpop.trf.xlu0
        %v2124 = vpop.trf.xlu0
        %v2125 = vpop.trf.xlu0
        %v2126 = vpop.trf.xlu0
        %v2127 = vpop.trf.xlu0
        %v2128 = vpop.trf.xlu0
        %v2130 = vsel %vm1013, %v2121, 0
        %v2133 = vsel %vm1013, %v2122, 0
        %v2136 = vsel %vm1013, %v2123, 0
        %v2139 = vsel %vm1013, %v2124, 0
        %2141 = vmatpush.bf16.msra.mxu0 0
        %2142 = vmatpush.bf16.msra.mxu0 0
        %2143 = vmatpush.bf16.msra.mxu0 0
        %2144 = vmatpush.bf16.msra.mxu0 0
        %2145 = vmatpush.bf16.msra.mxu0 0
        %2146 = vmatpush.bf16.msra.mxu0 0
        %2147 = vmatpush.bf16.msra.mxu0 0
        %2148 = vmatpush.bf16.msra.mxu0 %v2111
        %2149 = vmatmul.bf16.gmra.mxu0 %v2130
        %v2150 = vpop.f32.mrf.mxu0
        %v2151 = vadd.f32 0.0, %v2150
        %v2152 = vpop.f32.mrf.mxu0
        %v2153 = vadd.f32 0.0, %v2152
        %2154 = vmatmul.bf16.gmra.mxu0 %v2133
        %v2155 = vpop.f32.mrf.mxu0
        %v2156 = vadd.f32 0.0, %v2155
        %v2157 = vpop.f32.mrf.mxu0
        %v2158 = vadd.f32 0.0, %v2157
        %2159 = vmatmul.bf16.gmra.mxu0 %v2136
        %v2160 = vpop.f32.mrf.mxu0
        %v2161 = vadd.f32 0.0, %v2160
        %v2162 = vpop.f32.mrf.mxu0
        %v2163 = vadd.f32 0.0, %v2162
        %2164 = vmatmul.bf16.gmra.mxu0 %v2139
        %v2165 = vpop.f32.mrf.mxu0
        %v2166 = vadd.f32 0.0, %v2165
        %v2167 = vpop.f32.mrf.mxu0
        %v2168 = vadd.f32 0.0, %v2167
        %2169 = vdwg.mxu0
        %v2170 = vpack.c.bf16 %v2033, %v2032
        %v2171 = vsub.f32 0.0, %v741
        %v2172 = vsub.f32 0.0, %v743
        %2173 = vset.pattern.permute.xlu0 65
        %2174 = vperm.xlu0 %2173, %v846
        %v2175 = vpop.permute.xlu0 %2174
        %2177 = vset.pattern.permute.xlu0 65
        %2178 = vperm.xlu0 %2177, %v847
        %v2179 = vpop.permute.xlu0 %2178
        %v2181 = vmul.f32 %v2171, %v2175
        %v2182 = vmul.f32 %v2172, %v2179
        %v2183 = vpack.c.bf16 %v2182, %v2181
        %2184 = vxpose.xlu0.c.b16.start [1/8] %v2170, 128
        %2185 = vxpose.xlu0.c.b16.cont [2/8] 0, 128
        %2186 = vxpose.xlu0.c.b16.cont [3/8] 0, 128
        %2187 = vxpose.xlu0.c.b16.cont [4/8] 0, 128
        %2188 = vxpose.xlu0.c.b16.cont [5/8] 0, 128
        %2189 = vxpose.xlu0.c.b16.cont [6/8] 0, 128
        %2190 = vxpose.xlu0.c.b16.cont [7/8] 0, 128
        %2191 = vxpose.xlu0.c.b16.end [8/8] 0, 128
        %v2192 = vpop.trf.xlu0
        %v2193 = vpop.trf.xlu0
        %v2194 = vpop.trf.xlu0
        %v2195 = vpop.trf.xlu0
        %v2196 = vpop.trf.xlu0
        %v2197 = vpop.trf.xlu0
        %v2198 = vpop.trf.xlu0
        %v2199 = vpop.trf.xlu0
        %v2201 = vsel %vm1013, %v2192, 0
        %v2204 = vsel %vm1013, %v2193, 0
        %v2207 = vsel %vm1013, %v2194, 0
        %v2210 = vsel %vm1013, %v2195, 0
        %2212 = vmatpush.bf16.msra.mxu0 0
        %2213 = vmatpush.bf16.msra.mxu0 0
        %2214 = vmatpush.bf16.msra.mxu0 0
        %2215 = vmatpush.bf16.msra.mxu0 0
        %2216 = vmatpush.bf16.msra.mxu0 0
        %2217 = vmatpush.bf16.msra.mxu0 0
        %2218 = vmatpush.bf16.msra.mxu0 0
        %2219 = vmatpush.bf16.msra.mxu0 %v2183
        %2220 = vmatmul.bf16.gmra.mxu0 %v2201
        %v2221 = vpop.f32.mrf.mxu0
        %v2222 = vadd.f32 0.0, %v2221
        %v2223 = vpop.f32.mrf.mxu0
        %v2224 = vadd.f32 0.0, %v2223
        %2225 = vmatmul.bf16.gmra.mxu0 %v2204
        %v2226 = vpop.f32.mrf.mxu0
        %v2227 = vadd.f32 0.0, %v2226
        %v2228 = vpop.f32.mrf.mxu0
        %v2229 = vadd.f32 0.0, %v2228
        %2230 = vmatmul.bf16.gmra.mxu0 %v2207
        %v2231 = vpop.f32.mrf.mxu0
        %v2232 = vadd.f32 0.0, %v2231
        %v2233 = vpop.f32.mrf.mxu0
        %v2234 = vadd.f32 0.0, %v2233
        %2235 = vmatmul.bf16.gmra.mxu0 %v2210
        %v2236 = vpop.f32.mrf.mxu0
        %v2237 = vadd.f32 0.0, %v2236
        %v2238 = vpop.f32.mrf.mxu0
        %v2239 = vadd.f32 0.0, %v2238
        %2240 = vdwg.mxu0
        %v2241 = vsub.f32 %v928, %v2151
        %v2242 = vsub.f32 %v929, %v2153
        %v2243 = vsub.f32 %v930, %v2156
        %v2244 = vsub.f32 %v931, %v2158
        %v2245 = vsub.f32 %v932, %v2161
        %v2246 = vsub.f32 %v933, %v2163
        %v2247 = vsub.f32 %v934, %v2166
        %v2248 = vsub.f32 %v935, %v2168
        %v2249 = vsub.f32 %v944, %v2222
        %v2250 = vsub.f32 %v945, %v2224
        %v2251 = vsub.f32 %v946, %v2227
        %v2252 = vsub.f32 %v947, %v2229
        %v2253 = vsub.f32 %v948, %v2232
        %v2254 = vsub.f32 %v949, %v2234
        %v2255 = vsub.f32 %v950, %v2237
        %v2256 = vsub.f32 %v951, %v2239
        %v2257 = vpack.c.bf16 %v2242, %v2241
        %v2258 = vpack.c.bf16 %v2244, %v2243
        %v2259 = vpack.c.bf16 %v2246, %v2245
        %v2260 = vpack.c.bf16 %v2248, %v2247
        %v2261 = vpack.c.bf16 %v2250, %v2249
        %v2262 = vpack.c.bf16 %v2252, %v2251
        %v2263 = vpack.c.bf16 %v2254, %v2253
        %v2264 = vpack.c.bf16 %v2256, %v2255
        %v2266 = vsel %vm491, %v1961, 0
        %2268 = vmatpush.bf16.msra.mxu0 0
        %2269 = vmatpush.bf16.msra.mxu0 0
        %2270 = vmatpush.bf16.msra.mxu0 0
        %2271 = vmatpush.bf16.msra.mxu0 0
        %2272 = vmatpush.bf16.msra.mxu0 %v2260
        %2273 = vmatpush.bf16.msra.mxu0 %v2259
        %2274 = vmatpush.bf16.msra.mxu0 %v2258
        %2275 = vmatpush.bf16.msra.mxu0 %v2257
        %2276 = vmatmul.bf16.gmra.mxu0 %v2266
        %v2277 = vpop.f32.mrf.mxu0
        %v2278 = vadd.f32 0.0, %v2277
        %v2279 = vpop.f32.mrf.mxu0
        %v2280 = vadd.f32 0.0, %v2279
        %2281 = vdwg.mxu0
        %v2282 = vxor.u32 %v2278, 2147483648
        %v2283 = vxor.u32 %v2280, 2147483648
        %v2284 = vmul.f32 %v2282, 1.442695
        %v2285 = vpow.pop %v2284
        %v2286 = vmul.f32 %v2283, 1.442695
        %v2287 = vpow.pop %v2286
        %v2288 = vadd.f32 %v2285, 1.0
        %v2289 = vadd.f32 %v2287, 1.0
        %v2290 = vrcp.pop %v2288
        %v2291 = vmul.f32 %v2288, %v2290
        %v2292 = vsub.f32 1.0, %v2291
        %v2293 = vmul.f32 %v2290, %v2292
        %v2294 = vadd.f32 %v2290, %v2293
        %vm2295 = vweird.f32 %v2288
        %vm2296 = vweird.f32 %v2290
        %vm2297 = vmor %vm2295, %vm2296
        %v2298 = vsel %vm2297, %v2290, %v2294
        %v2299 = vand.u32 2147483647, %v2288
        %vm2300 = vcmp.eq.f32.partialorder %v2299, 8.507059e+37
        %v2301 = vand.u32 %v2288, 2147483648
        %v2302 = vor.u32 1.1754944e-38, %v2301
        %v2303 = vsel %vm2300, %v2302, %v2298
        %v2304 = vmul.f32 1.0, %v2303
        %v2305 = vrcp.pop %v2289
        %v2306 = vmul.f32 %v2289, %v2305
        %v2307 = vsub.f32 1.0, %v2306
        %v2308 = vmul.f32 %v2305, %v2307
        %v2309 = vadd.f32 %v2305, %v2308
        %vm2310 = vweird.f32 %v2289
        %vm2311 = vweird.f32 %v2305
        %vm2312 = vmor %vm2310, %vm2311
        %v2313 = vsel %vm2312, %v2305, %v2309
        %v2314 = vand.u32 2147483647, %v2289
        %vm2315 = vcmp.eq.f32.partialorder %v2314, 8.507059e+37
        %v2316 = vand.u32 %v2289, 2147483648
        %v2317 = vor.u32 1.1754944e-38, %v2316
        %v2318 = vsel %vm2315, %v2317, %v2313
        %v2319 = vmul.f32 1.0, %v2318
        %v2320 = vmul.f32 %v2278, %v2304
        %v2321 = vmul.f32 %v2280, %v2319
        %2324 = vrot.lane.b32.xlu0 %v2278, 64
        %v2325 = vpop.permute.xlu0 %2324
        %2326 = vrot.lane.b32.xlu0 %v2280, 64
        %v2327 = vpop.permute.xlu0 %2326
        %v2330 = vmul.f32 %v2320, %v2325
        %v2331 = vmul.f32 %v2321, %v2327
        %v2332 = vpack.c.bf16 %v2331, %v2330
        %v2334 = vsel %vm491, %v2332, 0
        %2336 = vmatpush.bf16.msra.mxu0 0
        %2337 = vmatpush.bf16.msra.mxu0 0
        %2338 = vmatpush.bf16.msra.mxu0 0
        %2339 = vmatpush.bf16.msra.mxu0 0
        %2340 = vmatpush.bf16.msra.mxu0 %v2264
        %2341 = vmatpush.bf16.msra.mxu0 %v2263
        %2342 = vmatpush.bf16.msra.mxu0 %v2262
        %2343 = vmatpush.bf16.msra.mxu0 %v2261
        %2344 = vmatmul.bf16.gmra.mxu0 %v2334
        %v2345 = vpop.f32.mrf.mxu0
        %v2346 = vadd.f32 0.0, %v2345
        %v2347 = vpop.f32.mrf.mxu0
        %v2348 = vadd.f32 0.0, %v2347
        %2349 = vdwg.mxu0
        %v2350 = vmul.f32 %v2346, %v2346
        %v2351 = vmul.f32 %v2348, %v2348
        %v2352 = vsel %vm491, %v2350, 0.0
        %2353 = vadd.xlane.f32.xlu0 %v2352
        %v2354 = vpop.xlane.xlu0 %2353
        %v2355 = vsel %vm491, %v2351, 0.0
        %2356 = vadd.xlane.f32.xlu0 %v2355
        %v2357 = vpop.xlane.xlu0 %2356
        %v2358 = vmul.f32 %v2354, %v522
        %v2359 = vmul.f32 %v2357, %v522
        %v2360 = vadd.f32 %v2358, 1e-06
        %v2361 = vadd.f32 %v2359, 1e-06
        %v2362 = vrsqrt.pop %v2360
        %v2363 = vmul.f32 %v2362, %v2360
        %v2364 = vmul.f32 %v2363, %v2362
        %v2365 = vmul.f32 0.5, %v2364
        %v2366 = vsub.f32 1.5, %v2365
        %v2367 = vmul.f32 %v2362, %v2366
        %vm2368 = vweird.f32 %v2360
        %vm2369 = vweird.f32 %v2362
        %vm2370 = vmor %vm2368, %vm2369
        %v2371 = vsel %vm2370, %v2362, %v2367
        %v2372 = vrsqrt.pop %v2361
        %v2373 = vmul.f32 %v2372, %v2361
        %v2374 = vmul.f32 %v2373, %v2372
        %v2375 = vmul.f32 0.5, %v2374
        %v2376 = vsub.f32 1.5, %v2375
        %v2377 = vmul.f32 %v2372, %v2376
        %vm2378 = vweird.f32 %v2361
        %vm2379 = vweird.f32 %v2372
        %vm2380 = vmor %vm2378, %vm2379
        %v2381 = vsel %vm2380, %v2372, %v2377
        %v2382 = vmul.f32 %v2346, %v2371
        %v2383 = vmul.f32 %v2348, %v2381
        %v2384 = vperm.slane %v956, 0
        %v2385 = vmul.f32 %v2382, %v2384
        %v2386 = vmul.f32 %v2383, %v2384
        %2387 = vst.msk [vmem:[#allocation2] sm:$0xff] %vm491, %v2385
        %2388 = vst.msk [vmem:[#allocation2 + $0x8] sm:$0xff] %vm491, %v2386
        %v2389 = vmul.f32 %v717, %v717
        %v2390 = vmul.f32 %v719, %v719
        %v2391 = vsel %vm491, %v2389, 0.0
        %2392 = vadd.xlane.f32.xlu0 %v2391
        %v2393 = vpop.xlane.xlu0 %2392
        %v2394 = vsel %vm491, %v2390, 0.0
        %2395 = vadd.xlane.f32.xlu0 %v2394
        %v2396 = vpop.xlane.xlu0 %2395
        %v2397 = vadd.f32 %v2393, 1e-06
        %v2398 = vadd.f32 %v2396, 1e-06
        %v2399 = vrsqrt.pop %v2397
        %v2400 = vmul.f32 %v2399, %v2397
        %v2401 = vmul.f32 %v2400, %v2399
        %v2402 = vmul.f32 0.5, %v2401
        %v2403 = vsub.f32 1.5, %v2402
        %v2404 = vmul.f32 %v2399, %v2403
        %vm2405 = vweird.f32 %v2397
        %vm2406 = vweird.f32 %v2399
        %vm2407 = vmor %vm2405, %vm2406
        %v2408 = vsel %vm2407, %v2399, %v2404
        %v2409 = vrsqrt.pop %v2398
        %v2410 = vmul.f32 %v2409, %v2398
        %v2411 = vmul.f32 %v2410, %v2409
        %v2412 = vmul.f32 0.5, %v2411
        %v2413 = vsub.f32 1.5, %v2412
        %v2414 = vmul.f32 %v2409, %v2413
        %vm2415 = vweird.f32 %v2398
        %vm2416 = vweird.f32 %v2409
        %vm2417 = vmor %vm2415, %vm2416
        %v2418 = vsel %vm2417, %v2409, %v2414
        %v2419 = vmul.f32 %v717, %v2408
        %v2420 = vmul.f32 %v719, %v2418
        %2423 = vrot.lane.b32.xlu0 %v2389, 64
        %v2424 = vpop.permute.xlu0 %2423
        %2425 = vrot.lane.b32.xlu0 %v2390, 64
        %v2426 = vpop.permute.xlu0 %2425
        %v2429 = vsel %vm491, %v2424, 0.0
        %2430 = vadd.xlane.f32.xlu0 %v2429
        %v2431 = vpop.xlane.xlu0 %2430
        %v2432 = vsel %vm491, %v2426, 0.0
        %2433 = vadd.xlane.f32.xlu0 %v2432
        %v2434 = vpop.xlane.xlu0 %2433
        %v2435 = vadd.f32 %v2431, 1e-06
        %v2436 = vadd.f32 %v2434, 1e-06
        %v2437 = vrsqrt.pop %v2435
        %v2438 = vmul.f32 %v2437, %v2435
        %v2439 = vmul.f32 %v2438, %v2437
        %v2440 = vmul.f32 0.5, %v2439
        %v2441 = vsub.f32 1.5, %v2440
        %v2442 = vmul.f32 %v2437, %v2441
        %vm2443 = vweird.f32 %v2435
        %vm2444 = vweird.f32 %v2437
        %vm2445 = vmor %vm2443, %vm2444
        %v2446 = vsel %vm2445, %v2437, %v2442
        %v2447 = vrsqrt.pop %v2436
        %v2448 = vmul.f32 %v2447, %v2436
        %v2449 = vmul.f32 %v2448, %v2447
        %v2450 = vmul.f32 0.5, %v2449
        %v2451 = vsub.f32 1.5, %v2450
        %v2452 = vmul.f32 %v2447, %v2451
        %vm2453 = vweird.f32 %v2436
        %vm2454 = vweird.f32 %v2447
        %vm2455 = vmor %vm2453, %vm2454
        %v2456 = vsel %vm2455, %v2447, %v2452
        %v2457 = vmul.f32 %v717, %v2446
        %v2458 = vmul.f32 %v719, %v2456
        %v2459 = vpack.c.bf16 %v2420, %v2419
        %v2460 = vpack.c.bf16 %v2458, %v2457
        %v2461 = vpack.c.bf16 %v748, %v746
        %2463 = vrot.lane.b32.xlu0 %v2460, 64
        %v2464 = vpop.permute.xlu0 %2463
        %v2466 = vsel %vm491, %v2464, 0
        %2468 = vmatpush.bf16.msra.mxu0 0
        %2469 = vmatpush.bf16.msra.mxu0 0
        %2470 = vmatpush.bf16.msra.mxu0 0
        %2471 = vmatpush.bf16.msra.mxu0 0
        %2472 = vmatpush.bf16.msra.mxu0 %v2260
        %2473 = vmatpush.bf16.msra.mxu0 %v2259
        %2474 = vmatpush.bf16.msra.mxu0 %v2258
        %2475 = vmatpush.bf16.msra.mxu0 %v2257
        %2476 = vmatmul.bf16.gmra.mxu0 %v2466
        %v2477 = vpop.f32.mrf.mxu0
        %v2478 = vadd.f32 0.0, %v2477
        %v2479 = vpop.f32.mrf.mxu0
        %v2480 = vadd.f32 0.0, %v2479
        %2481 = vdwg.mxu0
        %v2482 = vxor.u32 %v2478, 2147483648
        %v2483 = vxor.u32 %v2480, 2147483648
        %v2484 = vmul.f32 %v2482, 1.442695
        %v2485 = vpow.pop %v2484
        %v2486 = vmul.f32 %v2483, 1.442695
        %v2487 = vpow.pop %v2486
        %v2488 = vadd.f32 %v2485, 1.0
        %v2489 = vadd.f32 %v2487, 1.0
        %v2490 = vrcp.pop %v2488
        %v2491 = vmul.f32 %v2488, %v2490
        %v2492 = vsub.f32 1.0, %v2491
        %v2493 = vmul.f32 %v2490, %v2492
        %v2494 = vadd.f32 %v2490, %v2493
        %vm2495 = vweird.f32 %v2488
        %vm2496 = vweird.f32 %v2490
        %vm2497 = vmor %vm2495, %vm2496
        %v2498 = vsel %vm2497, %v2490, %v2494
        %v2499 = vand.u32 2147483647, %v2488
        %vm2500 = vcmp.eq.f32.partialorder %v2499, 8.507059e+37
        %v2501 = vand.u32 %v2488, 2147483648
        %v2502 = vor.u32 1.1754944e-38, %v2501
        %v2503 = vsel %vm2500, %v2502, %v2498
        %v2504 = vmul.f32 1.0, %v2503
        %v2505 = vrcp.pop %v2489
        %v2506 = vmul.f32 %v2489, %v2505
        %v2507 = vsub.f32 1.0, %v2506
        %v2508 = vmul.f32 %v2505, %v2507
        %v2509 = vadd.f32 %v2505, %v2508
        %vm2510 = vweird.f32 %v2489
        %vm2511 = vweird.f32 %v2505
        %vm2512 = vmor %vm2510, %vm2511
        %v2513 = vsel %vm2512, %v2505, %v2509
        %v2514 = vand.u32 2147483647, %v2489
        %vm2515 = vcmp.eq.f32.partialorder %v2514, 8.507059e+37
        %v2516 = vand.u32 %v2489, 2147483648
        %v2517 = vor.u32 1.1754944e-38, %v2516
        %v2518 = vsel %vm2515, %v2517, %v2513
        %v2519 = vmul.f32 1.0, %v2518
        %v2520 = vmul.f32 %v2478, %v2504
        %v2521 = vmul.f32 %v2480, %v2519
        %2524 = vrot.lane.b32.xlu0 %v2478, 64
        %v2525 = vpop.permute.xlu0 %2524
        %2526 = vrot.lane.b32.xlu0 %v2480, 64
        %v2527 = vpop.permute.xlu0 %2526
        %v2530 = vmul.f32 %v2520, %v2525
        %v2531 = vmul.f32 %v2521, %v2527
        %v2533 = vsel %vm491, %v2461, 0
        %v2536 = vsel %vm491, %v2261, 0
        %v2539 = vsel %vm491, %v2262, 0
        %v2542 = vsel %vm491, %v2263, 0
        %v2545 = vsel %vm491, %v2264, 0
        %2547 = vmatpush.bf16.xpose.msra.mxu0 0
        %2548 = vmatpush.bf16.xpose.msra.mxu0 0
        %2549 = vmatpush.bf16.xpose.msra.mxu0 0
        %2550 = vmatpush.bf16.xpose.msra.mxu0 0
        %2551 = vmatpush.bf16.xpose.msra.mxu0 %v2545
        %2552 = vmatpush.bf16.xpose.msra.mxu0 %v2542
        %2553 = vmatpush.bf16.xpose.msra.mxu0 %v2539
        %2554 = vmatpush.bf16.xpose.msra.mxu0 %v2536
        %2555 = vmatmul.bf16.gmra.mxu0 %v2533
        %v2556 = vpop.f32.mrf.mxu0
        %v2557 = vadd.f32 0.0, %v2556
        %v2558 = vpop.f32.mrf.mxu0
        %v2559 = vadd.f32 0.0, %v2558
        %2560 = vdwg.mxu0
        %v2561 = vsub.f32 0.0, %v2557
        %v2562 = vsub.f32 0.0, %v2559
        %v2563 = vsub.f32 1.0, %v2504
        %v2564 = vsub.f32 1.0, %v2519
        %v2565 = vmul.f32 %v2478, %v2563
        %v2566 = vmul.f32 %v2480, %v2564
        %v2567 = vadd.f32 %v2565, 1.0
        %v2568 = vadd.f32 %v2566, 1.0
        %v2569 = vmul.f32 %v2504, %v2567
        %v2570 = vmul.f32 %v2519, %v2568
        %v2571 = vmul.f32 %v2561, %v2525
        %v2572 = vmul.f32 %v2562, %v2527
        %v2573 = vmul.f32 %v2571, %v2569
        %v2574 = vmul.f32 %v2572, %v2570
        %v2575 = vmul.f32 %v2561, %v2520
        %v2576 = vmul.f32 %v2562, %v2521
        %2578 = vset.pattern.permute.xlu0 64
        %2579 = vperm.xlu0 %2578, %v848
        %v2580 = vpop.permute.xlu0 %2579
        %2583 = vset.pattern.permute.xlu0 64
        %2584 = vperm.xlu0 %2583, %v849
        %v2585 = vpop.permute.xlu0 %2584
        %v2587 = vmul.f32 %v2573, %v2580
        %v2588 = vmul.f32 %v2574, %v2585
        %2589 = vset.pattern.permute.xlu0 66
        %2590 = vperm.xlu0 %2589, %v848
        %v2591 = vpop.permute.xlu0 %2590
        %2593 = vset.pattern.permute.xlu0 66
        %2594 = vperm.xlu0 %2593, %v849
        %v2595 = vpop.permute.xlu0 %2594
        %v2597 = vmul.f32 %v2575, %v2591
        %v2598 = vmul.f32 %v2576, %v2595
        %2601 = vrot.lane.b32.xlu0 %v2597, 64
        %v2602 = vpop.permute.xlu0 %2601
        %2603 = vrot.lane.b32.xlu0 %v2598, 64
        %v2604 = vpop.permute.xlu0 %2603
        %v2607 = vsel %vm491, %v2587, %v2602
        %v2608 = vsel %vm491, %v2588, %v2604
        %v2609 = vpack.c.bf16 %v2608, %v2607
        %2611 = vxpose.xlu0.c.b16.start [1/8] %v2464, 128
        %2612 = vxpose.xlu0.c.b16.cont [2/8] 0, 128
        %2613 = vxpose.xlu0.c.b16.cont [3/8] 0, 128
        %2614 = vxpose.xlu0.c.b16.cont [4/8] 0, 128
        %2615 = vxpose.xlu0.c.b16.cont [5/8] 0, 128
        %2616 = vxpose.xlu0.c.b16.cont [6/8] 0, 128
        %2617 = vxpose.xlu0.c.b16.cont [7/8] 0, 128
        %2618 = vxpose.xlu0.c.b16.end [8/8] 0, 128
        %v2619 = vpop.trf.xlu0
        %v2620 = vpop.trf.xlu0
        %v2621 = vpop.trf.xlu0
        %v2622 = vpop.trf.xlu0
        %v2623 = vpop.trf.xlu0
        %v2624 = vpop.trf.xlu0
        %v2625 = vpop.trf.xlu0
        %v2626 = vpop.trf.xlu0
        %v2628 = vsel %vm1013, %v2619, 0
        %v2631 = vsel %vm1013, %v2620, 0
        %v2634 = vsel %vm1013, %v2621, 0
        %v2637 = vsel %vm1013, %v2622, 0
        %2639 = vmatpush.bf16.msra.mxu0 0
        %2640 = vmatpush.bf16.msra.mxu0 0
        %2641 = vmatpush.bf16.msra.mxu0 0
        %2642 = vmatpush.bf16.msra.mxu0 0
        %2643 = vmatpush.bf16.msra.mxu0 0
        %2644 = vmatpush.bf16.msra.mxu0 0
        %2645 = vmatpush.bf16.msra.mxu0 0
        %2646 = vmatpush.bf16.msra.mxu0 %v2609
        %2647 = vmatmul.bf16.gmra.mxu0 %v2628
        %v2648 = vpop.f32.mrf.mxu0
        %v2649 = vadd.f32 0.0, %v2648
        %v2650 = vpop.f32.mrf.mxu0
        %v2651 = vadd.f32 0.0, %v2650
        %2652 = vmatmul.bf16.gmra.mxu0 %v2631
        %v2653 = vpop.f32.mrf.mxu0
        %v2654 = vadd.f32 0.0, %v2653
        %v2655 = vpop.f32.mrf.mxu0
        %v2656 = vadd.f32 0.0, %v2655
        %2657 = vmatmul.bf16.gmra.mxu0 %v2634
        %v2658 = vpop.f32.mrf.mxu0
        %v2659 = vadd.f32 0.0, %v2658
        %v2660 = vpop.f32.mrf.mxu0
        %v2661 = vadd.f32 0.0, %v2660
        %2662 = vmatmul.bf16.gmra.mxu0 %v2637
        %v2663 = vpop.f32.mrf.mxu0
        %v2664 = vadd.f32 0.0, %v2663
        %v2665 = vpop.f32.mrf.mxu0
        %v2666 = vadd.f32 0.0, %v2665
        %2667 = vdwg.mxu0
        %v2668 = vpack.c.bf16 %v2531, %v2530
        %v2669 = vsub.f32 0.0, %v746
        %v2670 = vsub.f32 0.0, %v748
        %2671 = vset.pattern.permute.xlu0 65
        %2672 = vperm.xlu0 %2671, %v848
        %v2673 = vpop.permute.xlu0 %2672
        %2675 = vset.pattern.permute.xlu0 65
        %2676 = vperm.xlu0 %2675, %v849
        %v2677 = vpop.permute.xlu0 %2676
        %v2679 = vmul.f32 %v2669, %v2673
        %v2680 = vmul.f32 %v2670, %v2677
        %v2681 = vpack.c.bf16 %v2680, %v2679
        %2682 = vxpose.xlu0.c.b16.start [1/8] %v2668, 128
        %2683 = vxpose.xlu0.c.b16.cont [2/8] 0, 128
        %2684 = vxpose.xlu0.c.b16.cont [3/8] 0, 128
        %2685 = vxpose.xlu0.c.b16.cont [4/8] 0, 128
        %2686 = vxpose.xlu0.c.b16.cont [5/8] 0, 128
        %2687 = vxpose.xlu0.c.b16.cont [6/8] 0, 128
        %2688 = vxpose.xlu0.c.b16.cont [7/8] 0, 128
        %2689 = vxpose.xlu0.c.b16.end [8/8] 0, 128
        %v2690 = vpop.trf.xlu0
        %v2691 = vpop.trf.xlu0
        %v2692 = vpop.trf.xlu0
        %v2693 = vpop.trf.xlu0
        %v2694 = vpop.trf.xlu0
        %v2695 = vpop.trf.xlu0
        %v2696 = vpop.trf.xlu0
        %v2697 = vpop.trf.xlu0
        %v2699 = vsel %vm1013, %v2690, 0
        %v2702 = vsel %vm1013, %v2691, 0
        %v2705 = vsel %vm1013, %v2692, 0
        %v2708 = vsel %vm1013, %v2693, 0
        %2710 = vmatpush.bf16.msra.mxu0 0
        %2711 = vmatpush.bf16.msra.mxu0 0
        %2712 = vmatpush.bf16.msra.mxu0 0
        %2713 = vmatpush.bf16.msra.mxu0 0
        %2714 = vmatpush.bf16.msra.mxu0 0
        %2715 = vmatpush.bf16.msra.mxu0 0
        %2716 = vmatpush.bf16.msra.mxu0 0
        %2717 = vmatpush.bf16.msra.mxu0 %v2681
        %2718 = vmatmul.bf16.gmra.mxu0 %v2699
        %v2719 = vpop.f32.mrf.mxu0
        %v2720 = vadd.f32 0.0, %v2719
        %v2721 = vpop.f32.mrf.mxu0
        %v2722 = vadd.f32 0.0, %v2721
        %2723 = vmatmul.bf16.gmra.mxu0 %v2702
        %v2724 = vpop.f32.mrf.mxu0
        %v2725 = vadd.f32 0.0, %v2724
        %v2726 = vpop.f32.mrf.mxu0
        %v2727 = vadd.f32 0.0, %v2726
        %2728 = vmatmul.bf16.gmra.mxu0 %v2705
        %v2729 = vpop.f32.mrf.mxu0
        %v2730 = vadd.f32 0.0, %v2729
        %v2731 = vpop.f32.mrf.mxu0
        %v2732 = vadd.f32 0.0, %v2731
        %2733 = vmatmul.bf16.gmra.mxu0 %v2708
        %v2734 = vpop.f32.mrf.mxu0
        %v2735 = vadd.f32 0.0, %v2734
        %v2736 = vpop.f32.mrf.mxu0
        %v2737 = vadd.f32 0.0, %v2736
        %2738 = vdwg.mxu0
        %v2739 = vsub.f32 %v2241, %v2649
        %v2740 = vsub.f32 %v2242, %v2651
        %v2741 = vsub.f32 %v2243, %v2654
        %v2742 = vsub.f32 %v2244, %v2656
        %v2743 = vsub.f32 %v2245, %v2659
        %v2744 = vsub.f32 %v2246, %v2661
        %v2745 = vsub.f32 %v2247, %v2664
        %v2746 = vsub.f32 %v2248, %v2666
        %v2747 = vsub.f32 %v2249, %v2720
        %v2748 = vsub.f32 %v2250, %v2722
        %v2749 = vsub.f32 %v2251, %v2725
        %v2750 = vsub.f32 %v2252, %v2727
        %v2751 = vsub.f32 %v2253, %v2730
        %v2752 = vsub.f32 %v2254, %v2732
        %v2753 = vsub.f32 %v2255, %v2735
        %v2754 = vsub.f32 %v2256, %v2737
        %v2755 = vpack.c.bf16 %v2740, %v2739
        %v2756 = vpack.c.bf16 %v2742, %v2741
        %v2757 = vpack.c.bf16 %v2744, %v2743
        %v2758 = vpack.c.bf16 %v2746, %v2745
        %v2759 = vpack.c.bf16 %v2748, %v2747
        %v2760 = vpack.c.bf16 %v2750, %v2749
        %v2761 = vpack.c.bf16 %v2752, %v2751
        %v2762 = vpack.c.bf16 %v2754, %v2753
        %v2764 = vsel %vm491, %v2459, 0
        %2766 = vmatpush.bf16.msra.mxu0 0
        %2767 = vmatpush.bf16.msra.mxu0 0
        %2768 = vmatpush.bf16.msra.mxu0 0
        %2769 = vmatpush.bf16.msra.mxu0 0
        %2770 = vmatpush.bf16.msra.mxu0 %v2758
        %2771 = vmatpush.bf16.msra.mxu0 %v2757
        %2772 = vmatpush.bf16.msra.mxu0 %v2756
        %2773 = vmatpush.bf16.msra.mxu0 %v2755
        %2774 = vmatmul.bf16.gmra.mxu0 %v2764
        %v2775 = vpop.f32.mrf.mxu0
        %v2776 = vadd.f32 0.0, %v2775
        %v2777 = vpop.f32.mrf.mxu0
        %v2778 = vadd.f32 0.0, %v2777
        %2779 = vdwg.mxu0
        %v2780 = vxor.u32 %v2776, 2147483648
        %v2781 = vxor.u32 %v2778, 2147483648
        %v2782 = vmul.f32 %v2780, 1.442695
        %v2783 = vpow.pop %v2782
        %v2784 = vmul.f32 %v2781, 1.442695
        %v2785 = vpow.pop %v2784
        %v2786 = vadd.f32 %v2783, 1.0
        %v2787 = vadd.f32 %v2785, 1.0
        %v2788 = vrcp.pop %v2786
        %v2789 = vmul.f32 %v2786, %v2788
        %v2790 = vsub.f32 1.0, %v2789
        %v2791 = vmul.f32 %v2788, %v2790
        %v2792 = vadd.f32 %v2788, %v2791
        %vm2793 = vweird.f32 %v2786
        %vm2794 = vweird.f32 %v2788
        %vm2795 = vmor %vm2793, %vm2794
        %v2796 = vsel %vm2795, %v2788, %v2792
        %v2797 = vand.u32 2147483647, %v2786
        %vm2798 = vcmp.eq.f32.partialorder %v2797, 8.507059e+37
        %v2799 = vand.u32 %v2786, 2147483648
        %v2800 = vor.u32 1.1754944e-38, %v2799
        %v2801 = vsel %vm2798, %v2800, %v2796
        %v2802 = vmul.f32 1.0, %v2801
        %v2803 = vrcp.pop %v2787
        %v2804 = vmul.f32 %v2787, %v2803
        %v2805 = vsub.f32 1.0, %v2804
        %v2806 = vmul.f32 %v2803, %v2805
        %v2807 = vadd.f32 %v2803, %v2806
        %vm2808 = vweird.f32 %v2787
        %vm2809 = vweird.f32 %v2803
        %vm2810 = vmor %vm2808, %vm2809
        %v2811 = vsel %vm2810, %v2803, %v2807
        %v2812 = vand.u32 2147483647, %v2787
        %vm2813 = vcmp.eq.f32.partialorder %v2812, 8.507059e+37
        %v2814 = vand.u32 %v2787, 2147483648
        %v2815 = vor.u32 1.1754944e-38, %v2814
        %v2816 = vsel %vm2813, %v2815, %v2811
        %v2817 = vmul.f32 1.0, %v2816
        %v2818 = vmul.f32 %v2776, %v2802
        %v2819 = vmul.f32 %v2778, %v2817
        %2822 = vrot.lane.b32.xlu0 %v2776, 64
        %v2823 = vpop.permute.xlu0 %2822
        %2824 = vrot.lane.b32.xlu0 %v2778, 64
        %v2825 = vpop.permute.xlu0 %2824
        %v2828 = vmul.f32 %v2818, %v2823
        %v2829 = vmul.f32 %v2819, %v2825
        %v2830 = vpack.c.bf16 %v2829, %v2828
        %v2832 = vsel %vm491, %v2830, 0
        %2834 = vmatpush.bf16.msra.mxu0 0
        %2835 = vmatpush.bf16.msra.mxu0 0
        %2836 = vmatpush.bf16.msra.mxu0 0
        %2837 = vmatpush.bf16.msra.mxu0 0
        %2838 = vmatpush.bf16.msra.mxu0 %v2762
        %2839 = vmatpush.bf16.msra.mxu0 %v2761
        %2840 = vmatpush.bf16.msra.mxu0 %v2760
        %2841 = vmatpush.bf16.msra.mxu0 %v2759
        %2842 = vmatmul.bf16.gmra.mxu0 %v2832
        %v2843 = vpop.f32.mrf.mxu0
        %v2844 = vadd.f32 0.0, %v2843
        %v2845 = vpop.f32.mrf.mxu0
        %v2846 = vadd.f32 0.0, %v2845
        %2847 = vdwg.mxu0
        %v2848 = vmul.f32 %v2844, %v2844
        %v2849 = vmul.f32 %v2846, %v2846
        %v2850 = vsel %vm491, %v2848, 0.0
        %2851 = vadd.xlane.f32.xlu0 %v2850
        %v2852 = vpop.xlane.xlu0 %2851
        %v2853 = vsel %vm491, %v2849, 0.0
        %2854 = vadd.xlane.f32.xlu0 %v2853
        %v2855 = vpop.xlane.xlu0 %2854
        %v2856 = vmul.f32 %v2852, %v522
        %v2857 = vmul.f32 %v2855, %v522
        %v2858 = vadd.f32 %v2856, 1e-06
        %v2859 = vadd.f32 %v2857, 1e-06
        %v2860 = vrsqrt.pop %v2858
        %v2861 = vmul.f32 %v2860, %v2858
        %v2862 = vmul.f32 %v2861, %v2860
        %v2863 = vmul.f32 0.5, %v2862
        %v2864 = vsub.f32 1.5, %v2863
        %v2865 = vmul.f32 %v2860, %v2864
        %vm2866 = vweird.f32 %v2858
        %vm2867 = vweird.f32 %v2860
        %vm2868 = vmor %vm2866, %vm2867
        %v2869 = vsel %vm2868, %v2860, %v2865
        %v2870 = vrsqrt.pop %v2859
        %v2871 = vmul.f32 %v2870, %v2859
        %v2872 = vmul.f32 %v2871, %v2870
        %v2873 = vmul.f32 0.5, %v2872
        %v2874 = vsub.f32 1.5, %v2873
        %v2875 = vmul.f32 %v2870, %v2874
        %vm2876 = vweird.f32 %v2859
        %vm2877 = vweird.f32 %v2870
        %vm2878 = vmor %vm2876, %vm2877
        %v2879 = vsel %vm2878, %v2870, %v2875
        %v2880 = vmul.f32 %v2844, %v2869
        %v2881 = vmul.f32 %v2846, %v2879
        %v2882 = vmul.f32 %v2880, %v2384
        %v2883 = vmul.f32 %v2881, %v2384
        %2884 = vst.msk [vmem:[#allocation2 + $0x10] sm:$0xff] %vm491, %v2882
        %2885 = vst.msk [vmem:[#allocation2 + $0x18] sm:$0xff] %vm491, %v2883
        %v2886 = vmul.f32 %v722, %v722
        %v2887 = vmul.f32 %v724, %v724
        %v2888 = vsel %vm491, %v2886, 0.0
        %2889 = vadd.xlane.f32.xlu0 %v2888
        %v2890 = vpop.xlane.xlu0 %2889
        %v2891 = vsel %vm491, %v2887, 0.0
        %2892 = vadd.xlane.f32.xlu0 %v2891
        %v2893 = vpop.xlane.xlu0 %2892
        %v2894 = vadd.f32 %v2890, 1e-06
        %v2895 = vadd.f32 %v2893, 1e-06
        %v2896 = vrsqrt.pop %v2894
        %v2897 = vmul.f32 %v2896, %v2894
        %v2898 = vmul.f32 %v2897, %v2896
        %v2899 = vmul.f32 0.5, %v2898
        %v2900 = vsub.f32 1.5, %v2899
        %v2901 = vmul.f32 %v2896, %v2900
        %vm2902 = vweird.f32 %v2894
        %vm2903 = vweird.f32 %v2896
        %vm2904 = vmor %vm2902, %vm2903
        %v2905 = vsel %vm2904, %v2896, %v2901
        %v2906 = vrsqrt.pop %v2895
        %v2907 = vmul.f32 %v2906, %v2895
        %v2908 = vmul.f32 %v2907, %v2906
        %v2909 = vmul.f32 0.5, %v2908
        %v2910 = vsub.f32 1.5, %v2909
        %v2911 = vmul.f32 %v2906, %v2910
        %vm2912 = vweird.f32 %v2895
        %vm2913 = vweird.f32 %v2906
        %vm2914 = vmor %vm2912, %vm2913
        %v2915 = vsel %vm2914, %v2906, %v2911
        %v2916 = vmul.f32 %v722, %v2905
        %v2917 = vmul.f32 %v724, %v2915
        %2920 = vrot.lane.b32.xlu0 %v2886, 64
        %v2921 = vpop.permute.xlu0 %2920
        %2922 = vrot.lane.b32.xlu0 %v2887, 64
        %v2923 = vpop.permute.xlu0 %2922
        %v2926 = vsel %vm491, %v2921, 0.0
        %2927 = vadd.xlane.f32.xlu0 %v2926
        %v2928 = vpop.xlane.xlu0 %2927
        %v2929 = vsel %vm491, %v2923, 0.0
        %2930 = vadd.xlane.f32.xlu0 %v2929
        %v2931 = vpop.xlane.xlu0 %2930
        %v2932 = vadd.f32 %v2928, 1e-06
        %v2933 = vadd.f32 %v2931, 1e-06
        %v2934 = vrsqrt.pop %v2932
        %v2935 = vmul.f32 %v2934, %v2932
        %v2936 = vmul.f32 %v2935, %v2934
        %v2937 = vmul.f32 0.5, %v2936
        %v2938 = vsub.f32 1.5, %v2937
        %v2939 = vmul.f32 %v2934, %v2938
        %vm2940 = vweird.f32 %v2932
        %vm2941 = vweird.f32 %v2934
        %vm2942 = vmor %vm2940, %vm2941
        %v2943 = vsel %vm2942, %v2934, %v2939
        %v2944 = vrsqrt.pop %v2933
        %v2945 = vmul.f32 %v2944, %v2933
        %v2946 = vmul.f32 %v2945, %v2944
        %v2947 = vmul.f32 0.5, %v2946
        %v2948 = vsub.f32 1.5, %v2947
        %v2949 = vmul.f32 %v2944, %v2948
        %vm2950 = vweird.f32 %v2933
        %vm2951 = vweird.f32 %v2944
        %vm2952 = vmor %vm2950, %vm2951
        %v2953 = vsel %vm2952, %v2944, %v2949
        %v2954 = vmul.f32 %v722, %v2943
        %v2955 = vmul.f32 %v724, %v2953
        %v2956 = vpack.c.bf16 %v2917, %v2916
        %v2957 = vpack.c.bf16 %v2955, %v2954
        %v2958 = vpack.c.bf16 %v753, %v751
        %2960 = vrot.lane.b32.xlu0 %v2957, 64
        %v2961 = vpop.permute.xlu0 %2960
        %v2963 = vsel %vm491, %v2961, 0
        %2965 = vmatpush.bf16.msra.mxu0 0
        %2966 = vmatpush.bf16.msra.mxu0 0
        %2967 = vmatpush.bf16.msra.mxu0 0
        %2968 = vmatpush.bf16.msra.mxu0 0
        %2969 = vmatpush.bf16.msra.mxu0 %v2758
        %2970 = vmatpush.bf16.msra.mxu0 %v2757
        %2971 = vmatpush.bf16.msra.mxu0 %v2756
        %2972 = vmatpush.bf16.msra.mxu0 %v2755
        %2973 = vmatmul.bf16.gmra.mxu0 %v2963
        %v2974 = vpop.f32.mrf.mxu0
        %v2975 = vadd.f32 0.0, %v2974
        %v2976 = vpop.f32.mrf.mxu0
        %v2977 = vadd.f32 0.0, %v2976
        %2978 = vdwg.mxu0
        %v2979 = vxor.u32 %v2975, 2147483648
        %v2980 = vxor.u32 %v2977, 2147483648
        %v2981 = vmul.f32 %v2979, 1.442695
        %v2982 = vpow.pop %v2981
        %v2983 = vmul.f32 %v2980, 1.442695
        %v2984 = vpow.pop %v2983
        %v2985 = vadd.f32 %v2982, 1.0
        %v2986 = vadd.f32 %v2984, 1.0
        %v2987 = vrcp.pop %v2985
        %v2988 = vmul.f32 %v2985, %v2987
        %v2989 = vsub.f32 1.0, %v2988
        %v2990 = vmul.f32 %v2987, %v2989
        %v2991 = vadd.f32 %v2987, %v2990
        %vm2992 = vweird.f32 %v2985
        %vm2993 = vweird.f32 %v2987
        %vm2994 = vmor %vm2992, %vm2993
        %v2995 = vsel %vm2994, %v2987, %v2991
        %v2996 = vand.u32 2147483647, %v2985
        %vm2997 = vcmp.eq.f32.partialorder %v2996, 8.507059e+37
        %v2998 = vand.u32 %v2985, 2147483648
        %v2999 = vor.u32 1.1754944e-38, %v2998
        %v3000 = vsel %vm2997, %v2999, %v2995
        %v3001 = vmul.f32 1.0, %v3000
        %v3002 = vrcp.pop %v2986
        %v3003 = vmul.f32 %v2986, %v3002
        %v3004 = vsub.f32 1.0, %v3003
        %v3005 = vmul.f32 %v3002, %v3004
        %v3006 = vadd.f32 %v3002, %v3005
        %vm3007 = vweird.f32 %v2986
        %vm3008 = vweird.f32 %v3002
        %vm3009 = vmor %vm3007, %vm3008
        %v3010 = vsel %vm3009, %v3002, %v3006
        %v3011 = vand.u32 2147483647, %v2986
        %vm3012 = vcmp.eq.f32.partialorder %v3011, 8.507059e+37
        %v3013 = vand.u32 %v2986, 2147483648
        %v3014 = vor.u32 1.1754944e-38, %v3013
        %v3015 = vsel %vm3012, %v3014, %v3010
        %v3016 = vmul.f32 1.0, %v3015
        %v3017 = vmul.f32 %v2975, %v3001
        %v3018 = vmul.f32 %v2977, %v3016
        %3021 = vrot.lane.b32.xlu0 %v2975, 64
        %v3022 = vpop.permute.xlu0 %3021
        %3023 = vrot.lane.b32.xlu0 %v2977, 64
        %v3024 = vpop.permute.xlu0 %3023
        %v3027 = vmul.f32 %v3017, %v3022
        %v3028 = vmul.f32 %v3018, %v3024
        %v3030 = vsel %vm491, %v2958, 0
        %v3033 = vsel %vm491, %v2759, 0
        %v3036 = vsel %vm491, %v2760, 0
        %v3039 = vsel %vm491, %v2761, 0
        %v3042 = vsel %vm491, %v2762, 0
        %3044 = vmatpush.bf16.xpose.msra.mxu0 0
        %3045 = vmatpush.bf16.xpose.msra.mxu0 0
        %3046 = vmatpush.bf16.xpose.msra.mxu0 0
        %3047 = vmatpush.bf16.xpose.msra.mxu0 0
        %3048 = vmatpush.bf16.xpose.msra.mxu0 %v3042
        %3049 = vmatpush.bf16.xpose.msra.mxu0 %v3039
        %3050 = vmatpush.bf16.xpose.msra.mxu0 %v3036
        %3051 = vmatpush.bf16.xpose.msra.mxu0 %v3033
        %3052 = vmatmul.bf16.gmra.mxu0 %v3030
        %v3053 = vpop.f32.mrf.mxu0
        %v3054 = vadd.f32 0.0, %v3053
        %v3055 = vpop.f32.mrf.mxu0
        %v3056 = vadd.f32 0.0, %v3055
        %3057 = vdwg.mxu0
        %v3058 = vsub.f32 0.0, %v3054
        %v3059 = vsub.f32 0.0, %v3056
        %v3060 = vsub.f32 1.0, %v3001
        %v3061 = vsub.f32 1.0, %v3016
        %v3062 = vmul.f32 %v2975, %v3060
        %v3063 = vmul.f32 %v2977, %v3061
        %v3064 = vadd.f32 %v3062, 1.0
        %v3065 = vadd.f32 %v3063, 1.0
        %v3066 = vmul.f32 %v3001, %v3064
        %v3067 = vmul.f32 %v3016, %v3065
        %v3068 = vmul.f32 %v3058, %v3022
        %v3069 = vmul.f32 %v3059, %v3024
        %v3070 = vmul.f32 %v3068, %v3066
        %v3071 = vmul.f32 %v3069, %v3067
        %v3072 = vmul.f32 %v3058, %v3017
        %v3073 = vmul.f32 %v3059, %v3018
        %3075 = vset.pattern.permute.xlu0 64
        %3076 = vperm.xlu0 %3075, %v850
        %v3077 = vpop.permute.xlu0 %3076
        %3080 = vset.pattern.permute.xlu0 64
        %3081 = vperm.xlu0 %3080, %v851
        %v3082 = vpop.permute.xlu0 %3081
        %v3084 = vmul.f32 %v3070, %v3077
        %v3085 = vmul.f32 %v3071, %v3082
        %3086 = vset.pattern.permute.xlu0 66
        %3087 = vperm.xlu0 %3086, %v850
        %v3088 = vpop.permute.xlu0 %3087
        %3090 = vset.pattern.permute.xlu0 66
        %3091 = vperm.xlu0 %3090, %v851
        %v3092 = vpop.permute.xlu0 %3091
        %v3094 = vmul.f32 %v3072, %v3088
        %v3095 = vmul.f32 %v3073, %v3092
        %3098 = vrot.lane.b32.xlu0 %v3094, 64
        %v3099 = vpop.permute.xlu0 %3098
        %3100 = vrot.lane.b32.xlu0 %v3095, 64
        %v3101 = vpop.permute.xlu0 %3100
        %v3104 = vsel %vm491, %v3084, %v3099
        %v3105 = vsel %vm491, %v3085, %v3101
        %v3106 = vpack.c.bf16 %v3105, %v3104
        %3108 = vxpose.xlu0.c.b16.start [1/8] %v2961, 128
        %3109 = vxpose.xlu0.c.b16.cont [2/8] 0, 128
        %3110 = vxpose.xlu0.c.b16.cont [3/8] 0, 128
        %3111 = vxpose.xlu0.c.b16.cont [4/8] 0, 128
        %3112 = vxpose.xlu0.c.b16.cont [5/8] 0, 128
        %3113 = vxpose.xlu0.c.b16.cont [6/8] 0, 128
        %3114 = vxpose.xlu0.c.b16.cont [7/8] 0, 128
        %3115 = vxpose.xlu0.c.b16.end [8/8] 0, 128
        %v3116 = vpop.trf.xlu0
        %v3117 = vpop.trf.xlu0
        %v3118 = vpop.trf.xlu0
        %v3119 = vpop.trf.xlu0
        %v3120 = vpop.trf.xlu0
        %v3121 = vpop.trf.xlu0
        %v3122 = vpop.trf.xlu0
        %v3123 = vpop.trf.xlu0
        %v3125 = vsel %vm1013, %v3116, 0
        %v3128 = vsel %vm1013, %v3117, 0
        %v3131 = vsel %vm1013, %v3118, 0
        %v3134 = vsel %vm1013, %v3119, 0
        %3136 = vmatpush.bf16.msra.mxu0 0
        %3137 = vmatpush.bf16.msra.mxu0 0
        %3138 = vmatpush.bf16.msra.mxu0 0
        %3139 = vmatpush.bf16.msra.mxu0 0
        %3140 = vmatpush.bf16.msra.mxu0 0
        %3141 = vmatpush.bf16.msra.mxu0 0
        %3142 = vmatpush.bf16.msra.mxu0 0
        %3143 = vmatpush.bf16.msra.mxu0 %v3106
        %3144 = vmatmul.bf16.gmra.mxu0 %v3125
        %v3145 = vpop.f32.mrf.mxu0
        %v3146 = vadd.f32 0.0, %v3145
        %v3147 = vpop.f32.mrf.mxu0
        %v3148 = vadd.f32 0.0, %v3147
        %3149 = vmatmul.bf16.gmra.mxu0 %v3128
        %v3150 = vpop.f32.mrf.mxu0
        %v3151 = vadd.f32 0.0, %v3150
        %v3152 = vpop.f32.mrf.mxu0
        %v3153 = vadd.f32 0.0, %v3152
        %3154 = vmatmul.bf16.gmra.mxu0 %v3131
        %v3155 = vpop.f32.mrf.mxu0
        %v3156 = vadd.f32 0.0, %v3155
        %v3157 = vpop.f32.mrf.mxu0
        %v3158 = vadd.f32 0.0, %v3157
        %3159 = vmatmul.bf16.gmra.mxu0 %v3134
        %v3160 = vpop.f32.mrf.mxu0
        %v3161 = vadd.f32 0.0, %v3160
        %v3162 = vpop.f32.mrf.mxu0
        %v3163 = vadd.f32 0.0, %v3162
        %3164 = vdwg.mxu0
        %v3165 = vpack.c.bf16 %v3028, %v3027
        %v3166 = vsub.f32 0.0, %v751
        %v3167 = vsub.f32 0.0, %v753
        %3168 = vset.pattern.permute.xlu0 65
        %3169 = vperm.xlu0 %3168, %v850
        %v3170 = vpop.permute.xlu0 %3169
        %3172 = vset.pattern.permute.xlu0 65
        %3173 = vperm.xlu0 %3172, %v851
        %v3174 = vpop.permute.xlu0 %3173
        %v3176 = vmul.f32 %v3166, %v3170
        %v3177 = vmul.f32 %v3167, %v3174
        %v3178 = vpack.c.bf16 %v3177, %v3176
        %3179 = vxpose.xlu0.c.b16.start [1/8] %v3165, 128
        %3180 = vxpose.xlu0.c.b16.cont [2/8] 0, 128
        %3181 = vxpose.xlu0.c.b16.cont [3/8] 0, 128
        %3182 = vxpose.xlu0.c.b16.cont [4/8] 0, 128
        %3183 = vxpose.xlu0.c.b16.cont [5/8] 0, 128
        %3184 = vxpose.xlu0.c.b16.cont [6/8] 0, 128
        %3185 = vxpose.xlu0.c.b16.cont [7/8] 0, 128
        %3186 = vxpose.xlu0.c.b16.end [8/8] 0, 128
        %v3187 = vpop.trf.xlu0
        %v3188 = vpop.trf.xlu0
        %v3189 = vpop.trf.xlu0
        %v3190 = vpop.trf.xlu0
        %v3191 = vpop.trf.xlu0
        %v3192 = vpop.trf.xlu0
        %v3193 = vpop.trf.xlu0
        %v3194 = vpop.trf.xlu0
        %v3196 = vsel %vm1013, %v3187, 0
        %v3199 = vsel %vm1013, %v3188, 0
        %v3202 = vsel %vm1013, %v3189, 0
        %v3205 = vsel %vm1013, %v3190, 0
        %3207 = vmatpush.bf16.msra.mxu0 0
        %3208 = vmatpush.bf16.msra.mxu0 0
        %3209 = vmatpush.bf16.msra.mxu0 0
        %3210 = vmatpush.bf16.msra.mxu0 0
        %3211 = vmatpush.bf16.msra.mxu0 0
        %3212 = vmatpush.bf16.msra.mxu0 0
        %3213 = vmatpush.bf16.msra.mxu0 0
        %3214 = vmatpush.bf16.msra.mxu0 %v3178
        %3215 = vmatmul.bf16.gmra.mxu0 %v3196
        %v3216 = vpop.f32.mrf.mxu0
        %v3217 = vadd.f32 0.0, %v3216
        %v3218 = vpop.f32.mrf.mxu0
        %v3219 = vadd.f32 0.0, %v3218
        %3220 = vmatmul.bf16.gmra.mxu0 %v3199
        %v3221 = vpop.f32.mrf.mxu0
        %v3222 = vadd.f32 0.0, %v3221
        %v3223 = vpop.f32.mrf.mxu0
        %v3224 = vadd.f32 0.0, %v3223
        %3225 = vmatmul.bf16.gmra.mxu0 %v3202
        %v3226 = vpop.f32.mrf.mxu0
        %v3227 = vadd.f32 0.0, %v3226
        %v3228 = vpop.f32.mrf.mxu0
        %v3229 = vadd.f32 0.0, %v3228
        %3230 = vmatmul.bf16.gmra.mxu0 %v3205
        %v3231 = vpop.f32.mrf.mxu0
        %v3232 = vadd.f32 0.0, %v3231
        %v3233 = vpop.f32.mrf.mxu0
        %v3234 = vadd.f32 0.0, %v3233
        %3235 = vdwg.mxu0
        %v3236 = vsub.f32 %v2739, %v3146
        %v3237 = vsub.f32 %v2740, %v3148
        %v3238 = vsub.f32 %v2741, %v3151
        %v3239 = vsub.f32 %v2742, %v3153
        %v3240 = vsub.f32 %v2743, %v3156
        %v3241 = vsub.f32 %v2744, %v3158
        %v3242 = vsub.f32 %v2745, %v3161
        %v3243 = vsub.f32 %v2746, %v3163
        %v3244 = vsub.f32 %v2747, %v3217
        %v3245 = vsub.f32 %v2748, %v3219
        %v3246 = vsub.f32 %v2749, %v3222
        %v3247 = vsub.f32 %v2750, %v3224
        %v3248 = vsub.f32 %v2751, %v3227
        %v3249 = vsub.f32 %v2752, %v3229
        %v3250 = vsub.f32 %v2753, %v3232
        %v3251 = vsub.f32 %v2754, %v3234
        %v3252 = vpack.c.bf16 %v3237, %v3236
        %v3253 = vpack.c.bf16 %v3239, %v3238
        %v3254 = vpack.c.bf16 %v3241, %v3240
        %v3255 = vpack.c.bf16 %v3243, %v3242
        %v3256 = vpack.c.bf16 %v3245, %v3244
        %v3257 = vpack.c.bf16 %v3247, %v3246
        %v3258 = vpack.c.bf16 %v3249, %v3248
        %v3259 = vpack.c.bf16 %v3251, %v3250
        %v3261 = vsel %vm491, %v2956, 0
        %3263 = vmatpush.bf16.msra.mxu0 0
        %3264 = vmatpush.bf16.msra.mxu0 0
        %3265 = vmatpush.bf16.msra.mxu0 0
        %3266 = vmatpush.bf16.msra.mxu0 0
        %3267 = vmatpush.bf16.msra.mxu0 %v3255
        %3268 = vmatpush.bf16.msra.mxu0 %v3254
        %3269 = vmatpush.bf16.msra.mxu0 %v3253
        %3270 = vmatpush.bf16.msra.mxu0 %v3252
        %3271 = vmatmul.bf16.gmra.mxu0 %v3261
        %v3272 = vpop.f32.mrf.mxu0
        %v3273 = vadd.f32 0.0, %v3272
        %v3274 = vpop.f32.mrf.mxu0
        %v3275 = vadd.f32 0.0, %v3274
        %3276 = vdwg.mxu0
        %v3277 = vxor.u32 %v3273, 2147483648
        %v3278 = vxor.u32 %v3275, 2147483648
        %v3279 = vmul.f32 %v3277, 1.442695
        %v3280 = vpow.pop %v3279
        %v3281 = vmul.f32 %v3278, 1.442695
        %v3282 = vpow.pop %v3281
        %v3283 = vadd.f32 %v3280, 1.0
        %v3284 = vadd.f32 %v3282, 1.0
        %v3285 = vrcp.pop %v3283
        %v3286 = vmul.f32 %v3283, %v3285
        %v3287 = vsub.f32 1.0, %v3286
        %v3288 = vmul.f32 %v3285, %v3287
        %v3289 = vadd.f32 %v3285, %v3288
        %vm3290 = vweird.f32 %v3283
        %vm3291 = vweird.f32 %v3285
        %vm3292 = vmor %vm3290, %vm3291
        %v3293 = vsel %vm3292, %v3285, %v3289
        %v3294 = vand.u32 2147483647, %v3283
        %vm3295 = vcmp.eq.f32.partialorder %v3294, 8.507059e+37
        %v3296 = vand.u32 %v3283, 2147483648
        %v3297 = vor.u32 1.1754944e-38, %v3296
        %v3298 = vsel %vm3295, %v3297, %v3293
        %v3299 = vmul.f32 1.0, %v3298
        %v3300 = vrcp.pop %v3284
        %v3301 = vmul.f32 %v3284, %v3300
        %v3302 = vsub.f32 1.0, %v3301
        %v3303 = vmul.f32 %v3300, %v3302
        %v3304 = vadd.f32 %v3300, %v3303
        %vm3305 = vweird.f32 %v3284
        %vm3306 = vweird.f32 %v3300
        %vm3307 = vmor %vm3305, %vm3306
        %v3308 = vsel %vm3307, %v3300, %v3304
        %v3309 = vand.u32 2147483647, %v3284
        %vm3310 = vcmp.eq.f32.partialorder %v3309, 8.507059e+37
        %v3311 = vand.u32 %v3284, 2147483648
        %v3312 = vor.u32 1.1754944e-38, %v3311
        %v3313 = vsel %vm3310, %v3312, %v3308
        %v3314 = vmul.f32 1.0, %v3313
        %v3315 = vmul.f32 %v3273, %v3299
        %v3316 = vmul.f32 %v3275, %v3314
        %3319 = vrot.lane.b32.xlu0 %v3273, 64
        %v3320 = vpop.permute.xlu0 %3319
        %3321 = vrot.lane.b32.xlu0 %v3275, 64
        %v3322 = vpop.permute.xlu0 %3321
        %v3325 = vmul.f32 %v3315, %v3320
        %v3326 = vmul.f32 %v3316, %v3322
        %v3327 = vpack.c.bf16 %v3326, %v3325
        %v3329 = vsel %vm491, %v3327, 0
        %3331 = vmatpush.bf16.msra.mxu0 0
        %3332 = vmatpush.bf16.msra.mxu0 0
        %3333 = vmatpush.bf16.msra.mxu0 0
        %3334 = vmatpush.bf16.msra.mxu0 0
        %3335 = vmatpush.bf16.msra.mxu0 %v3259
        %3336 = vmatpush.bf16.msra.mxu0 %v3258
        %3337 = vmatpush.bf16.msra.mxu0 %v3257
        %3338 = vmatpush.bf16.msra.mxu0 %v3256
        %3339 = vmatmul.bf16.gmra.mxu0 %v3329
        %v3340 = vpop.f32.mrf.mxu0
        %v3341 = vadd.f32 0.0, %v3340
        %v3342 = vpop.f32.mrf.mxu0
        %v3343 = vadd.f32 0.0, %v3342
        %3344 = vdwg.mxu0
        %v3345 = vmul.f32 %v3341, %v3341
        %v3346 = vmul.f32 %v3343, %v3343
        %v3347 = vsel %vm491, %v3345, 0.0
        %3348 = vadd.xlane.f32.xlu0 %v3347
        %v3349 = vpop.xlane.xlu0 %3348
        %v3350 = vsel %vm491, %v3346, 0.0
        %3351 = vadd.xlane.f32.xlu0 %v3350
        %v3352 = vpop.xlane.xlu0 %3351
        %v3353 = vmul.f32 %v3349, %v522
        %v3354 = vmul.f32 %v3352, %v522
        %v3355 = vadd.f32 %v3353, 1e-06
        %v3356 = vadd.f32 %v3354, 1e-06
        %v3357 = vrsqrt.pop %v3355
        %v3358 = vmul.f32 %v3357, %v3355
        %v3359 = vmul.f32 %v3358, %v3357
        %v3360 = vmul.f32 0.5, %v3359
        %v3361 = vsub.f32 1.5, %v3360
        %v3362 = vmul.f32 %v3357, %v3361
        %vm3363 = vweird.f32 %v3355
        %vm3364 = vweird.f32 %v3357
        %vm3365 = vmor %vm3363, %vm3364
        %v3366 = vsel %vm3365, %v3357, %v3362
        %v3367 = vrsqrt.pop %v3356
        %v3368 = vmul.f32 %v3367, %v3356
        %v3369 = vmul.f32 %v3368, %v3367
        %v3370 = vmul.f32 0.5, %v3369
        %v3371 = vsub.f32 1.5, %v3370
        %v3372 = vmul.f32 %v3367, %v3371
        %vm3373 = vweird.f32 %v3356
        %vm3374 = vweird.f32 %v3367
        %vm3375 = vmor %vm3373, %vm3374
        %v3376 = vsel %vm3375, %v3367, %v3372
        %v3377 = vmul.f32 %v3341, %v3366
        %v3378 = vmul.f32 %v3343, %v3376
        %v3379 = vmul.f32 %v3377, %v2384
        %v3380 = vmul.f32 %v3378, %v2384
        %3381 = vst.msk [vmem:[#allocation2 + $0x20] sm:$0xff] %vm491, %v3379
        %3382 = vst.msk [vmem:[#allocation2 + $0x28] sm:$0xff] %vm491, %v3380
        %v3383 = vmul.f32 %v727, %v727
        %v3384 = vmul.f32 %v729, %v729
        %v3385 = vsel %vm491, %v3383, 0.0
        %3386 = vadd.xlane.f32.xlu0 %v3385
        %v3387 = vpop.xlane.xlu0 %3386
        %v3388 = vsel %vm491, %v3384, 0.0
        %3389 = vadd.xlane.f32.xlu0 %v3388
        %v3390 = vpop.xlane.xlu0 %3389
        %v3391 = vadd.f32 %v3387, 1e-06
        %v3392 = vadd.f32 %v3390, 1e-06
        %v3393 = vrsqrt.pop %v3391
        %v3394 = vmul.f32 %v3393, %v3391
        %v3395 = vmul.f32 %v3394, %v3393
        %v3396 = vmul.f32 0.5, %v3395
        %v3397 = vsub.f32 1.5, %v3396
        %v3398 = vmul.f32 %v3393, %v3397
        %vm3399 = vweird.f32 %v3391
        %vm3400 = vweird.f32 %v3393
        %vm3401 = vmor %vm3399, %vm3400
        %v3402 = vsel %vm3401, %v3393, %v3398
        %v3403 = vrsqrt.pop %v3392
        %v3404 = vmul.f32 %v3403, %v3392
        %v3405 = vmul.f32 %v3404, %v3403
        %v3406 = vmul.f32 0.5, %v3405
        %v3407 = vsub.f32 1.5, %v3406
        %v3408 = vmul.f32 %v3403, %v3407
        %vm3409 = vweird.f32 %v3392
        %vm3410 = vweird.f32 %v3403
        %vm3411 = vmor %vm3409, %vm3410
        %v3412 = vsel %vm3411, %v3403, %v3408
        %v3413 = vmul.f32 %v727, %v3402
        %v3414 = vmul.f32 %v729, %v3412
        %3417 = vrot.lane.b32.xlu0 %v3383, 64
        %v3418 = vpop.permute.xlu0 %3417
        %3419 = vrot.lane.b32.xlu0 %v3384, 64
        %v3420 = vpop.permute.xlu0 %3419
        %v3423 = vsel %vm491, %v3418, 0.0
        %3424 = vadd.xlane.f32.xlu0 %v3423
        %v3425 = vpop.xlane.xlu0 %3424
        %v3426 = vsel %vm491, %v3420, 0.0
        %3427 = vadd.xlane.f32.xlu0 %v3426
        %v3428 = vpop.xlane.xlu0 %3427
        %v3429 = vadd.f32 %v3425, 1e-06
        %v3430 = vadd.f32 %v3428, 1e-06
        %v3431 = vrsqrt.pop %v3429
        %v3432 = vmul.f32 %v3431, %v3429
        %v3433 = vmul.f32 %v3432, %v3431
        %v3434 = vmul.f32 0.5, %v3433
        %v3435 = vsub.f32 1.5, %v3434
        %v3436 = vmul.f32 %v3431, %v3435
        %vm3437 = vweird.f32 %v3429
        %vm3438 = vweird.f32 %v3431
        %vm3439 = vmor %vm3437, %vm3438
        %v3440 = vsel %vm3439, %v3431, %v3436
        %v3441 = vrsqrt.pop %v3430
        %v3442 = vmul.f32 %v3441, %v3430
        %v3443 = vmul.f32 %v3442, %v3441
        %v3444 = vmul.f32 0.5, %v3443
        %v3445 = vsub.f32 1.5, %v3444
        %v3446 = vmul.f32 %v3441, %v3445
        %vm3447 = vweird.f32 %v3430
        %vm3448 = vweird.f32 %v3441
        %vm3449 = vmor %vm3447, %vm3448
        %v3450 = vsel %vm3449, %v3441, %v3446
        %v3451 = vmul.f32 %v727, %v3440
        %v3452 = vmul.f32 %v729, %v3450
        %v3453 = vpack.c.bf16 %v3414, %v3413
        %v3454 = vpack.c.bf16 %v3452, %v3451
        %v3455 = vpack.c.bf16 %v758, %v756
        %3457 = vrot.lane.b32.xlu0 %v3454, 64
        %v3458 = vpop.permute.xlu0 %3457
        %v3460 = vsel %vm491, %v3458, 0
        %3462 = vmatpush.bf16.msra.mxu0 0
        %3463 = vmatpush.bf16.msra.mxu0 0
        %3464 = vmatpush.bf16.msra.mxu0 0
        %3465 = vmatpush.bf16.msra.mxu0 0
        %3466 = vmatpush.bf16.msra.mxu0 %v3255
        %3467 = vmatpush.bf16.msra.mxu0 %v3254
        %3468 = vmatpush.bf16.msra.mxu0 %v3253
        %3469 = vmatpush.bf16.msra.mxu0 %v3252
        %3470 = vmatmul.bf16.gmra.mxu0 %v3460
        %v3471 = vpop.f32.mrf.mxu0
        %v3472 = vadd.f32 0.0, %v3471
        %v3473 = vpop.f32.mrf.mxu0
        %v3474 = vadd.f32 0.0, %v3473
        %3475 = vdwg.mxu0
        %v3476 = vxor.u32 %v3472, 2147483648
        %v3477 = vxor.u32 %v3474, 2147483648
        %v3478 = vmul.f32 %v3476, 1.442695
        %v3479 = vpow.pop %v3478
        %v3480 = vmul.f32 %v3477, 1.442695
        %v3481 = vpow.pop %v3480
        %v3482 = vadd.f32 %v3479, 1.0
        %v3483 = vadd.f32 %v3481, 1.0
        %v3484 = vrcp.pop %v3482
        %v3485 = vmul.f32 %v3482, %v3484
        %v3486 = vsub.f32 1.0, %v3485
        %v3487 = vmul.f32 %v3484, %v3486
        %v3488 = vadd.f32 %v3484, %v3487
        %vm3489 = vweird.f32 %v3482
        %vm3490 = vweird.f32 %v3484
        %vm3491 = vmor %vm3489, %vm3490
        %v3492 = vsel %vm3491, %v3484, %v3488
        %v3493 = vand.u32 2147483647, %v3482
        %vm3494 = vcmp.eq.f32.partialorder %v3493, 8.507059e+37
        %v3495 = vand.u32 %v3482, 2147483648
        %v3496 = vor.u32 1.1754944e-38, %v3495
        %v3497 = vsel %vm3494, %v3496, %v3492
        %v3498 = vmul.f32 1.0, %v3497
        %v3499 = vrcp.pop %v3483
        %v3500 = vmul.f32 %v3483, %v3499
        %v3501 = vsub.f32 1.0, %v3500
        %v3502 = vmul.f32 %v3499, %v3501
        %v3503 = vadd.f32 %v3499, %v3502
        %vm3504 = vweird.f32 %v3483
        %vm3505 = vweird.f32 %v3499
        %vm3506 = vmor %vm3504, %vm3505
        %v3507 = vsel %vm3506, %v3499, %v3503
        %v3508 = vand.u32 2147483647, %v3483
        %vm3509 = vcmp.eq.f32.partialorder %v3508, 8.507059e+37
        %v3510 = vand.u32 %v3483, 2147483648
        %v3511 = vor.u32 1.1754944e-38, %v3510
        %v3512 = vsel %vm3509, %v3511, %v3507
        %v3513 = vmul.f32 1.0, %v3512
        %v3514 = vmul.f32 %v3472, %v3498
        %v3515 = vmul.f32 %v3474, %v3513
        %3518 = vrot.lane.b32.xlu0 %v3472, 64
        %v3519 = vpop.permute.xlu0 %3518
        %3520 = vrot.lane.b32.xlu0 %v3474, 64
        %v3521 = vpop.permute.xlu0 %3520
        %v3524 = vmul.f32 %v3514, %v3519
        %v3525 = vmul.f32 %v3515, %v3521
        %v3527 = vsel %vm491, %v3455, 0
        %v3530 = vsel %vm491, %v3256, 0
        %v3533 = vsel %vm491, %v3257, 0
        %v3536 = vsel %vm491, %v3258, 0
        %v3539 = vsel %vm491, %v3259, 0
        %3541 = vmatpush.bf16.xpose.msra.mxu0 0
        %3542 = vmatpush.bf16.xpose.msra.mxu0 0
        %3543 = vmatpush.bf16.xpose.msra.mxu0 0
        %3544 = vmatpush.bf16.xpose.msra.mxu0 0
        %3545 = vmatpush.bf16.xpose.msra.mxu0 %v3539
        %3546 = vmatpush.bf16.xpose.msra.mxu0 %v3536
        %3547 = vmatpush.bf16.xpose.msra.mxu0 %v3533
        %3548 = vmatpush.bf16.xpose.msra.mxu0 %v3530
        %3549 = vmatmul.bf16.gmra.mxu0 %v3527
        %v3550 = vpop.f32.mrf.mxu0
        %v3551 = vadd.f32 0.0, %v3550
        %v3552 = vpop.f32.mrf.mxu0
        %v3553 = vadd.f32 0.0, %v3552
        %3554 = vdwg.mxu0
        %v3555 = vsub.f32 0.0, %v3551
        %v3556 = vsub.f32 0.0, %v3553
        %v3557 = vsub.f32 1.0, %v3498
        %v3558 = vsub.f32 1.0, %v3513
        %v3559 = vmul.f32 %v3472, %v3557
        %v3560 = vmul.f32 %v3474, %v3558
        %v3561 = vadd.f32 %v3559, 1.0
        %v3562 = vadd.f32 %v3560, 1.0
        %v3563 = vmul.f32 %v3498, %v3561
        %v3564 = vmul.f32 %v3513, %v3562
        %v3565 = vmul.f32 %v3555, %v3519
        %v3566 = vmul.f32 %v3556, %v3521
        %v3567 = vmul.f32 %v3565, %v3563
        %v3568 = vmul.f32 %v3566, %v3564
        %v3569 = vmul.f32 %v3555, %v3514
        %v3570 = vmul.f32 %v3556, %v3515
        %3572 = vset.pattern.permute.xlu0 64
        %3573 = vperm.xlu0 %3572, %v852
        %v3574 = vpop.permute.xlu0 %3573
        %3577 = vset.pattern.permute.xlu0 64
        %3578 = vperm.xlu0 %3577, %v853
        %v3579 = vpop.permute.xlu0 %3578
        %v3581 = vmul.f32 %v3567, %v3574
        %v3582 = vmul.f32 %v3568, %v3579
        %3583 = vset.pattern.permute.xlu0 66
        %3584 = vperm.xlu0 %3583, %v852
        %v3585 = vpop.permute.xlu0 %3584
        %3587 = vset.pattern.permute.xlu0 66
        %3588 = vperm.xlu0 %3587, %v853
        %v3589 = vpop.permute.xlu0 %3588
        %v3591 = vmul.f32 %v3569, %v3585
        %v3592 = vmul.f32 %v3570, %v3589
        %3595 = vrot.lane.b32.xlu0 %v3591, 64
        %v3596 = vpop.permute.xlu0 %3595
        %3597 = vrot.lane.b32.xlu0 %v3592, 64
        %v3598 = vpop.permute.xlu0 %3597
        %v3601 = vsel %vm491, %v3581, %v3596
        %v3602 = vsel %vm491, %v3582, %v3598
        %v3603 = vpack.c.bf16 %v3602, %v3601
        %3605 = vxpose.xlu0.c.b16.start [1/8] %v3458, 128
        %3606 = vxpose.xlu0.c.b16.cont [2/8] 0, 128
        %3607 = vxpose.xlu0.c.b16.cont [3/8] 0, 128
        %3608 = vxpose.xlu0.c.b16.cont [4/8] 0, 128
        %3609 = vxpose.xlu0.c.b16.cont [5/8] 0, 128
        %3610 = vxpose.xlu0.c.b16.cont [6/8] 0, 128
        %3611 = vxpose.xlu0.c.b16.cont [7/8] 0, 128
        %3612 = vxpose.xlu0.c.b16.end [8/8] 0, 128
        %v3613 = vpop.trf.xlu0
        %v3614 = vpop.trf.xlu0
        %v3615 = vpop.trf.xlu0
        %v3616 = vpop.trf.xlu0
        %v3617 = vpop.trf.xlu0
        %v3618 = vpop.trf.xlu0
        %v3619 = vpop.trf.xlu0
        %v3620 = vpop.trf.xlu0
        %v3622 = vsel %vm1013, %v3613, 0
        %v3625 = vsel %vm1013, %v3614, 0
        %v3628 = vsel %vm1013, %v3615, 0
        %v3631 = vsel %vm1013, %v3616, 0
        %3633 = vmatpush.bf16.msra.mxu0 0
        %3634 = vmatpush.bf16.msra.mxu0 0
        %3635 = vmatpush.bf16.msra.mxu0 0
        %3636 = vmatpush.bf16.msra.mxu0 0
        %3637 = vmatpush.bf16.msra.mxu0 0
        %3638 = vmatpush.bf16.msra.mxu0 0
        %3639 = vmatpush.bf16.msra.mxu0 0
        %3640 = vmatpush.bf16.msra.mxu0 %v3603
        %3641 = vmatmul.bf16.gmra.mxu0 %v3622
        %v3642 = vpop.f32.mrf.mxu0
        %v3643 = vadd.f32 0.0, %v3642
        %v3644 = vpop.f32.mrf.mxu0
        %v3645 = vadd.f32 0.0, %v3644
        %3646 = vmatmul.bf16.gmra.mxu0 %v3625
        %v3647 = vpop.f32.mrf.mxu0
        %v3648 = vadd.f32 0.0, %v3647
        %v3649 = vpop.f32.mrf.mxu0
        %v3650 = vadd.f32 0.0, %v3649
        %3651 = vmatmul.bf16.gmra.mxu0 %v3628
        %v3652 = vpop.f32.mrf.mxu0
        %v3653 = vadd.f32 0.0, %v3652
        %v3654 = vpop.f32.mrf.mxu0
        %v3655 = vadd.f32 0.0, %v3654
        %3656 = vmatmul.bf16.gmra.mxu0 %v3631
        %v3657 = vpop.f32.mrf.mxu0
        %v3658 = vadd.f32 0.0, %v3657
        %v3659 = vpop.f32.mrf.mxu0
        %v3660 = vadd.f32 0.0, %v3659
        %3661 = vdwg.mxu0
        %v3662 = vpack.c.bf16 %v3525, %v3524
        %v3663 = vsub.f32 0.0, %v756
        %v3664 = vsub.f32 0.0, %v758
        %3665 = vset.pattern.permute.xlu0 65
        %3666 = vperm.xlu0 %3665, %v852
        %v3667 = vpop.permute.xlu0 %3666
        %3669 = vset.pattern.permute.xlu0 65
        %3670 = vperm.xlu0 %3669, %v853
        %v3671 = vpop.permute.xlu0 %3670
        %v3673 = vmul.f32 %v3663, %v3667
        %v3674 = vmul.f32 %v3664, %v3671
        %v3675 = vpack.c.bf16 %v3674, %v3673
        %3676 = vxpose.xlu0.c.b16.start [1/8] %v3662, 128
        %3677 = vxpose.xlu0.c.b16.cont [2/8] 0, 128
        %3678 = vxpose.xlu0.c.b16.cont [3/8] 0, 128
        %3679 = vxpose.xlu0.c.b16.cont [4/8] 0, 128
        %3680 = vxpose.xlu0.c.b16.cont [5/8] 0, 128
        %3681 = vxpose.xlu0.c.b16.cont [6/8] 0, 128
        %3682 = vxpose.xlu0.c.b16.cont [7/8] 0, 128
        %3683 = vxpose.xlu0.c.b16.end [8/8] 0, 128
        %v3684 = vpop.trf.xlu0
        %v3685 = vpop.trf.xlu0
        %v3686 = vpop.trf.xlu0
        %v3687 = vpop.trf.xlu0
        %v3688 = vpop.trf.xlu0
        %v3689 = vpop.trf.xlu0
        %v3690 = vpop.trf.xlu0
        %v3691 = vpop.trf.xlu0
        %v3693 = vsel %vm1013, %v3684, 0
        %v3696 = vsel %vm1013, %v3685, 0
        %v3699 = vsel %vm1013, %v3686, 0
        %v3702 = vsel %vm1013, %v3687, 0
        %3704 = vmatpush.bf16.msra.mxu0 0
        %3705 = vmatpush.bf16.msra.mxu0 0
        %3706 = vmatpush.bf16.msra.mxu0 0
        %3707 = vmatpush.bf16.msra.mxu0 0
        %3708 = vmatpush.bf16.msra.mxu0 0
        %3709 = vmatpush.bf16.msra.mxu0 0
        %3710 = vmatpush.bf16.msra.mxu0 0
        %3711 = vmatpush.bf16.msra.mxu0 %v3675
        %3712 = vmatmul.bf16.gmra.mxu0 %v3693
        %v3713 = vpop.f32.mrf.mxu0
        %v3714 = vadd.f32 0.0, %v3713
        %v3715 = vpop.f32.mrf.mxu0
        %v3716 = vadd.f32 0.0, %v3715
        %3717 = vmatmul.bf16.gmra.mxu0 %v3696
        %v3718 = vpop.f32.mrf.mxu0
        %v3719 = vadd.f32 0.0, %v3718
        %v3720 = vpop.f32.mrf.mxu0
        %v3721 = vadd.f32 0.0, %v3720
        %3722 = vmatmul.bf16.gmra.mxu0 %v3699
        %v3723 = vpop.f32.mrf.mxu0
        %v3724 = vadd.f32 0.0, %v3723
        %v3725 = vpop.f32.mrf.mxu0
        %v3726 = vadd.f32 0.0, %v3725
        %3727 = vmatmul.bf16.gmra.mxu0 %v3702
        %v3728 = vpop.f32.mrf.mxu0
        %v3729 = vadd.f32 0.0, %v3728
        %v3730 = vpop.f32.mrf.mxu0
        %v3731 = vadd.f32 0.0, %v3730
        %3732 = vdwg.mxu0
        %v3733 = vsub.f32 %v3236, %v3643
        %v3734 = vsub.f32 %v3237, %v3645
        %v3735 = vsub.f32 %v3238, %v3648
        %v3736 = vsub.f32 %v3239, %v3650
        %v3737 = vsub.f32 %v3240, %v3653
        %v3738 = vsub.f32 %v3241, %v3655
        %v3739 = vsub.f32 %v3242, %v3658
        %v3740 = vsub.f32 %v3243, %v3660
        %v3741 = vsub.f32 %v3244, %v3714
        %v3742 = vsub.f32 %v3245, %v3716
        %v3743 = vsub.f32 %v3246, %v3719
        %v3744 = vsub.f32 %v3247, %v3721
        %v3745 = vsub.f32 %v3248, %v3724
        %v3746 = vsub.f32 %v3249, %v3726
        %v3747 = vsub.f32 %v3250, %v3729
        %v3748 = vsub.f32 %v3251, %v3731
        %v3749 = vpack.c.bf16 %v3734, %v3733
        %v3750 = vpack.c.bf16 %v3736, %v3735
        %v3751 = vpack.c.bf16 %v3738, %v3737
        %v3752 = vpack.c.bf16 %v3740, %v3739
        %v3753 = vpack.c.bf16 %v3742, %v3741
        %v3754 = vpack.c.bf16 %v3744, %v3743
        %v3755 = vpack.c.bf16 %v3746, %v3745
        %v3756 = vpack.c.bf16 %v3748, %v3747
        %v3758 = vsel %vm491, %v3453, 0
        %3760 = vmatpush.bf16.msra.mxu0 0
        %3761 = vmatpush.bf16.msra.mxu0 0
        %3762 = vmatpush.bf16.msra.mxu0 0
        %3763 = vmatpush.bf16.msra.mxu0 0
        %3764 = vmatpush.bf16.msra.mxu0 %v3752
        %3765 = vmatpush.bf16.msra.mxu0 %v3751
        %3766 = vmatpush.bf16.msra.mxu0 %v3750
        %3767 = vmatpush.bf16.msra.mxu0 %v3749
        %3768 = vmatmul.bf16.gmra.mxu0 %v3758
        %v3769 = vpop.f32.mrf.mxu0
        %v3770 = vadd.f32 0.0, %v3769
        %v3771 = vpop.f32.mrf.mxu0
        %v3772 = vadd.f32 0.0, %v3771
        %3773 = vdwg.mxu0
        %v3774 = vxor.u32 %v3770, 2147483648
        %v3775 = vxor.u32 %v3772, 2147483648
        %v3776 = vmul.f32 %v3774, 1.442695
        %v3777 = vpow.pop %v3776
        %v3778 = vmul.f32 %v3775, 1.442695
        %v3779 = vpow.pop %v3778
        %v3780 = vadd.f32 %v3777, 1.0
        %v3781 = vadd.f32 %v3779, 1.0
        %v3782 = vrcp.pop %v3780
        %v3783 = vmul.f32 %v3780, %v3782
        %v3784 = vsub.f32 1.0, %v3783
        %v3785 = vmul.f32 %v3782, %v3784
        %v3786 = vadd.f32 %v3782, %v3785
        %vm3787 = vweird.f32 %v3780
        %vm3788 = vweird.f32 %v3782
        %vm3789 = vmor %vm3787, %vm3788
        %v3790 = vsel %vm3789, %v3782, %v3786
        %v3791 = vand.u32 2147483647, %v3780
        %vm3792 = vcmp.eq.f32.partialorder %v3791, 8.507059e+37
        %v3793 = vand.u32 %v3780, 2147483648
        %v3794 = vor.u32 1.1754944e-38, %v3793
        %v3795 = vsel %vm3792, %v3794, %v3790
        %v3796 = vmul.f32 1.0, %v3795
        %v3797 = vrcp.pop %v3781
        %v3798 = vmul.f32 %v3781, %v3797
        %v3799 = vsub.f32 1.0, %v3798
        %v3800 = vmul.f32 %v3797, %v3799
        %v3801 = vadd.f32 %v3797, %v3800
        %vm3802 = vweird.f32 %v3781
        %vm3803 = vweird.f32 %v3797
        %vm3804 = vmor %vm3802, %vm3803
        %v3805 = vsel %vm3804, %v3797, %v3801
        %v3806 = vand.u32 2147483647, %v3781
        %vm3807 = vcmp.eq.f32.partialorder %v3806, 8.507059e+37
        %v3808 = vand.u32 %v3781, 2147483648
        %v3809 = vor.u32 1.1754944e-38, %v3808
        %v3810 = vsel %vm3807, %v3809, %v3805
        %v3811 = vmul.f32 1.0, %v3810
        %v3812 = vmul.f32 %v3770, %v3796
        %v3813 = vmul.f32 %v3772, %v3811
        %3816 = vrot.lane.b32.xlu0 %v3770, 64
        %v3817 = vpop.permute.xlu0 %3816
        %3818 = vrot.lane.b32.xlu0 %v3772, 64
        %v3819 = vpop.permute.xlu0 %3818
        %v3822 = vmul.f32 %v3812, %v3817
        %v3823 = vmul.f32 %v3813, %v3819
        %v3824 = vpack.c.bf16 %v3823, %v3822
        %v3826 = vsel %vm491, %v3824, 0
        %3828 = vmatpush.bf16.msra.mxu0 0
        %3829 = vmatpush.bf16.msra.mxu0 0
        %3830 = vmatpush.bf16.msra.mxu0 0
        %3831 = vmatpush.bf16.msra.mxu0 0
        %3832 = vmatpush.bf16.msra.mxu0 %v3756
        %3833 = vmatpush.bf16.msra.mxu0 %v3755
        %3834 = vmatpush.bf16.msra.mxu0 %v3754
        %3835 = vmatpush.bf16.msra.mxu0 %v3753
        %3836 = vmatmul.bf16.gmra.mxu0 %v3826
        %v3837 = vpop.f32.mrf.mxu0
        %v3838 = vadd.f32 0.0, %v3837
        %v3839 = vpop.f32.mrf.mxu0
        %v3840 = vadd.f32 0.0, %v3839
        %3841 = vdwg.mxu0
        %v3842 = vmul.f32 %v3838, %v3838
        %v3843 = vmul.f32 %v3840, %v3840
        %v3844 = vsel %vm491, %v3842, 0.0
        %3845 = vadd.xlane.f32.xlu0 %v3844
        %v3846 = vpop.xlane.xlu0 %3845
        %v3847 = vsel %vm491, %v3843, 0.0
        %3848 = vadd.xlane.f32.xlu0 %v3847
        %v3849 = vpop.xlane.xlu0 %3848
        %v3850 = vmul.f32 %v3846, %v522
        %v3851 = vmul.f32 %v3849, %v522
        %v3852 = vadd.f32 %v3850, 1e-06
        %v3853 = vadd.f32 %v3851, 1e-06
        %v3854 = vrsqrt.pop %v3852
        %v3855 = vmul.f32 %v3854, %v3852
        %v3856 = vmul.f32 %v3855, %v3854
        %v3857 = vmul.f32 0.5, %v3856
        %v3858 = vsub.f32 1.5, %v3857
        %v3859 = vmul.f32 %v3854, %v3858
        %vm3860 = vweird.f32 %v3852
        %vm3861 = vweird.f32 %v3854
        %vm3862 = vmor %vm3860, %vm3861
        %v3863 = vsel %vm3862, %v3854, %v3859
        %v3864 = vrsqrt.pop %v3853
        %v3865 = vmul.f32 %v3864, %v3853
        %v3866 = vmul.f32 %v3865, %v3864
        %v3867 = vmul.f32 0.5, %v3866
        %v3868 = vsub.f32 1.5, %v3867
        %v3869 = vmul.f32 %v3864, %v3868
        %vm3870 = vweird.f32 %v3853
        %vm3871 = vweird.f32 %v3864
        %vm3872 = vmor %vm3870, %vm3871
        %v3873 = vsel %vm3872, %v3864, %v3869
        %v3874 = vmul.f32 %v3838, %v3863
        %v3875 = vmul.f32 %v3840, %v3873
        %v3876 = vmul.f32 %v3874, %v2384
        %v3877 = vmul.f32 %v3875, %v2384
        %3878 = vst.msk [vmem:[#allocation2 + $0x30] sm:$0xff] %vm491, %v3876
        %3879 = vst.msk [vmem:[#allocation2 + $0x38] sm:$0xff] %vm491, %v3877
        %v3880 = vld [vmem:[#allocation2] sm:$0xff]
        %v3881 = vld [vmem:[#allocation2 + $0x8] sm:$0xff]
        %v3882 = vld [vmem:[#allocation2 + $0x10] sm:$0xff]
        %v3883 = vld [vmem:[#allocation2 + $0x18] sm:$0xff]
        %v3884 = vld [vmem:[#allocation2 + $0x20] sm:$0xff]
        %v3885 = vld [vmem:[#allocation2 + $0x28] sm:$0xff]
        %v3886 = vld [vmem:[#allocation2 + $0x30] sm:$0xff]
        %v3887 = vld [vmem:[#allocation2 + $0x38] sm:$0xff]
        %v3888 = vadd.f32 %v1875, %v3880
        %v3889 = vadd.f32 %v1876, %v3881
        %v3890 = vadd.f32 %v1877, %v3882
        %v3891 = vadd.f32 %v1878, %v3883
        %v3892 = vadd.f32 %v1879, %v3884
        %v3893 = vadd.f32 %v1880, %v3885
        %v3894 = vadd.f32 %v1881, %v3886
        %v3895 = vadd.f32 %v1882, %v3887
        %v3896 = vpack.c.bf16 %v3889, %v3888
        %v3897 = vpack.c.bf16 %v3891, %v3890
        %v3898 = vpack.c.bf16 %v3893, %v3892
        %v3899 = vpack.c.bf16 %v3895, %v3894
        %v3900 = vld [vmem:[%s10] sm:$0xf]
        %v3901 = vld [vmem:[%s10 + $0x4] sm:$0xf]
        %v3902 = vld [vmem:[%s10 + $0x8] sm:$0xf]
        %v3903 = vld [vmem:[%s10 + $0xc] sm:$0xf]
        %v3904 = vld [vmem:[%s10 + $0x10] sm:$0xf]
        %v3905 = vld [vmem:[%s10 + $0x14] sm:$0xf]
        %v3906 = vld [vmem:[%s10 + $0x18] sm:$0xf]
        %v3907 = vld [vmem:[%s10 + $0x1c] sm:$0xf]
        %v3916 = vunpack.c.l.b16 %v3900
        %v3917 = vunpack.c.l.b16 %v3901
        %v3918 = vunpack.c.l.b16 %v3902
        %v3919 = vunpack.c.l.b16 %v3903
        %v3920 = vunpack.c.l.b16 %v3904
        %v3921 = vunpack.c.l.b16 %v3905
        %v3922 = vunpack.c.l.b16 %v3906
        %v3923 = vunpack.c.l.b16 %v3907
        %v3924 = vpack.c.b16 %v3917, %v3916
        %v3925 = vpack.c.b16 %v3919, %v3918
        %v3926 = vpack.c.b16 %v3921, %v3920
        %v3927 = vpack.c.b16 %v3923, %v3922
        %v3933 = vsel %vm491, %v3896, 0
        %v3936 = vsel %vm491, %v3897, 0
        %v3939 = vsel %vm491, %v3898, 0
        %v3942 = vsel %vm491, %v3899, 0
        %3944 = vmatpush.bf16.msra.mxu0 0
        %3945 = vmatpush.bf16.msra.mxu0 0
        %3946 = vmatpush.bf16.msra.mxu0 0
        %3947 = vmatpush.bf16.msra.mxu0 0
        %3948 = vmatpush.bf16.msra.mxu0 %v3927
        %3949 = vmatpush.bf16.msra.mxu0 %v3926
        %3950 = vmatpush.bf16.msra.mxu0 %v3925
        %3951 = vmatpush.bf16.msra.mxu0 %v3924
        %3952 = vmatmul.bf16.gmra.mxu0 %v3933
        %v3953 = vpop.f32.mrf.mxu0
        %v3954 = vadd.f32 0.0, %v3953
        %v3955 = vpop.f32.mrf.mxu0
        %v3956 = vadd.f32 0.0, %v3955
        %3957 = vmatmul.bf16.gmra.mxu0 %v3936
        %v3958 = vpop.f32.mrf.mxu0
        %v3959 = vadd.f32 0.0, %v3958
        %v3960 = vpop.f32.mrf.mxu0
        %v3961 = vadd.f32 0.0, %v3960
        %3962 = vmatmul.bf16.gmra.mxu0 %v3939
        %v3963 = vpop.f32.mrf.mxu0
        %v3964 = vadd.f32 0.0, %v3963
        %v3965 = vpop.f32.mrf.mxu0
        %v3966 = vadd.f32 0.0, %v3965
        %3967 = vmatmul.bf16.gmra.mxu0 %v3942
        %v3968 = vpop.f32.mrf.mxu0
        %v3969 = vadd.f32 0.0, %v3968
        %v3970 = vpop.f32.mrf.mxu0
        %v3971 = vadd.f32 0.0, %v3970
        %3972 = vdwg.mxu0
        %v3973 = vpack.c.bf16 %v3954, %v3954
        %v3974 = vpack.c.bf16 %v3956, %v3956
        %v3975 = vpack.c.bf16 %v3959, %v3959
        %v3976 = vpack.c.bf16 %v3961, %v3961
        %v3977 = vpack.c.bf16 %v3964, %v3964
        %v3978 = vpack.c.bf16 %v3966, %v3966
        %v3979 = vpack.c.bf16 %v3969, %v3969
        %v3980 = vpack.c.bf16 %v3971, %v3971
        %v3981 = vunpack.c.l.bf16 %v3973
        %v3982 = vunpack.c.l.bf16 %v3974
        %v3983 = vunpack.c.l.bf16 %v3975
        %v3984 = vunpack.c.l.bf16 %v3976
        %v3985 = vunpack.c.l.bf16 %v3977
        %v3986 = vunpack.c.l.bf16 %v3978
        %v3987 = vunpack.c.l.bf16 %v3979
        %v3988 = vunpack.c.l.bf16 %v3980
        %v3989 = vadd.f32 %v3981, %v475
        %v3990 = vadd.f32 %v3982, %v476
        %v3991 = vadd.f32 %v3983, %v477
        %v3992 = vadd.f32 %v3984, %v478
        %v3993 = vadd.f32 %v3985, %v479
        %v3994 = vadd.f32 %v3986, %v480
        %v3995 = vadd.f32 %v3987, %v481
        %v3996 = vadd.f32 %v3988, %v482
        %v3997 = vmul.f32 %v3989, %v3989
        %v3998 = vmul.f32 %v3990, %v3990
        %v3999 = vmul.f32 %v3991, %v3991
        %v4000 = vmul.f32 %v3992, %v3992
        %v4001 = vmul.f32 %v3993, %v3993
        %v4002 = vmul.f32 %v3994, %v3994
        %v4003 = vmul.f32 %v3995, %v3995
        %v4004 = vmul.f32 %v3996, %v3996
        %v4005 = vsel %vm491, %v3997, 0.0
        %4006 = vadd.xlane.f32.xlu0 %v4005
        %v4007 = vpop.xlane.xlu0 %4006
        %v4008 = vsel %vm491, %v3998, 0.0
        %4009 = vadd.xlane.f32.xlu0 %v4008
        %v4010 = vpop.xlane.xlu0 %4009
        %v4011 = vsel %vm491, %v3999, 0.0
        %4012 = vadd.xlane.f32.xlu0 %v4011
        %v4013 = vpop.xlane.xlu0 %4012
        %v4014 = vsel %vm491, %v4000, 0.0
        %4015 = vadd.xlane.f32.xlu0 %v4014
        %v4016 = vpop.xlane.xlu0 %4015
        %v4017 = vsel %vm491, %v4001, 0.0
        %4018 = vadd.xlane.f32.xlu0 %v4017
        %v4019 = vpop.xlane.xlu0 %4018
        %v4020 = vsel %vm491, %v4002, 0.0
        %4021 = vadd.xlane.f32.xlu0 %v4020
        %v4022 = vpop.xlane.xlu0 %4021
        %v4023 = vsel %vm491, %v4003, 0.0
        %4024 = vadd.xlane.f32.xlu0 %v4023
        %v4025 = vpop.xlane.xlu0 %4024
        %v4026 = vsel %vm491, %v4004, 0.0
        %4027 = vadd.xlane.f32.xlu0 %v4026
        %v4028 = vpop.xlane.xlu0 %4027
        %v4029 = vmul.f32 %v4007, %v522
        %v4030 = vmul.f32 %v4010, %v522
        %v4031 = vmul.f32 %v4013, %v522
        %v4032 = vmul.f32 %v4016, %v522
        %v4033 = vmul.f32 %v4019, %v522
        %v4034 = vmul.f32 %v4022, %v522
        %v4035 = vmul.f32 %v4025, %v522
        %v4036 = vmul.f32 %v4028, %v522
        %v4037 = vadd.f32 %v4029, 1e-06
        %v4038 = vadd.f32 %v4030, 1e-06
        %v4039 = vadd.f32 %v4031, 1e-06
        %v4040 = vadd.f32 %v4032, 1e-06
        %v4041 = vadd.f32 %v4033, 1e-06
        %v4042 = vadd.f32 %v4034, 1e-06
        %v4043 = vadd.f32 %v4035, 1e-06
        %v4044 = vadd.f32 %v4036, 1e-06
        %v4045 = vrsqrt.pop %v4037
        %v4046 = vmul.f32 %v4045, %v4037
        %v4047 = vmul.f32 %v4046, %v4045
        %v4048 = vmul.f32 0.5, %v4047
        %v4049 = vsub.f32 1.5, %v4048
        %v4050 = vmul.f32 %v4045, %v4049
        %vm4051 = vweird.f32 %v4037
        %vm4052 = vweird.f32 %v4045
        %vm4053 = vmor %vm4051, %vm4052
        %v4054 = vsel %vm4053, %v4045, %v4050
        %v4055 = vrsqrt.pop %v4038
        %v4056 = vmul.f32 %v4055, %v4038
        %v4057 = vmul.f32 %v4056, %v4055
        %v4058 = vmul.f32 0.5, %v4057
        %v4059 = vsub.f32 1.5, %v4058
        %v4060 = vmul.f32 %v4055, %v4059
        %vm4061 = vweird.f32 %v4038
        %vm4062 = vweird.f32 %v4055
        %vm4063 = vmor %vm4061, %vm4062
        %v4064 = vsel %vm4063, %v4055, %v4060
        %v4065 = vrsqrt.pop %v4039
        %v4066 = vmul.f32 %v4065, %v4039
        %v4067 = vmul.f32 %v4066, %v4065
        %v4068 = vmul.f32 0.5, %v4067
        %v4069 = vsub.f32 1.5, %v4068
        %v4070 = vmul.f32 %v4065, %v4069
        %vm4071 = vweird.f32 %v4039
        %vm4072 = vweird.f32 %v4065
        %vm4073 = vmor %vm4071, %vm4072
        %v4074 = vsel %vm4073, %v4065, %v4070
        %v4075 = vrsqrt.pop %v4040
        %v4076 = vmul.f32 %v4075, %v4040
        %v4077 = vmul.f32 %v4076, %v4075
        %v4078 = vmul.f32 0.5, %v4077
        %v4079 = vsub.f32 1.5, %v4078
        %v4080 = vmul.f32 %v4075, %v4079
        %vm4081 = vweird.f32 %v4040
        %vm4082 = vweird.f32 %v4075
        %vm4083 = vmor %vm4081, %vm4082
        %v4084 = vsel %vm4083, %v4075, %v4080
        %v4085 = vrsqrt.pop %v4041
        %v4086 = vmul.f32 %v4085, %v4041
        %v4087 = vmul.f32 %v4086, %v4085
        %v4088 = vmul.f32 0.5, %v4087
        %v4089 = vsub.f32 1.5, %v4088
        %v4090 = vmul.f32 %v4085, %v4089
        %vm4091 = vweird.f32 %v4041
        %vm4092 = vweird.f32 %v4085
        %vm4093 = vmor %vm4091, %vm4092
        %v4094 = vsel %vm4093, %v4085, %v4090
        %v4095 = vrsqrt.pop %v4042
        %v4096 = vmul.f32 %v4095, %v4042
        %v4097 = vmul.f32 %v4096, %v4095
        %v4098 = vmul.f32 0.5, %v4097
        %v4099 = vsub.f32 1.5, %v4098
        %v4100 = vmul.f32 %v4095, %v4099
        %vm4101 = vweird.f32 %v4042
        %vm4102 = vweird.f32 %v4095
        %vm4103 = vmor %vm4101, %vm4102
        %v4104 = vsel %vm4103, %v4095, %v4100
        %v4105 = vrsqrt.pop %v4043
        %v4106 = vmul.f32 %v4105, %v4043
        %v4107 = vmul.f32 %v4106, %v4105
        %v4108 = vmul.f32 0.5, %v4107
        %v4109 = vsub.f32 1.5, %v4108
        %v4110 = vmul.f32 %v4105, %v4109
        %vm4111 = vweird.f32 %v4043
        %vm4112 = vweird.f32 %v4105
        %vm4113 = vmor %vm4111, %vm4112
        %v4114 = vsel %vm4113, %v4105, %v4110
        %v4115 = vrsqrt.pop %v4044
        %v4116 = vmul.f32 %v4115, %v4044
        %v4117 = vmul.f32 %v4116, %v4115
        %v4118 = vmul.f32 0.5, %v4117
        %v4119 = vsub.f32 1.5, %v4118
        %v4120 = vmul.f32 %v4115, %v4119
        %vm4121 = vweird.f32 %v4044
        %vm4122 = vweird.f32 %v4115
        %vm4123 = vmor %vm4121, %vm4122
        %v4124 = vsel %vm4123, %v4115, %v4120
        %v4125 = vmul.f32 %v3989, %v4054
        %v4126 = vmul.f32 %v3990, %v4064
        %v4127 = vmul.f32 %v3991, %v4074
        %v4128 = vmul.f32 %v3992, %v4084
        %v4129 = vmul.f32 %v3993, %v4094
        %v4130 = vmul.f32 %v3994, %v4104
        %v4131 = vmul.f32 %v3995, %v4114
        %v4132 = vmul.f32 %v3996, %v4124
        %v4133 = vld [vmem:[%s11] sm:$0x1]
        %v4134 = vunpack.c.l.bf16 %v4133
        %v4135 = vperm.slane %v4134, 0
        %v4136 = vmul.f32 %v4125, %v4135
        %v4137 = vmul.f32 %v4126, %v4135
        %v4138 = vmul.f32 %v4127, %v4135
        %v4139 = vmul.f32 %v4128, %v4135
        %v4140 = vmul.f32 %v4129, %v4135
        %v4141 = vmul.f32 %v4130, %v4135
        %v4142 = vmul.f32 %v4131, %v4135
        %v4143 = vmul.f32 %v4132, %v4135
        %v4144 = vpack.c.bf16 %v4137, %v4136
        %v4145 = vpack.c.bf16 %v4139, %v4138
        %v4146 = vpack.c.bf16 %v4141, %v4140
        %v4147 = vpack.c.bf16 %v4143, %v4142
        %v4148 = vld [vmem:[%s12] sm:$0xff]
        %v4149 = vld [vmem:[%s12 + $0x8] sm:$0xff]
        %v4150 = vld [vmem:[%s12 + $0x10] sm:$0xff]
        %v4151 = vld [vmem:[%s12 + $0x18] sm:$0xff]
        %v4152 = vld [vmem:[%s12 + $0x20] sm:$0xff]
        %v4153 = vld [vmem:[%s12 + $0x28] sm:$0xff]
        %v4154 = vld [vmem:[%s12 + $0x30] sm:$0xff]
        %v4155 = vld [vmem:[%s12 + $0x38] sm:$0xff]
        %v4164 = vunpack.c.l.b16 %v4148
        %v4165 = vunpack.c.h.b16 %v4148
        %v4166 = vunpack.c.l.b16 %v4149
        %v4167 = vunpack.c.h.b16 %v4149
        %v4168 = vunpack.c.l.b16 %v4150
        %v4169 = vunpack.c.h.b16 %v4150
        %v4170 = vunpack.c.l.b16 %v4151
        %v4171 = vunpack.c.h.b16 %v4151
        %v4172 = vunpack.c.l.b16 %v4152
        %v4173 = vunpack.c.h.b16 %v4152
        %v4174 = vunpack.c.l.b16 %v4153
        %v4175 = vunpack.c.h.b16 %v4153
        %v4176 = vunpack.c.l.b16 %v4154
        %v4177 = vunpack.c.h.b16 %v4154
        %v4178 = vunpack.c.l.b16 %v4155
        %v4179 = vunpack.c.h.b16 %v4155
        %v4180 = vpack.c.b16 %v4166, %v4164
        %v4181 = vpack.c.b16 %v4167, %v4165
        %v4182 = vpack.c.b16 %v4170, %v4168
        %v4183 = vpack.c.b16 %v4171, %v4169
        %v4184 = vpack.c.b16 %v4174, %v4172
        %v4185 = vpack.c.b16 %v4175, %v4173
        %v4186 = vpack.c.b16 %v4178, %v4176
        %v4187 = vpack.c.b16 %v4179, %v4177
        %v4197 = vsel %vm491, %v4144, 0
        %v4200 = vsel %vm491, %v4145, 0
        %v4203 = vsel %vm491, %v4146, 0
        %v4206 = vsel %vm491, %v4147, 0
        %4208 = vmatpush.bf16.msra.mxu0 0
        %4209 = vmatpush.bf16.msra.mxu0 0
        %4210 = vmatpush.bf16.msra.mxu0 0
        %4211 = vmatpush.bf16.msra.mxu0 0
        %4212 = vmatpush.bf16.msra.mxu0 %v4186
        %4213 = vmatpush.bf16.msra.mxu0 %v4184
        %4214 = vmatpush.bf16.msra.mxu0 %v4182
        %4215 = vmatpush.bf16.msra.mxu0 %v4180
        %4216 = vmatmul.bf16.gmra.mxu0 %v4197
        %v4217 = vpop.f32.mrf.mxu0
        %v4218 = vadd.f32 0.0, %v4217
        %v4219 = vpop.f32.mrf.mxu0
        %v4220 = vadd.f32 0.0, %v4219
        %4221 = vmatmul.bf16.gmra.mxu0 %v4200
        %v4222 = vpop.f32.mrf.mxu0
        %v4223 = vadd.f32 0.0, %v4222
        %v4224 = vpop.f32.mrf.mxu0
        %v4225 = vadd.f32 0.0, %v4224
        %4226 = vmatmul.bf16.gmra.mxu0 %v4203
        %v4227 = vpop.f32.mrf.mxu0
        %v4228 = vadd.f32 0.0, %v4227
        %v4229 = vpop.f32.mrf.mxu0
        %v4230 = vadd.f32 0.0, %v4229
        %4231 = vmatmul.bf16.gmra.mxu0 %v4206
        %v4232 = vpop.f32.mrf.mxu0
        %v4233 = vadd.f32 0.0, %v4232
        %v4234 = vpop.f32.mrf.mxu0
        %v4235 = vadd.f32 0.0, %v4234
        %4236 = vdwg.mxu0
        %4237 = vmatpush.bf16.msra.mxu0 0
        %4238 = vmatpush.bf16.msra.mxu0 0
        %4239 = vmatpush.bf16.msra.mxu0 0
        %4240 = vmatpush.bf16.msra.mxu0 0
        %4241 = vmatpush.bf16.msra.mxu0 %v4187
        %4242 = vmatpush.bf16.msra.mxu0 %v4185
        %4243 = vmatpush.bf16.msra.mxu0 %v4183
        %4244 = vmatpush.bf16.msra.mxu0 %v4181
        %4245 = vmatmul.bf16.gmra.mxu0 %v4197
        %v4246 = vpop.f32.mrf.mxu0
        %v4247 = vadd.f32 0.0, %v4246
        %v4248 = vpop.f32.mrf.mxu0
        %v4249 = vadd.f32 0.0, %v4248
        %4250 = vmatmul.bf16.gmra.mxu0 %v4200
        %v4251 = vpop.f32.mrf.mxu0
        %v4252 = vadd.f32 0.0, %v4251
        %v4253 = vpop.f32.mrf.mxu0
        %v4254 = vadd.f32 0.0, %v4253
        %4255 = vmatmul.bf16.gmra.mxu0 %v4203
        %v4256 = vpop.f32.mrf.mxu0
        %v4257 = vadd.f32 0.0, %v4256
        %v4258 = vpop.f32.mrf.mxu0
        %v4259 = vadd.f32 0.0, %v4258
        %4260 = vmatmul.bf16.gmra.mxu0 %v4206
        %v4261 = vpop.f32.mrf.mxu0
        %v4262 = vadd.f32 0.0, %v4261
        %v4263 = vpop.f32.mrf.mxu0
        %v4264 = vadd.f32 0.0, %v4263
        %4265 = vdwg.mxu0
        %v4266 = vxor.u32 %v4218, 2147483648
        %v4267 = vxor.u32 %v4220, 2147483648
        %v4268 = vxor.u32 %v4223, 2147483648
        %v4269 = vxor.u32 %v4225, 2147483648
        %v4270 = vxor.u32 %v4228, 2147483648
        %v4271 = vxor.u32 %v4230, 2147483648
        %v4272 = vxor.u32 %v4233, 2147483648
        %v4273 = vxor.u32 %v4235, 2147483648
        %v4274 = vmul.f32 %v4266, 1.442695
        %v4275 = vpow.pop %v4274
        %v4276 = vmul.f32 %v4267, 1.442695
        %v4277 = vpow.pop %v4276
        %v4278 = vmul.f32 %v4268, 1.442695
        %v4279 = vpow.pop %v4278
        %v4280 = vmul.f32 %v4269, 1.442695
        %v4281 = vpow.pop %v4280
        %v4282 = vmul.f32 %v4270, 1.442695
        %v4283 = vpow.pop %v4282
        %v4284 = vmul.f32 %v4271, 1.442695
        %v4285 = vpow.pop %v4284
        %v4286 = vmul.f32 %v4272, 1.442695
        %v4287 = vpow.pop %v4286
        %v4288 = vmul.f32 %v4273, 1.442695
        %v4289 = vpow.pop %v4288
        %v4290 = vadd.f32 %v4275, 1.0
        %v4291 = vadd.f32 %v4277, 1.0
        %v4292 = vadd.f32 %v4279, 1.0
        %v4293 = vadd.f32 %v4281, 1.0
        %v4294 = vadd.f32 %v4283, 1.0
        %v4295 = vadd.f32 %v4285, 1.0
        %v4296 = vadd.f32 %v4287, 1.0
        %v4297 = vadd.f32 %v4289, 1.0
        %v4298 = vrcp.pop %v4290
        %v4299 = vmul.f32 %v4290, %v4298
        %v4300 = vsub.f32 1.0, %v4299
        %v4301 = vmul.f32 %v4298, %v4300
        %v4302 = vadd.f32 %v4298, %v4301
        %vm4303 = vweird.f32 %v4290
        %vm4304 = vweird.f32 %v4298
        %vm4305 = vmor %vm4303, %vm4304
        %v4306 = vsel %vm4305, %v4298, %v4302
        %v4307 = vand.u32 2147483647, %v4290
        %vm4308 = vcmp.eq.f32.partialorder %v4307, 8.507059e+37
        %v4309 = vand.u32 %v4290, 2147483648
        %v4310 = vor.u32 1.1754944e-38, %v4309
        %v4311 = vsel %vm4308, %v4310, %v4306
        %v4312 = vmul.f32 1.0, %v4311
        %v4313 = vrcp.pop %v4291
        %v4314 = vmul.f32 %v4291, %v4313
        %v4315 = vsub.f32 1.0, %v4314
        %v4316 = vmul.f32 %v4313, %v4315
        %v4317 = vadd.f32 %v4313, %v4316
        %vm4318 = vweird.f32 %v4291
        %vm4319 = vweird.f32 %v4313
        %vm4320 = vmor %vm4318, %vm4319
        %v4321 = vsel %vm4320, %v4313, %v4317
        %v4322 = vand.u32 2147483647, %v4291
        %vm4323 = vcmp.eq.f32.partialorder %v4322, 8.507059e+37
        %v4324 = vand.u32 %v4291, 2147483648
        %v4325 = vor.u32 1.1754944e-38, %v4324
        %v4326 = vsel %vm4323, %v4325, %v4321
        %v4327 = vmul.f32 1.0, %v4326
        %v4328 = vrcp.pop %v4292
        %v4329 = vmul.f32 %v4292, %v4328
        %v4330 = vsub.f32 1.0, %v4329
        %v4331 = vmul.f32 %v4328, %v4330
        %v4332 = vadd.f32 %v4328, %v4331
        %vm4333 = vweird.f32 %v4292
        %vm4334 = vweird.f32 %v4328
        %vm4335 = vmor %vm4333, %vm4334
        %v4336 = vsel %vm4335, %v4328, %v4332
        %v4337 = vand.u32 2147483647, %v4292
        %vm4338 = vcmp.eq.f32.partialorder %v4337, 8.507059e+37
        %v4339 = vand.u32 %v4292, 2147483648
        %v4340 = vor.u32 1.1754944e-38, %v4339
        %v4341 = vsel %vm4338, %v4340, %v4336
        %v4342 = vmul.f32 1.0, %v4341
        %v4343 = vrcp.pop %v4293
        %v4344 = vmul.f32 %v4293, %v4343
        %v4345 = vsub.f32 1.0, %v4344
        %v4346 = vmul.f32 %v4343, %v4345
        %v4347 = vadd.f32 %v4343, %v4346
        %vm4348 = vweird.f32 %v4293
        %vm4349 = vweird.f32 %v4343
        %vm4350 = vmor %vm4348, %vm4349
        %v4351 = vsel %vm4350, %v4343, %v4347
        %v4352 = vand.u32 2147483647, %v4293
        %vm4353 = vcmp.eq.f32.partialorder %v4352, 8.507059e+37
        %v4354 = vand.u32 %v4293, 2147483648
        %v4355 = vor.u32 1.1754944e-38, %v4354
        %v4356 = vsel %vm4353, %v4355, %v4351
        %v4357 = vmul.f32 1.0, %v4356
        %v4358 = vrcp.pop %v4294
        %v4359 = vmul.f32 %v4294, %v4358
        %v4360 = vsub.f32 1.0, %v4359
        %v4361 = vmul.f32 %v4358, %v4360
        %v4362 = vadd.f32 %v4358, %v4361
        %vm4363 = vweird.f32 %v4294
        %vm4364 = vweird.f32 %v4358
        %vm4365 = vmor %vm4363, %vm4364
        %v4366 = vsel %vm4365, %v4358, %v4362
        %v4367 = vand.u32 2147483647, %v4294
        %vm4368 = vcmp.eq.f32.partialorder %v4367, 8.507059e+37
        %v4369 = vand.u32 %v4294, 2147483648
        %v4370 = vor.u32 1.1754944e-38, %v4369
        %v4371 = vsel %vm4368, %v4370, %v4366
        %v4372 = vmul.f32 1.0, %v4371
        %v4373 = vrcp.pop %v4295
        %v4374 = vmul.f32 %v4295, %v4373
        %v4375 = vsub.f32 1.0, %v4374
        %v4376 = vmul.f32 %v4373, %v4375
        %v4377 = vadd.f32 %v4373, %v4376
        %vm4378 = vweird.f32 %v4295
        %vm4379 = vweird.f32 %v4373
        %vm4380 = vmor %vm4378, %vm4379
        %v4381 = vsel %vm4380, %v4373, %v4377
        %v4382 = vand.u32 2147483647, %v4295
        %vm4383 = vcmp.eq.f32.partialorder %v4382, 8.507059e+37
        %v4384 = vand.u32 %v4295, 2147483648
        %v4385 = vor.u32 1.1754944e-38, %v4384
        %v4386 = vsel %vm4383, %v4385, %v4381
        %v4387 = vmul.f32 1.0, %v4386
        %v4388 = vrcp.pop %v4296
        %v4389 = vmul.f32 %v4296, %v4388
        %v4390 = vsub.f32 1.0, %v4389
        %v4391 = vmul.f32 %v4388, %v4390
        %v4392 = vadd.f32 %v4388, %v4391
        %vm4393 = vweird.f32 %v4296
        %vm4394 = vweird.f32 %v4388
        %vm4395 = vmor %vm4393, %vm4394
        %v4396 = vsel %vm4395, %v4388, %v4392
        %v4397 = vand.u32 2147483647, %v4296
        %vm4398 = vcmp.eq.f32.partialorder %v4397, 8.507059e+37
        %v4399 = vand.u32 %v4296, 2147483648
        %v4400 = vor.u32 1.1754944e-38, %v4399
        %v4401 = vsel %vm4398, %v4400, %v4396
        %v4402 = vmul.f32 1.0, %v4401
        %v4403 = vrcp.pop %v4297
        %v4404 = vmul.f32 %v4297, %v4403
        %v4405 = vsub.f32 1.0, %v4404
        %v4406 = vmul.f32 %v4403, %v4405
        %v4407 = vadd.f32 %v4403, %v4406
        %vm4408 = vweird.f32 %v4297
        %vm4409 = vweird.f32 %v4403
        %vm4410 = vmor %vm4408, %vm4409
        %v4411 = vsel %vm4410, %v4403, %v4407
        %v4412 = vand.u32 2147483647, %v4297
        %vm4413 = vcmp.eq.f32.partialorder %v4412, 8.507059e+37
        %v4414 = vand.u32 %v4297, 2147483648
        %v4415 = vor.u32 1.1754944e-38, %v4414
        %v4416 = vsel %vm4413, %v4415, %v4411
        %v4417 = vmul.f32 1.0, %v4416
        %v4418 = vmul.f32 %v4218, %v4312
        %v4419 = vmul.f32 %v4220, %v4327
        %v4420 = vmul.f32 %v4223, %v4342
        %v4421 = vmul.f32 %v4225, %v4357
        %v4422 = vmul.f32 %v4228, %v4372
        %v4423 = vmul.f32 %v4230, %v4387
        %v4424 = vmul.f32 %v4233, %v4402
        %v4425 = vmul.f32 %v4235, %v4417
        %v4426 = vmul.f32 %v4418, %v4247
        %v4427 = vmul.f32 %v4419, %v4249
        %v4428 = vmul.f32 %v4420, %v4252
        %v4429 = vmul.f32 %v4421, %v4254
        %v4430 = vmul.f32 %v4422, %v4257
        %v4431 = vmul.f32 %v4423, %v4259
        %v4432 = vmul.f32 %v4424, %v4262
        %v4433 = vmul.f32 %v4425, %v4264
        %v4434 = vpack.c.bf16 %v4427, %v4426
        %v4435 = vpack.c.bf16 %v4429, %v4428
        %v4436 = vpack.c.bf16 %v4431, %v4430
        %v4437 = vpack.c.bf16 %v4433, %v4432
        %v4438 = vld [vmem:[%s13] sm:$0xf]
        %v4439 = vld [vmem:[%s13 + $0x4] sm:$0xf]
        %v4440 = vld [vmem:[%s13 + $0x8] sm:$0xf]
        %v4441 = vld [vmem:[%s13 + $0xc] sm:$0xf]
        %v4442 = vld [vmem:[%s13 + $0x10] sm:$0xf]
        %v4443 = vld [vmem:[%s13 + $0x14] sm:$0xf]
        %v4444 = vld [vmem:[%s13 + $0x18] sm:$0xf]
        %v4445 = vld [vmem:[%s13 + $0x1c] sm:$0xf]
        %v4446 = vld [vmem:[%s13 + $0x20] sm:$0xf]
        %v4447 = vld [vmem:[%s13 + $0x24] sm:$0xf]
        %v4448 = vld [vmem:[%s13 + $0x28] sm:$0xf]
        %v4449 = vld [vmem:[%s13 + $0x2c] sm:$0xf]
        %v4450 = vld [vmem:[%s13 + $0x30] sm:$0xf]
        %v4451 = vld [vmem:[%s13 + $0x34] sm:$0xf]
        %v4452 = vld [vmem:[%s13 + $0x38] sm:$0xf]
        %v4453 = vld [vmem:[%s13 + $0x3c] sm:$0xf]
        %v4470 = vunpack.c.l.b16 %v4438
        %v4471 = vunpack.c.l.b16 %v4439
        %v4472 = vunpack.c.l.b16 %v4440
        %v4473 = vunpack.c.l.b16 %v4441
        %v4474 = vunpack.c.l.b16 %v4442
        %v4475 = vunpack.c.l.b16 %v4443
        %v4476 = vunpack.c.l.b16 %v4444
        %v4477 = vunpack.c.l.b16 %v4445
        %v4478 = vunpack.c.l.b16 %v4446
        %v4479 = vunpack.c.l.b16 %v4447
        %v4480 = vunpack.c.l.b16 %v4448
        %v4481 = vunpack.c.l.b16 %v4449
        %v4482 = vunpack.c.l.b16 %v4450
        %v4483 = vunpack.c.l.b16 %v4451
        %v4484 = vunpack.c.l.b16 %v4452
        %v4485 = vunpack.c.l.b16 %v4453
        %v4486 = vpack.c.b16 %v4471, %v4470
        %v4487 = vpack.c.b16 %v4473, %v4472
        %v4488 = vpack.c.b16 %v4475, %v4474
        %v4489 = vpack.c.b16 %v4477, %v4476
        %v4490 = vpack.c.b16 %v4479, %v4478
        %v4491 = vpack.c.b16 %v4481, %v4480
        %v4492 = vpack.c.b16 %v4483, %v4482
        %v4493 = vpack.c.b16 %v4485, %v4484
        %4502 = vmatpush.bf16.msra.mxu0 %v4493
        %4503 = vmatpush.bf16.msra.mxu0 %v4492
        %4504 = vmatpush.bf16.msra.mxu0 %v4491
        %4505 = vmatpush.bf16.msra.mxu0 %v4490
        %4506 = vmatpush.bf16.msra.mxu0 %v4489
        %4507 = vmatpush.bf16.msra.mxu0 %v4488
        %4508 = vmatpush.bf16.msra.mxu0 %v4487
        %4509 = vmatpush.bf16.msra.mxu0 %v4486
        %4510 = vmatmul.bf16.gmra.mxu0 %v4434
        %v4511 = vpop.f32.mrf.mxu0
        %v4512 = vadd.f32 %v3989, %v4511
        %v4513 = vpop.f32.mrf.mxu0
        %v4514 = vadd.f32 %v3990, %v4513
        %4515 = vmatmul.bf16.gmra.mxu0 %v4435
        %v4516 = vpop.f32.mrf.mxu0
        %v4517 = vadd.f32 %v3991, %v4516
        %v4518 = vpop.f32.mrf.mxu0
        %v4519 = vadd.f32 %v3992, %v4518
        %4520 = vmatmul.bf16.gmra.mxu0 %v4436
        %v4521 = vpop.f32.mrf.mxu0
        %v4522 = vadd.f32 %v3993, %v4521
        %v4523 = vpop.f32.mrf.mxu0
        %v4524 = vadd.f32 %v3994, %v4523
        %4525 = vmatmul.bf16.gmra.mxu0 %v4437
        %v4526 = vpop.f32.mrf.mxu0
        %v4527 = vadd.f32 %v3995, %v4526
        %v4528 = vpop.f32.mrf.mxu0
        %v4529 = vadd.f32 %v3996, %v4528
        %4530 = vdwg.mxu0
        %v4531 = vpack.c.bf16 %v4512, %v4512
        %v4532 = vpack.c.bf16 %v4514, %v4514
        %v4533 = vpack.c.bf16 %v4517, %v4517
        %v4534 = vpack.c.bf16 %v4519, %v4519
        %v4535 = vpack.c.bf16 %v4522, %v4522
        %v4536 = vpack.c.bf16 %v4524, %v4524
        %v4537 = vpack.c.bf16 %v4527, %v4527
        %v4538 = vpack.c.bf16 %v4529, %v4529
        %vm4539 = vcmask 519168
        %4540 = vst.msk [vmem:[%s460] sm:$0xf] %vm4539, %v4531
        %4541 = vst.msk [vmem:[%s460 + $0x4] sm:$0xf] %vm4539, %v4532
        %4542 = vst.msk [vmem:[%s460 + $0x8] sm:$0xf] %vm4539, %v4533
        %4543 = vst.msk [vmem:[%s460 + $0xc] sm:$0xf] %vm4539, %v4534
        %4544 = vst.msk [vmem:[%s460 + $0x10] sm:$0xf] %vm4539, %v4535
        %4545 = vst.msk [vmem:[%s460 + $0x14] sm:$0xf] %vm4539, %v4536
        %4546 = vst.msk [vmem:[%s460 + $0x18] sm:$0xf] %vm4539, %v4537
        %4547 = vst.msk [vmem:[%s460 + $0x1c] sm:$0xf] %vm4539, %v4538
        %s4548 = sand.u32 %s335, 1
        %s4549 = scalar_lea.sflag [#allocation4], %s4548
        %s4550 = sand.u32 %s335, 1
        %s4551 = smul.addr %s4550, 32
        %s4552 = scalar_lea.vmem [#allocation3], %s4551
        // Predicated region
        $region77: #{lact_block_forward.1} parent=75 // pred_check
          %p4553 = pneg %p345
        $region78: #{lact_block_forward.1} parent=75 // pred_check_branch
          %4555 = sbr.rel (%p4553) target = $region80
        $region79: #{lact_block_forward.1} parent=75 // pred_region
          %4557 = vsyncadd %s4549, 0
          %s4558 = smul.addr %s28, 8
          %s4559 = smul.addr %s4558, 4
          %s4560 = scalar_lea.hbm %s14, %s4559
          %s4561 = sshll.u32 %s4552, 4
          %s4562 = int_to_ptr.vmem [resolvable:$true] %s4561
          %s4563 = sshll.u32 %s4560, 4
          %s4564 = int_to_ptr.hbm [resolvable:$true] %s4563
          %4569 = dma.vmem_to_hbm [thread:$0]  %s4562, 512, %s4564, %s4549, 64, 64, 4
        $region80: #{lact_block_forward.1} parent=75 // pred_fallthru
          _
      $region76: #{lact_block_forward.1} parent=5 // pred_fallthru
        _
      %p4570 = scmp.le.s32.totalorder 2, %s23
      // Predicated region
      $region81: #{lact_block_forward.1} parent=5 // pred_check
        %p4571 = pneg %p4570
      $region82: #{lact_block_forward.1} parent=5 // pred_check_branch
        %4573 = sbr.rel (%p4571) target = $region84
      $region83: #{lact_block_forward.1} parent=5 // pred_region
        %s4574 = ssub.s32 %s23, 2
        // Predicated region
        $region85: #{lact_block_forward.1} parent=83 // pred_check
          %p4575 = pneg %p351
        $region86: #{lact_block_forward.1} parent=83 // pred_check_branch
          %4577 = sbr.rel (%p4575) target = $region88
        $region87: #{lact_block_forward.1} parent=83 // pred_region
          %s4578 = sand.u32 %s336, 1
          %s4579 = scalar_lea.sflag [#allocation4], %s4578
          %s4580 = sand.u32 %s336, 1
          %s4581 = smul.addr %s4580, 32
          %s4582 = scalar_lea.vmem [#allocation3], %s4581
          %4584 = dma.done %s4579, 512
        $region88: #{lact_block_forward.1} parent=83 // pred_fallthru
          _
      $region84: #{lact_block_forward.1} parent=5 // pred_fallthru
        _
    $region6: #{lact_block_forward.1} parent=1 // loop_footer
      %s27 = sadd.s32 1, %s23
    $region7: #{lact_block_forward.1} parent=1 // loop_footer_branch
      %22 = sbr.rel target = $region3
    $region8: #{lact_block_forward.1} parent=1 // loop_exit
      _
    %4585 = vsyncpa [#allocation4], 1
    %s4586 = scalar_lea.sflag [#allocation4], 1
    %4587 = vsyncpa %s4586, 1

</llo_original>
